<compile_context>
chip_gen: v5e
topology: v5e:2x2
jax: 0.10.0
libtpu: 0.0.40
codegen_flags: <defaults>
</compile_context>

<pallas_src>
import functools
import math

import jax
import jax.numpy as jnp
from jax import lax
from jax.experimental import pallas as pl
from jax.experimental.pallas import tpu as pltpu


# ----------------------------------------------------------------------------
# Row-tile picker: largest multiple-of-8 tile that divides M (keeps >=2
# programs on the row grid for M >= 16; full-extent fallback is always legal).
# ----------------------------------------------------------------------------
def _pick_row_tile(m: int) -> int:
    for t in (512, 256, 128, 64, 32, 16, 8):
        if m % t == 0:
            return t
    return m


# ----------------------------------------------------------------------------
# Plain matmul (bias-free): used for the fused QKV / QK / V projections.
# ----------------------------------------------------------------------------
def _matmul_kernel(x_ref, w_ref, o_ref):
    o_ref[...] = jnp.dot(x_ref[...], w_ref[...],
                         preferred_element_type=jnp.float32).astype(o_ref.dtype)


def matmul_pallas(x2d, w):
    """x2d: (M, K); w: (K, N) (input-major, i.e. already W^T)."""
    m, k = x2d.shape
    k2, n = w.shape
    assert k == k2
    tm = _pick_row_tile(m)
    return pl.pallas_call(
        _matmul_kernel,
        out_shape=jax.ShapeDtypeStruct((m, n), x2d.dtype),
        grid=(m // tm,),
        in_specs=[
            pl.BlockSpec((tm, k), lambda i: (i, 0)),
            pl.BlockSpec((k, n), lambda i: (0, 0)),   # weight resident across tiles
        ],
        out_specs=pl.BlockSpec((tm, n), lambda i: (i, 0)),
        compiler_params=pltpu.CompilerParams(dimension_semantics=("parallel",)),
    )(x2d, w)


# ----------------------------------------------------------------------------
# Multi-head attention core: operands stay in (L, H*d) layout, heads are
# static lane slices, output is a single lane-dense (Lq, H*dv) block.
# ----------------------------------------------------------------------------
def _mha_heads(q, k, v, *, num_heads, d_k, d_v, scale, causal):
    lq, lk = q.shape[0], k.shape[0]
    if causal:
        row = lax.broadcasted_iota(jnp.int32, (lq, lk), 0)
        col = lax.broadcasted_iota(jnp.int32, (lq, lk), 1)
        keep = col <= row
    outs = []
    for h in range(num_heads):
        qh = q[:, h * d_k:(h + 1) * d_k]
        kh = k[:, h * d_k:(h + 1) * d_k]
        vh = v[:, h * d_v:(h + 1) * d_v]
        s = lax.dot_general(qh, kh, (((1,), (1,)), ((), ())),
                            preferred_element_type=jnp.float32) * scale
        if causal:
            s = jnp.where(keep, s, -1e9)              # masked_fill(mask == 0, -1e9)
        s_max = jnp.max(s, axis=-1, keepdims=True)
        p = jnp.exp(s - s_max)
        inv = pl.reciprocal(jnp.sum(p, axis=-1, keepdims=True), approx=True)
        outs.append(jnp.dot(p * inv, vh.astype(jnp.float32),
                            preferred_element_type=jnp.float32))
    return jnp.concatenate(outs, axis=-1)             # (Lq, H*dv), lane-dense store


def _self_attn_kernel(qkv_ref, o_ref, *, num_heads, d_k, d_v, scale):
    hdk = num_heads * d_k
    qkv = qkv_ref[...]                                # (L, 2*H*dk + H*dv)
    out = _mha_heads(qkv[:, :hdk], qkv[:, hdk:2 * hdk], qkv[:, 2 * hdk:],
                     num_heads=num_heads, d_k=d_k, d_v=d_v, scale=scale,
                     causal=True)
    o_ref[...] = out.astype(o_ref.dtype)


def _cross_attn_kernel(qk_ref, v_ref, o_ref, *, num_heads, d_k, d_v, scale):
    hdk = num_heads * d_k
    qk = qk_ref[...]                                  # (Lq, 2*H*dk) from encoder
    out = _mha_heads(qk[:, :hdk], qk[:, hdk:], v_ref[...],
                     num_heads=num_heads, d_k=d_k, d_v=d_v, scale=scale,
                     causal=False)
    o_ref[...] = out.astype(o_ref.dtype)


def self_attention_pallas(qkv, num_heads, d_k, d_v):
    """qkv: (B, L, 2*H*dk + H*dv) -> (B, L, H*dv). Causal."""
    bsz, s, dqkv = qkv.shape
    hdv = num_heads * d_v
    return pl.pallas_call(
        functools.partial(_self_attn_kernel, num_heads=num_heads, d_k=d_k,
                          d_v=d_v, scale=1.0 / math.sqrt(d_k)),
        out_shape=jax.ShapeDtypeStruct((bsz, s, hdv), qkv.dtype),
        grid=(bsz,),
        in_specs=[pl.BlockSpec((pl.Squeezed(), s, dqkv), lambda b: (b, 0, 0))],
        out_specs=pl.BlockSpec((pl.Squeezed(), s, hdv), lambda b: (b, 0, 0)),
        compiler_params=pltpu.CompilerParams(dimension_semantics=("parallel",)),
    )(qkv)


def cross_attention_pallas(qk, v, num_heads, d_k, d_v):
    """qk: (B, Lq, 2*H*dk) (from enc); v: (B, Lv, H*dv) (from x) -> (B, Lq, H*dv)."""
    bsz, lq, dqk = qk.shape
    lv, hdv = v.shape[1], v.shape[2]
    return pl.pallas_call(
        functools.partial(_cross_attn_kernel, num_heads=num_heads, d_k=d_k,
                          d_v=d_v, scale=1.0 / math.sqrt(d_k)),
        out_shape=jax.ShapeDtypeStruct((bsz, lq, hdv), qk.dtype),
        grid=(bsz,),
        in_specs=[pl.BlockSpec((pl.Squeezed(), lq, dqk), lambda b: (b, 0, 0)),
                  pl.BlockSpec((pl.Squeezed(), lv, hdv), lambda b: (b, 0, 0))],
        out_specs=pl.BlockSpec((pl.Squeezed(), lq, hdv), lambda b: (b, 0, 0)),
        compiler_params=pltpu.CompilerParams(dimension_semantics=("parallel",)),
    )(qk, v)


# ----------------------------------------------------------------------------
# Fused: attention output projection (W_o) + residual add + LayerNorm(eps=1e-5)
# ----------------------------------------------------------------------------
def _proj_add_ln_kernel(a_ref, w_ref, r_ref, g_ref, b_ref, o_ref, *, eps):
    y = jnp.dot(a_ref[...], w_ref[...], preferred_element_type=jnp.float32)
    y = y + r_ref[...].astype(jnp.float32)
    mean = jnp.mean(y, axis=-1, keepdims=True)
    dev = y - mean
    var = jnp.mean(dev * dev, axis=-1, keepdims=True)
    y = dev * lax.rsqrt(var + eps)
    o_ref[...] = (y * g_ref[...] + b_ref[...]).astype(o_ref.dtype)


def proj_add_ln_pallas(a2d, w, res2d, gamma, beta, eps=1e-5):
    """(a2d @ w + res2d) -> LayerNorm.  a2d: (M, H*dv); w: (H*dv, D); res2d: (M, D)."""
    m, kdim = a2d.shape
    n = w.shape[1]
    tm = _pick_row_tile(m)
    return pl.pallas_call(
        functools.partial(_proj_add_ln_kernel, eps=eps),
        out_shape=jax.ShapeDtypeStruct((m, n), a2d.dtype),
        grid=(m // tm,),
        in_specs=[
            pl.BlockSpec((tm, kdim), lambda i: (i, 0)),
            pl.BlockSpec((kdim, n), lambda i: (0, 0)),
            pl.BlockSpec((tm, n), lambda i: (i, 0)),
            pl.BlockSpec((1, n), lambda i: (0, 0)),
            pl.BlockSpec((1, n), lambda i: (0, 0)),
        ],
        out_specs=pl.BlockSpec((tm, n), lambda i: (i, 0)),
        compiler_params=pltpu.CompilerParams(dimension_semantics=("parallel",)),
    )(a2d, w, res2d, gamma.reshape(1, n), beta.reshape(1, n))


# ----------------------------------------------------------------------------
# Fused: FFN (fc1 + bias + ReLU, fc2 + bias) + residual add + LayerNorm
# The (tm, d_ff) intermediate lives entirely in VMEM/vregs.
# ----------------------------------------------------------------------------
def _ffn_add_ln_kernel(x_ref, w1_ref, b1_ref, w2_ref, b2_ref, g_ref, bb_ref,
                       o_ref, *, eps):
    x = x_ref[...]
    h = jnp.dot(x, w1_ref[...], preferred_element_type=jnp.float32) + b1_ref[...]
    h = jnp.maximum(h, 0.0)
    y = jnp.dot(h, w2_ref[...], preferred_element_type=jnp.float32) + b2_ref[...]
    y = y + x.astype(jnp.float32)
    mean = jnp.mean(y, axis=-1, keepdims=True)
    dev = y - mean
    var = jnp.mean(dev * dev, axis=-1, keepdims=True)
    y = dev * lax.rsqrt(var + eps)
    o_ref[...] = (y * g_ref[...] + bb_ref[...]).astype(o_ref.dtype)


def ffn_add_ln_pallas(x2d, w1, b1, w2, b2, gamma, beta, eps=1e-5):
    m, d_model = x2d.shape
    d_ff = w1.shape[1]
    tm = _pick_row_tile(m)
    return pl.pallas_call(
        functools.partial(_ffn_add_ln_kernel, eps=eps),
        out_shape=jax.ShapeDtypeStruct((m, d_model), x2d.dtype),
        grid=(m // tm,),
        in_specs=[
            pl.BlockSpec((tm, d_model), lambda i: (i, 0)),
            pl.BlockSpec((d_model, d_ff), lambda i: (0, 0)),
            pl.BlockSpec((1, d_ff), lambda i: (0, 0)),
            pl.BlockSpec((d_ff, d_model), lambda i: (0, 0)),
            pl.BlockSpec((1, d_model), lambda i: (0, 0)),
            pl.BlockSpec((1, d_model), lambda i: (0, 0)),
            pl.BlockSpec((1, d_model), lambda i: (0, 0)),
        ],
        out_specs=pl.BlockSpec((tm, d_model), lambda i: (i, 0)),
        compiler_params=pltpu.CompilerParams(dimension_semantics=("parallel",)),
    )(x2d, w1, b1.reshape(1, d_ff), w2, b2.reshape(1, d_model),
      gamma.reshape(1, d_model), beta.reshape(1, d_model))


# ----------------------------------------------------------------------------
# Module-level forward (mirrors the PyTorch Decoder exactly)
# ----------------------------------------------------------------------------
def decoder_layer_forward(encoder_output, x, p, num_heads, d_k, d_v):
    bsz, s, d_model = x.shape
    s_enc = encoder_output.shape[1]
    m = bsz * s
    x2d = x.reshape(m, d_model)
    enc2d = encoder_output.reshape(bsz * s_enc, d_model)

    # --- masked self-attention + residual + LN1 ---
    qkv = matmul_pallas(x2d, p["self_wqkv"])                         # (M, 2HDk+HDv)
    attn = self_attention_pallas(qkv.reshape(bsz, s, -1), num_heads, d_k, d_v)
    out1 = proj_add_ln_pallas(attn.reshape(m, -1), p["self_wo"], x2d,
                              p["ln1_g"], p["ln1_b"])                # (M, D)

    # --- cross-attention (Q=enc, K=enc, V=x) + residual + LN1 (reused, as in spec) ---
    qk = matmul_pallas(enc2d, p["cross_wqk"])                        # (Menc, 2HDk)
    v = matmul_pallas(x2d, p["cross_wv"])                            # (M, HDv)
    attn2 = cross_attention_pallas(qk.reshape(bsz, s_enc, -1),
                                   v.reshape(bsz, s, -1), num_heads, d_k, d_v)
    out2 = proj_add_ln_pallas(attn2.reshape(bsz * s_enc, -1), p["cross_wo"],
                              out1, p["ln1_g"], p["ln1_b"])          # (M, D)

    # --- FFN + residual + LN2 (fused, d_ff intermediate stays on-chip) ---
    out3 = ffn_add_ln_pallas(out2, p["ffn_w1"], p["ffn_b1"],
                             p["ffn_w2"], p["ffn_b2"], p["ln2_g"], p["ln2_b"])
    return out3.reshape(bsz, s, d_model)


def decoder_forward(encoder_output, x, params, num_heads, d_k, d_v):
    for p in params:
        x = decoder_layer_forward(encoder_output, x, p, num_heads, d_k, d_v)
    return x


# ----------------------------------------------------------------------------
# Pure-JAX reference (for correctness check) -- uses the unfused weights
# ----------------------------------------------------------------------------
def _layernorm_ref(y, g, b, eps=1e-5):
    mean = jnp.mean(y, axis=-1, keepdims=True)
    var = jnp.mean((y - mean) ** 2, axis=-1, keepdims=True)
    return (y - mean) / jnp.sqrt(var + eps) * g + b


def _mha_ref(q_in, k_in, v_in, p, num_heads, d_k, d_v, causal):
    bsz, lq, d_model = q_in.shape
    lk, lv = k_in.shape[1], v_in.shape[1]
    q = (q_in @ p["wq"]).reshape(bsz, lq, num_heads, d_k).transpose(0, 2, 1, 3)
    k = (k_in @ p["wk"]).reshape(bsz, lk, num_heads, d_k).transpose(0, 2, 1, 3)
    v = (v_in @ p["wv"]).reshape(bsz, lv, num_heads, d_v).transpose(0, 2, 1, 3)
    s = q @ jnp.swapaxes(k, -1, -2) / (d_k ** 0.5)
    if causal:
        msk = jnp.tril(jnp.ones((lq, lk), jnp.float32))
        s = jnp.where(msk == 0, -1e9, s)
    a = jax.nn.softmax(s, axis=-1)
    o = (a @ v).transpose(0, 2, 1, 3).reshape(bsz, lq, num_heads * d_v)
    return o @ p["wo"]


def decoder_forward_ref(encoder_output, x, params, num_heads, d_k, d_v):
    for p in params:
        out1 = _mha_ref(x, x, x, p["self_attn"], num_heads, d_k, d_v, causal=True)
        out1 = _layernorm_ref(out1 + x, p["ln1_g"], p["ln1_b"])
        out2 = _mha_ref(encoder_output, encoder_output, x, p["cross_attn"],
                        num_heads, d_k, d_v, causal=False)
        out2 = _layernorm_ref(out2 + out1, p["ln1_g"], p["ln1_b"])
        h = jnp.maximum(out2 @ p["ffn_w1"] + p["ffn_b1"], 0.0)
        out3 = h @ p["ffn_w2"] + p["ffn_b2"]
        x = _layernorm_ref(out3 + out2, p["ln2_g"], p["ln2_b"])
    return x


# ----------------------------------------------------------------------------
# Parameter construction (deterministic) + fused-weight packing
# ----------------------------------------------------------------------------
def init_params(key, num_layers, num_heads, d_model, d_k, d_v, d_ff):
    params = []
    scale = 1.0 / math.sqrt(d_model)
    for _ in range(num_layers):
        key, *ks = jax.random.split(key, 15)
        layer = {
            "self_attn": {
                "wq": jax.random.normal(ks[0], (d_model, num_heads * d_k), jnp.float32) * scale,
                "wk": jax.random.normal(ks[1], (d_model, num_heads * d_k), jnp.float32) * scale,
                "wv": jax.random.normal(ks[2], (d_model, num_heads * d_v), jnp.float32) * scale,
                "wo": jax.random.normal(ks[3], (num_heads * d_v, d_model), jnp.float32) * scale,
            },
            "cross_attn": {
                "wq": jax.random.normal(ks[4], (d_model, num_heads * d_k), jnp.float32) * scale,
                "wk": jax.random.normal(ks[5], (d_model, num_heads * d_k), jnp.float32) * scale,
                "wv": jax.random.normal(ks[6], (d_model, num_heads * d_v), jnp.float32) * scale,
                "wo": jax.random.normal(ks[7], (num_heads * d_v, d_model), jnp.float32) * scale,
            },
            "ffn_w1": jax.random.normal(ks[8], (d_model, d_ff), jnp.float32) * scale,
            "ffn_b1": jax.random.normal(ks[9], (d_ff,), jnp.float32) * 0.05,
            "ffn_w2": jax.random.normal(ks[10], (d_ff, d_model), jnp.float32) / math.sqrt(d_ff),
            "ffn_b2": jax.random.normal(ks[11], (d_model,), jnp.float32) * 0.05,
            "ln1_g": 1.0 + 0.05 * jax.random.normal(ks[12], (d_model,), jnp.float32),
            "ln1_b": 0.05 * jax.random.normal(ks[13], (d_model,), jnp.float32),
            "ln2_g": jnp.ones((d_model,), jnp.float32),
            "ln2_b": jnp.zeros((d_model,), jnp.float32),
        }
        params.append(layer)
    return params


def fuse_params(params):
    fused = []
    for p in params:
        sa, ca = p["self_attn"], p["cross_attn"]
        fused.append({
            "self_wqkv": jnp.concatenate([sa["wq"], sa["wk"], sa["wv"]], axis=1),
            "self_wo": sa["wo"],
            "cross_wqk": jnp.concatenate([ca["wq"], ca["wk"]], axis=1),
            "cross_wv": ca["wv"],
            "cross_wo": ca["wo"],
            "ffn_w1": p["ffn_w1"], "ffn_b1": p["ffn_b1"],
            "ffn_w2": p["ffn_w2"], "ffn_b2": p["ffn_b2"],
            "ln1_g": p["ln1_g"], "ln1_b": p["ln1_b"],
            "ln2_g": p["ln2_g"], "ln2_b": p["ln2_b"],
        })
    return fused


if __name__ == "__main__":
    num_heads, d_model, d_k, d_v, d_ff = 4, 32, 8, 8, 64
    num_layers = 2
    batch, seq = 2, 8

    key = jax.random.PRNGKey(0)
    k_enc, k_in, k_par = jax.random.split(key, 3)
    encoder_output = jax.random.normal(k_enc, (batch, seq, d_model), jnp.float32)
    dec_input = jax.random.normal(k_in, (batch, seq, d_model), jnp.float32)
    params = init_params(k_par, num_layers, num_heads, d_model, d_k, d_v, d_ff)
    fused_params = fuse_params(params)

    fwd = jax.jit(lambda enc, x, prm: decoder_forward(enc, x, prm, num_heads, d_k, d_v))
    out = jax.block_until_ready(fwd(encoder_output, dec_input, fused_params))

    ref = decoder_forward_ref(encoder_output, dec_input, params, num_heads, d_k, d_v)
    assert out.shape == dec_input.shape
    max_err = float(jnp.max(jnp.abs(out - ref)))
    assert jnp.allclose(out, ref, atol=2e-2, rtol=2e-2), f"mismatch vs reference, max|err|={max_err}"

    print("KERNEL_OK")
</pallas_src>

<mosaic_0001>
module attributes {stable_mosaic.version = 11 : i64} {
  func.func @_matmul_kernel(%arg0: i32, %arg1: memref<16x32xf32, #tpu.memory_space<vmem>>, %arg2: memref<32x32xf32, #tpu.memory_space<vmem>>, %arg3: memref<16x32xf32, #tpu.memory_space<vmem>>) attributes {dimension_semantics = [#tpu.dimension_semantics<parallel>], iteration_bounds = array<i64: 1>, scalar_prefetch = 0 : i64, scratch_operands = 0 : i64, tpu.core_type = #tpu.core_type<tc>, window_params = [{transform_indices = @transform_0, window_bounds = array<i64: 16, 32>}, {pipeline_mode = #tpu.pipeline_mode<synchronous>, transform_indices = @transform_1, window_bounds = array<i64: 32, 32>}, {transform_indices = @transform_2, window_bounds = array<i64: 16, 32>}]} {
    %c0 = arith.constant 0 : index
    %c0_0 = arith.constant 0 : index
    %0 = vector.load %arg1[%c0, %c0_0] : memref<16x32xf32, #tpu.memory_space<vmem>>, vector<16x32xf32>
    %c0_1 = arith.constant 0 : index
    %c0_2 = arith.constant 0 : index
    %1 = vector.load %arg2[%c0_1, %c0_2] : memref<32x32xf32, #tpu.memory_space<vmem>>, vector<32x32xf32>
    %cst = arith.constant dense<0.000000e+00> : vector<16x32xf32>
    %2 = tpu.matmul %0, %1, %cst {dimension_numbers = #tpu.dot_dimension_numbers<[1], [0], [0], [1], [0, 0, 1, 1], [], []>} : vector<16x32xf32>, vector<32x32xf32>, vector<16x32xf32> -> vector<16x32xf32>
    %c0_3 = arith.constant 0 : index
    %c0_4 = arith.constant 0 : index
    %3 = vector.load %arg3[%c0_3, %c0_4] : memref<16x32xf32, #tpu.memory_space<vmem>>, vector<16x32xf32>
    tpu.vector_store %arg3[%c0_3, %c0_4], %2 {strides = array<i32>} : memref<16x32xf32, #tpu.memory_space<vmem>>, vector<16x32xf32>,
    return
  }
  func.func @transform_0(%arg0: i32) -> (i32, i32) {
    %c0_i32 = arith.constant 0 : i32
    %c0_i32_0 = arith.constant 0 : i32
    return %arg0, %c0_i32 : i32, i32
  }
  func.func @transform_1(%arg0: i32) -> (i32, i32) {
    %c0_i32 = arith.constant 0 : i32
    %c0_i32_0 = arith.constant 0 : i32
    %c0_i32_1 = arith.constant 0 : i32
    return %c0_i32, %c0_i32_0 : i32, i32
  }
  func.func @transform_2(%arg0: i32) -> (i32, i32) {
    %c0_i32 = arith.constant 0 : i32
    %c0_i32_0 = arith.constant 0 : i32
    return %arg0, %c0_i32 : i32, i32
  }
}

module attributes {stable_mosaic.version = 11 : i64} {
  func.func @_matmul_kernel(%arg0: i32, %arg1: memref<16x32xf32, #tpu.memory_space<vmem>>, %arg2: memref<32x96xf32, #tpu.memory_space<vmem>>, %arg3: memref<16x96xf32, #tpu.memory_space<vmem>>) attributes {dimension_semantics = [#tpu.dimension_semantics<parallel>], iteration_bounds = array<i64: 1>, scalar_prefetch = 0 : i64, scratch_operands = 0 : i64, tpu.core_type = #tpu.core_type<tc>, window_params = [{transform_indices = @transform_0, window_bounds = array<i64: 16, 32>}, {pipeline_mode = #tpu.pipeline_mode<synchronous>, transform_indices = @transform_1, window_bounds = array<i64: 32, 96>}, {transform_indices = @transform_2, window_bounds = array<i64: 16, 96>}]} {
    %c0 = arith.constant 0 : index
    %c0_0 = arith.constant 0 : index
    %0 = vector.load %arg1[%c0, %c0_0] : memref<16x32xf32, #tpu.memory_space<vmem>>, vector<16x32xf32>
    %c0_1 = arith.constant 0 : index
    %c0_2 = arith.constant 0 : index
    %1 = vector.load %arg2[%c0_1, %c0_2] : memref<32x96xf32, #tpu.memory_space<vmem>>, vector<32x96xf32>
    %cst = arith.constant dense<0.000000e+00> : vector<16x96xf32>
    %2 = tpu.matmul %0, %1, %cst {dimension_numbers = #tpu.dot_dimension_numbers<[1], [0], [0], [1], [0, 0, 1, 1], [], []>} : vector<16x32xf32>, vector<32x96xf32>, vector<16x96xf32> -> vector<16x96xf32>
    %c0_3 = arith.constant 0 : index
    %c0_4 = arith.constant 0 : index
    %3 = vector.load %arg3[%c0_3, %c0_4] : memref<16x96xf32, #tpu.memory_space<vmem>>, vector<16x96xf32>
    tpu.vector_store %arg3[%c0_3, %c0_4], %2 {strides = array<i32>} : memref<16x96xf32, #tpu.memory_space<vmem>>, vector<16x96xf32>,
    return
  }
  func.func @transform_0(%arg0: i32) -> (i32, i32) {
    %c0_i32 = arith.constant 0 : i32
    %c0_i32_0 = arith.constant 0 : i32
    return %arg0, %c0_i32 : i32, i32
  }
  func.func @transform_1(%arg0: i32) -> (i32, i32) {
    %c0_i32 = arith.constant 0 : i32
    %c0_i32_0 = arith.constant 0 : i32
    %c0_i32_1 = arith.constant 0 : i32
    return %c0_i32, %c0_i32_0 : i32, i32
  }
  func.func @transform_2(%arg0: i32) -> (i32, i32) {
    %c0_i32 = arith.constant 0 : i32
    %c0_i32_0 = arith.constant 0 : i32
    return %arg0, %c0_i32 : i32, i32
  }
}

module attributes {stable_mosaic.version = 11 : i64} {
  func.func @_proj_add_ln_kernel(%arg0: i32, %arg1: memref<16x32xf32, #tpu.memory_space<vmem>>, %arg2: memref<32x32xf32, #tpu.memory_space<vmem>>, %arg3: memref<16x32xf32, #tpu.memory_space<vmem>>, %arg4: memref<1x32xf32, #tpu.memory_space<vmem>>, %arg5: memref<1x32xf32, #tpu.memory_space<vmem>>, %arg6: memref<16x32xf32, #tpu.memory_space<vmem>>) attributes {dimension_semantics = [#tpu.dimension_semantics<parallel>], iteration_bounds = array<i64: 1>, scalar_prefetch = 0 : i64, scratch_operands = 0 : i64, tpu.core_type = #tpu.core_type<tc>, window_params = [{transform_indices = @transform_0, window_bounds = array<i64: 16, 32>}, {pipeline_mode = #tpu.pipeline_mode<synchronous>, transform_indices = @transform_1, window_bounds = array<i64: 32, 32>}, {transform_indices = @transform_2, window_bounds = array<i64: 16, 32>}, {pipeline_mode = #tpu.pipeline_mode<synchronous>, transform_indices = @transform_3, window_bounds = array<i64: 1, 32>}, {pipeline_mode = #tpu.pipeline_mode<synchronous>, transform_indices = @transform_4, window_bounds = array<i64: 1, 32>}, {transform_indices = @transform_5, window_bounds = array<i64: 16, 32>}]} {
    %c0 = arith.constant 0 : index
    %c0_0 = arith.constant 0 : index
    %0 = vector.load %arg1[%c0, %c0_0] : memref<16x32xf32, #tpu.memory_space<vmem>>, vector<16x32xf32>
    %c0_1 = arith.constant 0 : index
    %c0_2 = arith.constant 0 : index
    %1 = vector.load %arg2[%c0_1, %c0_2] : memref<32x32xf32, #tpu.memory_space<vmem>>, vector<32x32xf32>
    %cst = arith.constant dense<0.000000e+00> : vector<16x32xf32>
    %2 = tpu.matmul %0, %1, %cst {dimension_numbers = #tpu.dot_dimension_numbers<[1], [0], [0], [1], [0, 0, 1, 1], [], []>} : vector<16x32xf32>, vector<32x32xf32>, vector<16x32xf32> -> vector<16x32xf32>
    %c0_3 = arith.constant 0 : index
    %c0_4 = arith.constant 0 : index
    %3 = vector.load %arg3[%c0_3, %c0_4] : memref<16x32xf32, #tpu.memory_space<vmem>>, vector<16x32xf32>
    %4 = arith.addf %2, %3 : vector<16x32xf32>
    %cst_5 = arith.constant dense<0.000000e+00> : vector<16xf32>
    %5 = vector.multi_reduction <add>, %4, %cst_5 [1] : vector<16x32xf32> to vector<16xf32>
    %6 = vector.shape_cast %5 : vector<16xf32> to vector<16x1xf32>
    %cst_6 = arith.constant 3.200000e+01 : f32
    %7 = vector.broadcast %cst_6 : f32 to vector<16x1xf32>
    %8 = arith.divf %6, %7 : vector<16x1xf32>
    %9 = vector.broadcast %8 : vector<16x1xf32> to vector<16x32xf32>
    %10 = arith.subf %4, %9 : vector<16x32xf32>
    %11 = arith.mulf %10, %10 : vector<16x32xf32>
    %cst_7 = arith.constant dense<0.000000e+00> : vector<16xf32>
    %12 = vector.multi_reduction <add>, %11, %cst_7 [1] : vector<16x32xf32> to vector<16xf32>
    %13 = vector.shape_cast %12 : vector<16xf32> to vector<16x1xf32>
    %cst_8 = arith.constant 3.200000e+01 : f32
    %14 = vector.broadcast %cst_8 : f32 to vector<16x1xf32>
    %15 = arith.divf %13, %14 : vector<16x1xf32>
    %cst_9 = arith.constant 9.99999974E-6 : f32
    %16 = vector.broadcast %cst_9 : f32 to vector<16x1xf32>
    %17 = arith.addf %15, %16 : vector<16x1xf32>
    %18 = math.rsqrt %17 : vector<16x1xf32>
    %19 = vector.broadcast %18 : vector<16x1xf32> to vector<16x32xf32>
    %20 = arith.mulf %10, %19 : vector<16x32xf32>
    %c0_10 = arith.constant 0 : index
    %c0_11 = arith.constant 0 : index
    %21 = vector.load %arg4[%c0_10, %c0_11] : memref<1x32xf32, #tpu.memory_space<vmem>>, vector<1x32xf32>
    %22 = vector.broadcast %21 : vector<1x32xf32> to vector<16x32xf32>
    %23 = arith.mulf %20, %22 : vector<16x32xf32>
    %c0_12 = arith.constant 0 : index
    %c0_13 = arith.constant 0 : index
    %24 = vector.load %arg5[%c0_12, %c0_13] : memref<1x32xf32, #tpu.memory_space<vmem>>, vector<1x32xf32>
    %25 = vector.broadcast %24 : vector<1x32xf32> to vector<16x32xf32>
    %26 = arith.addf %23, %25 : vector<16x32xf32>
    %c0_14 = arith.constant 0 : index
    %c0_15 = arith.constant 0 : index
    %27 = vector.load %arg6[%c0_14, %c0_15] : memref<16x32xf32, #tpu.memory_space<vmem>>, vector<16x32xf32>
    tpu.vector_store %arg6[%c0_14, %c0_15], %26 {strides = array<i32>} : memref<16x32xf32, #tpu.memory_space<vmem>>, vector<16x32xf32>,
    return
  }
  func.func @transform_0(%arg0: i32) -> (i32, i32) {
    %c0_i32 = arith.constant 0 : i32
    %c0_i32_0 = arith.constant 0 : i32
    return %arg0, %c0_i32 : i32, i32
  }
  func.func @transform_1(%arg0: i32) -> (i32, i32) {
    %c0_i32 = arith.constant 0 : i32
    %c0_i32_0 = arith.constant 0 : i32
    %c0_i32_1 = arith.constant 0 : i32
    return %c0_i32, %c0_i32_0 : i32, i32
  }
  func.func @transform_2(%arg0: i32) -> (i32, i32) {
    %c0_i32 = arith.constant 0 : i32
    %c0_i32_0 = arith.constant 0 : i32
    return %arg0, %c0_i32 : i32, i32
  }
  func.func @transform_3(%arg0: i32) -> (i32, i32) {
    %c0_i32 = arith.constant 0 : i32
    %c0_i32_0 = arith.constant 0 : i32
    %c0_i32_1 = arith.constant 0 : i32
    return %c0_i32, %c0_i32_0 : i32, i32
  }
  func.func @transform_4(%arg0: i32) -> (i32, i32) {
    %c0_i32 = arith.constant 0 : i32
    %c0_i32_0 = arith.constant 0 : i32
    %c0_i32_1 = arith.constant 0 : i32
    return %c0_i32, %c0_i32_0 : i32, i32
  }
  func.func @transform_5(%arg0: i32) -> (i32, i32) {
    %c0_i32 = arith.constant 0 : i32
    %c0_i32_0 = arith.constant 0 : i32
    return %arg0, %c0_i32 : i32, i32
  }
}

module attributes {stable_mosaic.version = 11 : i64} {
  func.func @_self_attn_kernel(%arg0: i32, %arg1: memref<1x8x96xf32, #tpu.memory_space<vmem>>, %arg2: memref<1x8x32xf32, #tpu.memory_space<vmem>>) attributes {dimension_semantics = [#tpu.dimension_semantics<parallel>], iteration_bounds = array<i64: 2>, scalar_prefetch = 0 : i64, scratch_operands = 0 : i64, tpu.core_type = #tpu.core_type<tc>, window_params = [{transform_indices = @transform_0, window_bounds = array<i64: 1, 8, 96>}, {transform_indices = @transform_1, window_bounds = array<i64: 1, 8, 32>}]} {
    %c0 = arith.constant 0 : index
    %c0_0 = arith.constant 0 : index
    %c0_1 = arith.constant 0 : index
    %0 = vector.load %arg1[%c0, %c0_0, %c0_1] : memref<1x8x96xf32, #tpu.memory_space<vmem>>, vector<1x8x96xf32>
    %1 = vector.shape_cast %0 : vector<1x8x96xf32> to vector<8x96xf32>
    %2 = vector.extract_strided_slice %1 {offsets = [0, 0], sizes = [8, 32], strides = [1, 1]} : vector<8x96xf32> to vector<8x32xf32>
    %3 = vector.extract_strided_slice %1 {offsets = [0, 32], sizes = [8, 32], strides = [1, 1]} : vector<8x96xf32> to vector<8x32xf32>
    %4 = vector.extract_strided_slice %1 {offsets = [0, 64], sizes = [8, 32], strides = [1, 1]} : vector<8x96xf32> to vector<8x32xf32>
    %5 = tpu.iota {dimensions = array<i32: 0>} : vector<8x8xi32>
    %6 = tpu.iota {dimensions = array<i32: 1>} : vector<8x8xi32>
    %7 = arith.cmpi sle, %6, %5 : vector<8x8xi32>
    %8 = vector.extract_strided_slice %2 {offsets = [0, 0], sizes = [8, 8], strides = [1, 1]} : vector<8x32xf32> to vector<8x8xf32>
    %9 = vector.extract_strided_slice %3 {offsets = [0, 0], sizes = [8, 8], strides = [1, 1]} : vector<8x32xf32> to vector<8x8xf32>
    %10 = vector.extract_strided_slice %4 {offsets = [0, 0], sizes = [8, 8], strides = [1, 1]} : vector<8x32xf32> to vector<8x8xf32>
    %cst = arith.constant dense<0.000000e+00> : vector<8x8xf32>
    %11 = tpu.matmul %8, %9, %cst {dimension_numbers = #tpu.dot_dimension_numbers<[1], [1], [0], [0], [0, 0, 1, 0], [], []>} : vector<8x8xf32>, vector<8x8xf32>, vector<8x8xf32> -> vector<8x8xf32>
    %cst_2 = arith.constant 0.353553385 : f32
    %12 = vector.broadcast %cst_2 : f32 to vector<8x8xf32>
    %13 = arith.mulf %11, %12 : vector<8x8xf32>
    %cst_3 = arith.constant -1.000000e+09 : f32
    %14 = vector.broadcast %cst_3 : f32 to vector<8x8xf32>
    %15 = arith.select %7, %13, %14 : vector<8x8xi1>, vector<8x8xf32>
    %cst_4 = arith.constant dense<0xFF800000> : vector<8xf32>
    %16 = vector.multi_reduction <maximumf>, %15, %cst_4 [1] : vector<8x8xf32> to vector<8xf32>
    %17 = vector.shape_cast %16 : vector<8xf32> to vector<8x1xf32>
    %18 = vector.broadcast %17 : vector<8x1xf32> to vector<8x8xf32>
    %19 = arith.subf %15, %18 : vector<8x8xf32>
    %20 = math.exp %19 : vector<8x8xf32>
    %cst_5 = arith.constant dense<0.000000e+00> : vector<8xf32>
    %21 = vector.multi_reduction <add>, %20, %cst_5 [1] : vector<8x8xf32> to vector<8xf32>
    %22 = vector.shape_cast %21 : vector<8xf32> to vector<8x1xf32>
    %23 = tpu.reciprocal %22 {approx = true} : vector<8x1xf32> -> vector<8x1xf32>
    %24 = vector.broadcast %23 : vector<8x1xf32> to vector<8x8xf32>
    %25 = arith.mulf %20, %24 : vector<8x8xf32>
    %cst_6 = arith.constant dense<0.000000e+00> : vector<8x8xf32>
    %26 = tpu.matmul %25, %10, %cst_6 {dimension_numbers = #tpu.dot_dimension_numbers<[1], [0], [0], [1], [0, 0, 1, 1], [], []>} : vector<8x8xf32>, vector<8x8xf32>, vector<8x8xf32> -> vector<8x8xf32>
    %27 = vector.extract_strided_slice %2 {offsets = [0, 8], sizes = [8, 8], strides = [1, 1]} : vector<8x32xf32> to vector<8x8xf32>
    %28 = vector.extract_strided_slice %3 {offsets = [0, 8], sizes = [8, 8], strides = [1, 1]} : vector<8x32xf32> to vector<8x8xf32>
    %29 = vector.extract_strided_slice %4 {offsets = [0, 8], sizes = [8, 8], strides = [1, 1]} : vector<8x32xf32> to vector<8x8xf32>
    %cst_7 = arith.constant dense<0.000000e+00> : vector<8x8xf32>
    %30 = tpu.matmul %27, %28, %cst_7 {dimension_numbers = #tpu.dot_dimension_numbers<[1], [1], [0], [0], [0, 0, 1, 0], [], []>} : vector<8x8xf32>, vector<8x8xf32>, vector<8x8xf32> -> vector<8x8xf32>
    %cst_8 = arith.constant 0.353553385 : f32
    %31 = vector.broadcast %cst_8 : f32 to vector<8x8xf32>
    %32 = arith.mulf %30, %31 : vector<8x8xf32>
    %cst_9 = arith.constant -1.000000e+09 : f32
    %33 = vector.broadcast %cst_9 : f32 to vector<8x8xf32>
    %34 = arith.select %7, %32, %33 : vector<8x8xi1>, vector<8x8xf32>
    %cst_10 = arith.constant dense<0xFF800000> : vector<8xf32>
    %35 = vector.multi_reduction <maximumf>, %34, %cst_10 [1] : vector<8x8xf32> to vector<8xf32>
    %36 = vector.shape_cast %35 : vector<8xf32> to vector<8x1xf32>
    %37 = vector.broadcast %36 : vector<8x1xf32> to vector<8x8xf32>
    %38 = arith.subf %34, %37 : vector<8x8xf32>
    %39 = math.exp %38 : vector<8x8xf32>
    %cst_11 = arith.constant dense<0.000000e+00> : vector<8xf32>
    %40 = vector.multi_reduction <add>, %39, %cst_11 [1] : vector<8x8xf32> to vector<8xf32>
    %41 = vector.shape_cast %40 : vector<8xf32> to vector<8x1xf32>
    %42 = tpu.reciprocal %41 {approx = true} : vector<8x1xf32> -> vector<8x1xf32>
    %43 = vector.broadcast %42 : vector<8x1xf32> to vector<8x8xf32>
    %44 = arith.mulf %39, %43 : vector<8x8xf32>
    %cst_12 = arith.constant dense<0.000000e+00> : vector<8x8xf32>
    %45 = tpu.matmul %44, %29, %cst_12 {dimension_numbers = #tpu.dot_dimension_numbers<[1], [0], [0], [1], [0, 0, 1, 1], [], []>} : vector<8x8xf32>, vector<8x8xf32>, vector<8x8xf32> -> vector<8x8xf32>
    %46 = vector.extract_strided_slice %2 {offsets = [0, 16], sizes = [8, 8], strides = [1, 1]} : vector<8x32xf32> to vector<8x8xf32>
    %47 = vector.extract_strided_slice %3 {offsets = [0, 16], sizes = [8, 8], strides = [1, 1]} : vector<8x32xf32> to vector<8x8xf32>
    %48 = vector.extract_strided_slice %4 {offsets = [0, 16], sizes = [8, 8], strides = [1, 1]} : vector<8x32xf32> to vector<8x8xf32>
    %cst_13 = arith.constant dense<0.000000e+00> : vector<8x8xf32>
    %49 = tpu.matmul %46, %47, %cst_13 {dimension_numbers = #tpu.dot_dimension_numbers<[1], [1], [0], [0], [0, 0, 1, 0], [], []>} : vector<8x8xf32>, vector<8x8xf32>, vector<8x8xf32> -> vector<8x8xf32>
    %cst_14 = arith.constant 0.353553385 : f32
    %50 = vector.broadcast %cst_14 : f32 to vector<8x8xf32>
    %51 = arith.mulf %49, %50 : vector<8x8xf32>
    %cst_15 = arith.constant -1.000000e+09 : f32
    %52 = vector.broadcast %cst_15 : f32 to vector<8x8xf32>
    %53 = arith.select %7, %51, %52 : vector<8x8xi1>, vector<8x8xf32>
    %cst_16 = arith.constant dense<0xFF800000> : vector<8xf32>
    %54 = vector.multi_reduction <maximumf>, %53, %cst_16 [1] : vector<8x8xf32> to vector<8xf32>
    %55 = vector.shape_cast %54 : vector<8xf32> to vector<8x1xf32>
    %56 = vector.broadcast %55 : vector<8x1xf32> to vector<8x8xf32>
    %57 = arith.subf %53, %56 : vector<8x8xf32>
    %58 = math.exp %57 : vector<8x8xf32>
    %cst_17 = arith.constant dense<0.000000e+00> : vector<8xf32>
    %59 = vector.multi_reduction <add>, %58, %cst_17 [1] : vector<8x8xf32> to vector<8xf32>
    %60 = vector.shape_cast %59 : vector<8xf32> to vector<8x1xf32>
    %61 = tpu.reciprocal %60 {approx = true} : vector<8x1xf32> -> vector<8x1xf32>
    %62 = vector.broadcast %61 : vector<8x1xf32> to vector<8x8xf32>
    %63 = arith.mulf %58, %62 : vector<8x8xf32>
    %cst_18 = arith.constant dense<0.000000e+00> : vector<8x8xf32>
    %64 = tpu.matmul %63, %48, %cst_18 {dimension_numbers = #tpu.dot_dimension_numbers<[1], [0], [0], [1], [0, 0, 1, 1], [], []>} : vector<8x8xf32>, vector<8x8xf32>, vector<8x8xf32> -> vector<8x8xf32>
    %65 = vector.extract_strided_slice %2 {offsets = [0, 24], sizes = [8, 8], strides = [1, 1]} : vector<8x32xf32> to vector<8x8xf32>
    %66 = vector.extract_strided_slice %3 {offsets = [0, 24], sizes = [8, 8], strides = [1, 1]} : vector<8x32xf32> to vector<8x8xf32>
    %67 = vector.extract_strided_slice %4 {offsets = [0, 24], sizes = [8, 8], strides = [1, 1]} : vector<8x32xf32> to vector<8x8xf32>
    %cst_19 = arith.constant dense<0.000000e+00> : vector<8x8xf32>
    %68 = tpu.matmul %65, %66, %cst_19 {dimension_numbers = #tpu.dot_dimension_numbers<[1], [1], [0], [0], [0, 0, 1, 0], [], []>} : vector<8x8xf32>, vector<8x8xf32>, vector<8x8xf32> -> vector<8x8xf32>
    %cst_20 = arith.constant 0.353553385 : f32
    %69 = vector.broadcast %cst_20 : f32 to vector<8x8xf32>
    %70 = arith.mulf %68, %69 : vector<8x8xf32>
    %cst_21 = arith.constant -1.000000e+09 : f32
    %71 = vector.broadcast %cst_21 : f32 to vector<8x8xf32>
    %72 = arith.select %7, %70, %71 : vector<8x8xi1>, vector<8x8xf32>
    %cst_22 = arith.constant dense<0xFF800000> : vector<8xf32>
    %73 = vector.multi_reduction <maximumf>, %72, %cst_22 [1] : vector<8x8xf32> to vector<8xf32>
    %74 = vector.shape_cast %73 : vector<8xf32> to vector<8x1xf32>
    %75 = vector.broadcast %74 : vector<8x1xf32> to vector<8x8xf32>
    %76 = arith.subf %72, %75 : vector<8x8xf32>
    %77 = math.exp %76 : vector<8x8xf32>
    %cst_23 = arith.constant dense<0.000000e+00> : vector<8xf32>
    %78 = vector.multi_reduction <add>, %77, %cst_23 [1] : vector<8x8xf32> to vector<8xf32>
    %79 = vector.shape_cast %78 : vector<8xf32> to vector<8x1xf32>
    %80 = tpu.reciprocal %79 {approx = true} : vector<8x1xf32> -> vector<8x1xf32>
    %81 = vector.broadcast %80 : vector<8x1xf32> to vector<8x8xf32>
    %82 = arith.mulf %77, %81 : vector<8x8xf32>
    %cst_24 = arith.constant dense<0.000000e+00> : vector<8x8xf32>
    %83 = tpu.matmul %82, %67, %cst_24 {dimension_numbers = #tpu.dot_dimension_numbers<[1], [0], [0], [1], [0, 0, 1, 1], [], []>} : vector<8x8xf32>, vector<8x8xf32>, vector<8x8xf32> -> vector<8x8xf32>
    %84 = tpu.concatenate %26, %45, %64, %83 in 1 : vector<8x8xf32>, vector<8x8xf32>, vector<8x8xf32>, vector<8x8xf32> -> vector<8x32xf32>
    %c0_25 = arith.constant 0 : index
    %c0_26 = arith.constant 0 : index
    %c0_27 = arith.constant 0 : index
    %85 = vector.load %arg2[%c0_25, %c0_26, %c0_27] : memref<1x8x32xf32, #tpu.memory_space<vmem>>, vector<1x8x32xf32>
    %86 = vector.shape_cast %85 : vector<1x8x32xf32> to vector<8x32xf32>
    %87 = vector.shape_cast %84 : vector<8x32xf32> to vector<1x8x32xf32>
    tpu.vector_store %arg2[%c0_25, %c0_26, %c0_27], %87 {strides = array<i32>} : memref<1x8x32xf32, #tpu.memory_space<vmem>>, vector<1x8x32xf32>,
    return
  }
  func.func @transform_0(%arg0: i32) -> (i32, i32, i32) {
    %c0_i32 = arith.constant 0 : i32
    %c0_i32_0 = arith.constant 0 : i32
    %c0_i32_1 = arith.constant 0 : i32
    return %arg0, %c0_i32, %c0_i32_0 : i32, i32, i32
  }
  func.func @transform_1(%arg0: i32) -> (i32, i32, i32) {
    %c0_i32 = arith.constant 0 : i32
    %c0_i32_0 = arith.constant 0 : i32
    %c0_i32_1 = arith.constant 0 : i32
    return %arg0, %c0_i32, %c0_i32_0 : i32, i32, i32
  }
}

module attributes {stable_mosaic.version = 11 : i64} {
  func.func @_matmul_kernel(%arg0: i32, %arg1: memref<16x32xf32, #tpu.memory_space<vmem>>, %arg2: memref<32x64xf32, #tpu.memory_space<vmem>>, %arg3: memref<16x64xf32, #tpu.memory_space<vmem>>) attributes {dimension_semantics = [#tpu.dimension_semantics<parallel>], iteration_bounds = array<i64: 1>, scalar_prefetch = 0 : i64, scratch_operands = 0 : i64, tpu.core_type = #tpu.core_type<tc>, window_params = [{transform_indices = @transform_0, window_bounds = array<i64: 16, 32>}, {pipeline_mode = #tpu.pipeline_mode<synchronous>, transform_indices = @transform_1, window_bounds = array<i64: 32, 64>}, {transform_indices = @transform_2, window_bounds = array<i64: 16, 64>}]} {
    %c0 = arith.constant 0 : index
    %c0_0 = arith.constant 0 : index
    %0 = vector.load %arg1[%c0, %c0_0] : memref<16x32xf32, #tpu.memory_space<vmem>>, vector<16x32xf32>
    %c0_1 = arith.constant 0 : index
    %c0_2 = arith.constant 0 : index
    %1 = vector.load %arg2[%c0_1, %c0_2] : memref<32x64xf32, #tpu.memory_space<vmem>>, vector<32x64xf32>
    %cst = arith.constant dense<0.000000e+00> : vector<16x64xf32>
    %2 = tpu.matmul %0, %1, %cst {dimension_numbers = #tpu.dot_dimension_numbers<[1], [0], [0], [1], [0, 0, 1, 1], [], []>} : vector<16x32xf32>, vector<32x64xf32>, vector<16x64xf32> -> vector<16x64xf32>
    %c0_3 = arith.constant 0 : index
    %c0_4 = arith.constant 0 : index
    %3 = vector.load %arg3[%c0_3, %c0_4] : memref<16x64xf32, #tpu.memory_space<vmem>>, vector<16x64xf32>
    tpu.vector_store %arg3[%c0_3, %c0_4], %2 {strides = array<i32>} : memref<16x64xf32, #tpu.memory_space<vmem>>, vector<16x64xf32>,
    return
  }
  func.func @transform_0(%arg0: i32) -> (i32, i32) {
    %c0_i32 = arith.constant 0 : i32
    %c0_i32_0 = arith.constant 0 : i32
    return %arg0, %c0_i32 : i32, i32
  }
  func.func @transform_1(%arg0: i32) -> (i32, i32) {
    %c0_i32 = arith.constant 0 : i32
    %c0_i32_0 = arith.constant 0 : i32
    %c0_i32_1 = arith.constant 0 : i32
    return %c0_i32, %c0_i32_0 : i32, i32
  }
  func.func @transform_2(%arg0: i32) -> (i32, i32) {
    %c0_i32 = arith.constant 0 : i32
    %c0_i32_0 = arith.constant 0 : i32
    return %arg0, %c0_i32 : i32, i32
  }
}

module attributes {stable_mosaic.version = 11 : i64} {
  func.func @_cross_attn_kernel(%arg0: i32, %arg1: memref<1x8x64xf32, #tpu.memory_space<vmem>>, %arg2: memref<1x8x32xf32, #tpu.memory_space<vmem>>, %arg3: memref<1x8x32xf32, #tpu.memory_space<vmem>>) attributes {dimension_semantics = [#tpu.dimension_semantics<parallel>], iteration_bounds = array<i64: 2>, scalar_prefetch = 0 : i64, scratch_operands = 0 : i64, tpu.core_type = #tpu.core_type<tc>, window_params = [{transform_indices = @transform_0, window_bounds = array<i64: 1, 8, 64>}, {transform_indices = @transform_1, window_bounds = array<i64: 1, 8, 32>}, {transform_indices = @transform_2, window_bounds = array<i64: 1, 8, 32>}]} {
    %c0 = arith.constant 0 : index
    %c0_0 = arith.constant 0 : index
    %c0_1 = arith.constant 0 : index
    %0 = vector.load %arg1[%c0, %c0_0, %c0_1] : memref<1x8x64xf32, #tpu.memory_space<vmem>>, vector<1x8x64xf32>
    %1 = vector.shape_cast %0 : vector<1x8x64xf32> to vector<8x64xf32>
    %2 = vector.extract_strided_slice %1 {offsets = [0, 0], sizes = [8, 32], strides = [1, 1]} : vector<8x64xf32> to vector<8x32xf32>
    %3 = vector.extract_strided_slice %1 {offsets = [0, 32], sizes = [8, 32], strides = [1, 1]} : vector<8x64xf32> to vector<8x32xf32>
    %c0_2 = arith.constant 0 : index
    %c0_3 = arith.constant 0 : index
    %c0_4 = arith.constant 0 : index
    %4 = vector.load %arg2[%c0_2, %c0_3, %c0_4] : memref<1x8x32xf32, #tpu.memory_space<vmem>>, vector<1x8x32xf32>
    %5 = vector.shape_cast %4 : vector<1x8x32xf32> to vector<8x32xf32>
    %6 = vector.extract_strided_slice %2 {offsets = [0, 0], sizes = [8, 8], strides = [1, 1]} : vector<8x32xf32> to vector<8x8xf32>
    %7 = vector.extract_strided_slice %3 {offsets = [0, 0], sizes = [8, 8], strides = [1, 1]} : vector<8x32xf32> to vector<8x8xf32>
    %8 = vector.extract_strided_slice %5 {offsets = [0, 0], sizes = [8, 8], strides = [1, 1]} : vector<8x32xf32> to vector<8x8xf32>
    %cst = arith.constant dense<0.000000e+00> : vector<8x8xf32>
    %9 = tpu.matmul %6, %7, %cst {dimension_numbers = #tpu.dot_dimension_numbers<[1], [1], [0], [0], [0, 0, 1, 0], [], []>} : vector<8x8xf32>, vector<8x8xf32>, vector<8x8xf32> -> vector<8x8xf32>
    %cst_5 = arith.constant 0.353553385 : f32
    %10 = vector.broadcast %cst_5 : f32 to vector<8x8xf32>
    %11 = arith.mulf %9, %10 : vector<8x8xf32>
    %cst_6 = arith.constant dense<0xFF800000> : vector<8xf32>
    %12 = vector.multi_reduction <maximumf>, %11, %cst_6 [1] : vector<8x8xf32> to vector<8xf32>
    %13 = vector.shape_cast %12 : vector<8xf32> to vector<8x1xf32>
    %14 = vector.broadcast %13 : vector<8x1xf32> to vector<8x8xf32>
    %15 = arith.subf %11, %14 : vector<8x8xf32>
    %16 = math.exp %15 : vector<8x8xf32>
    %cst_7 = arith.constant dense<0.000000e+00> : vector<8xf32>
    %17 = vector.multi_reduction <add>, %16, %cst_7 [1] : vector<8x8xf32> to vector<8xf32>
    %18 = vector.shape_cast %17 : vector<8xf32> to vector<8x1xf32>
    %19 = tpu.reciprocal %18 {approx = true} : vector<8x1xf32> -> vector<8x1xf32>
    %20 = vector.broadcast %19 : vector<8x1xf32> to vector<8x8xf32>
    %21 = arith.mulf %16, %20 : vector<8x8xf32>
    %cst_8 = arith.constant dense<0.000000e+00> : vector<8x8xf32>
    %22 = tpu.matmul %21, %8, %cst_8 {dimension_numbers = #tpu.dot_dimension_numbers<[1], [0], [0], [1], [0, 0, 1, 1], [], []>} : vector<8x8xf32>, vector<8x8xf32>, vector<8x8xf32> -> vector<8x8xf32>
    %23 = vector.extract_strided_slice %2 {offsets = [0, 8], sizes = [8, 8], strides = [1, 1]} : vector<8x32xf32> to vector<8x8xf32>
    %24 = vector.extract_strided_slice %3 {offsets = [0, 8], sizes = [8, 8], strides = [1, 1]} : vector<8x32xf32> to vector<8x8xf32>
    %25 = vector.extract_strided_slice %5 {offsets = [0, 8], sizes = [8, 8], strides = [1, 1]} : vector<8x32xf32> to vector<8x8xf32>
    %cst_9 = arith.constant dense<0.000000e+00> : vector<8x8xf32>
    %26 = tpu.matmul %23, %24, %cst_9 {dimension_numbers = #tpu.dot_dimension_numbers<[1], [1], [0], [0], [0, 0, 1, 0], [], []>} : vector<8x8xf32>, vector<8x8xf32>, vector<8x8xf32> -> vector<8x8xf32>
    %cst_10 = arith.constant 0.353553385 : f32
    %27 = vector.broadcast %cst_10 : f32 to vector<8x8xf32>
    %28 = arith.mulf %26, %27 : vector<8x8xf32>
    %cst_11 = arith.constant dense<0xFF800000> : vector<8xf32>
    %29 = vector.multi_reduction <maximumf>, %28, %cst_11 [1] : vector<8x8xf32> to vector<8xf32>
    %30 = vector.shape_cast %29 : vector<8xf32> to vector<8x1xf32>
    %31 = vector.broadcast %30 : vector<8x1xf32> to vector<8x8xf32>
    %32 = arith.subf %28, %31 : vector<8x8xf32>
    %33 = math.exp %32 : vector<8x8xf32>
    %cst_12 = arith.constant dense<0.000000e+00> : vector<8xf32>
    %34 = vector.multi_reduction <add>, %33, %cst_12 [1] : vector<8x8xf32> to vector<8xf32>
    %35 = vector.shape_cast %34 : vector<8xf32> to vector<8x1xf32>
    %36 = tpu.reciprocal %35 {approx = true} : vector<8x1xf32> -> vector<8x1xf32>
    %37 = vector.broadcast %36 : vector<8x1xf32> to vector<8x8xf32>
    %38 = arith.mulf %33, %37 : vector<8x8xf32>
    %cst_13 = arith.constant dense<0.000000e+00> : vector<8x8xf32>
    %39 = tpu.matmul %38, %25, %cst_13 {dimension_numbers = #tpu.dot_dimension_numbers<[1], [0], [0], [1], [0, 0, 1, 1], [], []>} : vector<8x8xf32>, vector<8x8xf32>, vector<8x8xf32> -> vector<8x8xf32>
    %40 = vector.extract_strided_slice %2 {offsets = [0, 16], sizes = [8, 8], strides = [1, 1]} : vector<8x32xf32> to vector<8x8xf32>
    %41 = vector.extract_strided_slice %3 {offsets = [0, 16], sizes = [8, 8], strides = [1, 1]} : vector<8x32xf32> to vector<8x8xf32>
    %42 = vector.extract_strided_slice %5 {offsets = [0, 16], sizes = [8, 8], strides = [1, 1]} : vector<8x32xf32> to vector<8x8xf32>
    %cst_14 = arith.constant dense<0.000000e+00> : vector<8x8xf32>
    %43 = tpu.matmul %40, %41, %cst_14 {dimension_numbers = #tpu.dot_dimension_numbers<[1], [1], [0], [0], [0, 0, 1, 0], [], []>} : vector<8x8xf32>, vector<8x8xf32>, vector<8x8xf32> -> vector<8x8xf32>
    %cst_15 = arith.constant 0.353553385 : f32
    %44 = vector.broadcast %cst_15 : f32 to vector<8x8xf32>
    %45 = arith.mulf %43, %44 : vector<8x8xf32>
    %cst_16 = arith.constant dense<0xFF800000> : vector<8xf32>
    %46 = vector.multi_reduction <maximumf>, %45, %cst_16 [1] : vector<8x8xf32> to vector<8xf32>
    %47 = vector.shape_cast %46 : vector<8xf32> to vector<8x1xf32>
    %48 = vector.broadcast %47 : vector<8x1xf32> to vector<8x8xf32>
    %49 = arith.subf %45, %48 : vector<8x8xf32>
    %50 = math.exp %49 : vector<8x8xf32>
    %cst_17 = arith.constant dense<0.000000e+00> : vector<8xf32>
    %51 = vector.multi_reduction <add>, %50, %cst_17 [1] : vector<8x8xf32> to vector<8xf32>
    %52 = vector.shape_cast %51 : vector<8xf32> to vector<8x1xf32>
    %53 = tpu.reciprocal %52 {approx = true} : vector<8x1xf32> -> vector<8x1xf32>
    %54 = vector.broadcast %53 : vector<8x1xf32> to vector<8x8xf32>
    %55 = arith.mulf %50, %54 : vector<8x8xf32>
    %cst_18 = arith.constant dense<0.000000e+00> : vector<8x8xf32>
    %56 = tpu.matmul %55, %42, %cst_18 {dimension_numbers = #tpu.dot_dimension_numbers<[1], [0], [0], [1], [0, 0, 1, 1], [], []>} : vector<8x8xf32>, vector<8x8xf32>, vector<8x8xf32> -> vector<8x8xf32>
    %57 = vector.extract_strided_slice %2 {offsets = [0, 24], sizes = [8, 8], strides = [1, 1]} : vector<8x32xf32> to vector<8x8xf32>
    %58 = vector.extract_strided_slice %3 {offsets = [0, 24], sizes = [8, 8], strides = [1, 1]} : vector<8x32xf32> to vector<8x8xf32>
    %59 = vector.extract_strided_slice %5 {offsets = [0, 24], sizes = [8, 8], strides = [1, 1]} : vector<8x32xf32> to vector<8x8xf32>
    %cst_19 = arith.constant dense<0.000000e+00> : vector<8x8xf32>
    %60 = tpu.matmul %57, %58, %cst_19 {dimension_numbers = #tpu.dot_dimension_numbers<[1], [1], [0], [0], [0, 0, 1, 0], [], []>} : vector<8x8xf32>, vector<8x8xf32>, vector<8x8xf32> -> vector<8x8xf32>
    %cst_20 = arith.constant 0.353553385 : f32
    %61 = vector.broadcast %cst_20 : f32 to vector<8x8xf32>
    %62 = arith.mulf %60, %61 : vector<8x8xf32>
    %cst_21 = arith.constant dense<0xFF800000> : vector<8xf32>
    %63 = vector.multi_reduction <maximumf>, %62, %cst_21 [1] : vector<8x8xf32> to vector<8xf32>
    %64 = vector.shape_cast %63 : vector<8xf32> to vector<8x1xf32>
    %65 = vector.broadcast %64 : vector<8x1xf32> to vector<8x8xf32>
    %66 = arith.subf %62, %65 : vector<8x8xf32>
    %67 = math.exp %66 : vector<8x8xf32>
    %cst_22 = arith.constant dense<0.000000e+00> : vector<8xf32>
    %68 = vector.multi_reduction <add>, %67, %cst_22 [1] : vector<8x8xf32> to vector<8xf32>
    %69 = vector.shape_cast %68 : vector<8xf32> to vector<8x1xf32>
    %70 = tpu.reciprocal %69 {approx = true} : vector<8x1xf32> -> vector<8x1xf32>
    %71 = vector.broadcast %70 : vector<8x1xf32> to vector<8x8xf32>
    %72 = arith.mulf %67, %71 : vector<8x8xf32>
    %cst_23 = arith.constant dense<0.000000e+00> : vector<8x8xf32>
    %73 = tpu.matmul %72, %59, %cst_23 {dimension_numbers = #tpu.dot_dimension_numbers<[1], [0], [0], [1], [0, 0, 1, 1], [], []>} : vector<8x8xf32>, vector<8x8xf32>, vector<8x8xf32> -> vector<8x8xf32>
    %74 = tpu.concatenate %22, %39, %56, %73 in 1 : vector<8x8xf32>, vector<8x8xf32>, vector<8x8xf32>, vector<8x8xf32> -> vector<8x32xf32>
    %c0_24 = arith.constant 0 : index
    %c0_25 = arith.constant 0 : index
    %c0_26 = arith.constant 0 : index
    %75 = vector.load %arg3[%c0_24, %c0_25, %c0_26] : memref<1x8x32xf32, #tpu.memory_space<vmem>>, vector<1x8x32xf32>
    %76 = vector.shape_cast %75 : vector<1x8x32xf32> to vector<8x32xf32>
    %77 = vector.shape_cast %74 : vector<8x32xf32> to vector<1x8x32xf32>
    tpu.vector_store %arg3[%c0_24, %c0_25, %c0_26], %77 {strides = array<i32>} : memref<1x8x32xf32, #tpu.memory_space<vmem>>, vector<1x8x32xf32>,
    return
  }
  func.func @transform_0(%arg0: i32) -> (i32, i32, i32) {
    %c0_i32 = arith.constant 0 : i32
    %c0_i32_0 = arith.constant 0 : i32
    %c0_i32_1 = arith.constant 0 : i32
    return %arg0, %c0_i32, %c0_i32_0 : i32, i32, i32
  }
  func.func @transform_1(%arg0: i32) -> (i32, i32, i32) {
    %c0_i32 = arith.constant 0 : i32
    %c0_i32_0 = arith.constant 0 : i32
    %c0_i32_1 = arith.constant 0 : i32
    return %arg0, %c0_i32, %c0_i32_0 : i32, i32, i32
  }
  func.func @transform_2(%arg0: i32) -> (i32, i32, i32) {
    %c0_i32 = arith.constant 0 : i32
    %c0_i32_0 = arith.constant 0 : i32
    %c0_i32_1 = arith.constant 0 : i32
    return %arg0, %c0_i32, %c0_i32_0 : i32, i32, i32
  }
}

module attributes {stable_mosaic.version = 11 : i64} {
  func.func @_proj_add_ln_kernel(%arg0: i32, %arg1: memref<16x32xf32, #tpu.memory_space<vmem>>, %arg2: memref<32x32xf32, #tpu.memory_space<vmem>>, %arg3: memref<16x32xf32, #tpu.memory_space<vmem>>, %arg4: memref<1x32xf32, #tpu.memory_space<vmem>>, %arg5: memref<1x32xf32, #tpu.memory_space<vmem>>, %arg6: memref<16x32xf32, #tpu.memory_space<vmem>>) attributes {dimension_semantics = [#tpu.dimension_semantics<parallel>], iteration_bounds = array<i64: 1>, scalar_prefetch = 0 : i64, scratch_operands = 0 : i64, tpu.core_type = #tpu.core_type<tc>, window_params = [{transform_indices = @transform_0, window_bounds = array<i64: 16, 32>}, {pipeline_mode = #tpu.pipeline_mode<synchronous>, transform_indices = @transform_1, window_bounds = array<i64: 32, 32>}, {transform_indices = @transform_2, window_bounds = array<i64: 16, 32>}, {pipeline_mode = #tpu.pipeline_mode<synchronous>, transform_indices = @transform_3, window_bounds = array<i64: 1, 32>}, {pipeline_mode = #tpu.pipeline_mode<synchronous>, transform_indices = @transform_4, window_bounds = array<i64: 1, 32>}, {transform_indices = @transform_5, window_bounds = array<i64: 16, 32>}]} {
    %c0 = arith.constant 0 : index
    %c0_0 = arith.constant 0 : index
    %0 = vector.load %arg1[%c0, %c0_0] : memref<16x32xf32, #tpu.memory_space<vmem>>, vector<16x32xf32>
    %c0_1 = arith.constant 0 : index
    %c0_2 = arith.constant 0 : index
    %1 = vector.load %arg2[%c0_1, %c0_2] : memref<32x32xf32, #tpu.memory_space<vmem>>, vector<32x32xf32>
    %cst = arith.constant dense<0.000000e+00> : vector<16x32xf32>
    %2 = tpu.matmul %0, %1, %cst {dimension_numbers = #tpu.dot_dimension_numbers<[1], [0], [0], [1], [0, 0, 1, 1], [], []>} : vector<16x32xf32>, vector<32x32xf32>, vector<16x32xf32> -> vector<16x32xf32>
    %c0_3 = arith.constant 0 : index
    %c0_4 = arith.constant 0 : index
    %3 = vector.load %arg3[%c0_3, %c0_4] : memref<16x32xf32, #tpu.memory_space<vmem>>, vector<16x32xf32>
    %4 = arith.addf %2, %3 : vector<16x32xf32>
    %cst_5 = arith.constant dense<0.000000e+00> : vector<16xf32>
    %5 = vector.multi_reduction <add>, %4, %cst_5 [1] : vector<16x32xf32> to vector<16xf32>
    %6 = vector.shape_cast %5 : vector<16xf32> to vector<16x1xf32>
    %cst_6 = arith.constant 3.200000e+01 : f32
    %7 = vector.broadcast %cst_6 : f32 to vector<16x1xf32>
    %8 = arith.divf %6, %7 : vector<16x1xf32>
    %9 = vector.broadcast %8 : vector<16x1xf32> to vector<16x32xf32>
    %10 = arith.subf %4, %9 : vector<16x32xf32>
    %11 = arith.mulf %10, %10 : vector<16x32xf32>
    %cst_7 = arith.constant dense<0.000000e+00> : vector<16xf32>
    %12 = vector.multi_reduction <add>, %11, %cst_7 [1] : vector<16x32xf32> to vector<16xf32>
    %13 = vector.shape_cast %12 : vector<16xf32> to vector<16x1xf32>
    %cst_8 = arith.constant 3.200000e+01 : f32
    %14 = vector.broadcast %cst_8 : f32 to vector<16x1xf32>
    %15 = arith.divf %13, %14 : vector<16x1xf32>
    %cst_9 = arith.constant 9.99999974E-6 : f32
    %16 = vector.broadcast %cst_9 : f32 to vector<16x1xf32>
    %17 = arith.addf %15, %16 : vector<16x1xf32>
    %18 = math.rsqrt %17 : vector<16x1xf32>
    %19 = vector.broadcast %18 : vector<16x1xf32> to vector<16x32xf32>
    %20 = arith.mulf %10, %19 : vector<16x32xf32>
    %c0_10 = arith.constant 0 : index
    %c0_11 = arith.constant 0 : index
    %21 = vector.load %arg4[%c0_10, %c0_11] : memref<1x32xf32, #tpu.memory_space<vmem>>, vector<1x32xf32>
    %22 = vector.broadcast %21 : vector<1x32xf32> to vector<16x32xf32>
    %23 = arith.mulf %20, %22 : vector<16x32xf32>
    %c0_12 = arith.constant 0 : index
    %c0_13 = arith.constant 0 : index
    %24 = vector.load %arg5[%c0_12, %c0_13] : memref<1x32xf32, #tpu.memory_space<vmem>>, vector<1x32xf32>
    %25 = vector.broadcast %24 : vector<1x32xf32> to vector<16x32xf32>
    %26 = arith.addf %23, %25 : vector<16x32xf32>
    %c0_14 = arith.constant 0 : index
    %c0_15 = arith.constant 0 : index
    %27 = vector.load %arg6[%c0_14, %c0_15] : memref<16x32xf32, #tpu.memory_space<vmem>>, vector<16x32xf32>
    tpu.vector_store %arg6[%c0_14, %c0_15], %26 {strides = array<i32>} : memref<16x32xf32, #tpu.memory_space<vmem>>, vector<16x32xf32>,
    return
  }
  func.func @transform_0(%arg0: i32) -> (i32, i32) {
    %c0_i32 = arith.constant 0 : i32
    %c0_i32_0 = arith.constant 0 : i32
    return %arg0, %c0_i32 : i32, i32
  }
  func.func @transform_1(%arg0: i32) -> (i32, i32) {
    %c0_i32 = arith.constant 0 : i32
    %c0_i32_0 = arith.constant 0 : i32
    %c0_i32_1 = arith.constant 0 : i32
    return %c0_i32, %c0_i32_0 : i32, i32
  }
  func.func @transform_2(%arg0: i32) -> (i32, i32) {
    %c0_i32 = arith.constant 0 : i32
    %c0_i32_0 = arith.constant 0 : i32
    return %arg0, %c0_i32 : i32, i32
  }
  func.func @transform_3(%arg0: i32) -> (i32, i32) {
    %c0_i32 = arith.constant 0 : i32
    %c0_i32_0 = arith.constant 0 : i32
    %c0_i32_1 = arith.constant 0 : i32
    return %c0_i32, %c0_i32_0 : i32, i32
  }
  func.func @transform_4(%arg0: i32) -> (i32, i32) {
    %c0_i32 = arith.constant 0 : i32
    %c0_i32_0 = arith.constant 0 : i32
    %c0_i32_1 = arith.constant 0 : i32
    return %c0_i32, %c0_i32_0 : i32, i32
  }
  func.func @transform_5(%arg0: i32) -> (i32, i32) {
    %c0_i32 = arith.constant 0 : i32
    %c0_i32_0 = arith.constant 0 : i32
    return %arg0, %c0_i32 : i32, i32
  }
}

module attributes {stable_mosaic.version = 11 : i64} {
  func.func @_ffn_add_ln_kernel(%arg0: i32, %arg1: memref<16x32xf32, #tpu.memory_space<vmem>>, %arg2: memref<32x64xf32, #tpu.memory_space<vmem>>, %arg3: memref<1x64xf32, #tpu.memory_space<vmem>>, %arg4: memref<64x32xf32, #tpu.memory_space<vmem>>, %arg5: memref<1x32xf32, #tpu.memory_space<vmem>>, %arg6: memref<1x32xf32, #tpu.memory_space<vmem>>, %arg7: memref<1x32xf32, #tpu.memory_space<vmem>>, %arg8: memref<16x32xf32, #tpu.memory_space<vmem>>) attributes {dimension_semantics = [#tpu.dimension_semantics<parallel>], iteration_bounds = array<i64: 1>, scalar_prefetch = 0 : i64, scratch_operands = 0 : i64, tpu.core_type = #tpu.core_type<tc>, window_params = [{transform_indices = @transform_0, window_bounds = array<i64: 16, 32>}, {pipeline_mode = #tpu.pipeline_mode<synchronous>, transform_indices = @transform_1, window_bounds = array<i64: 32, 64>}, {pipeline_mode = #tpu.pipeline_mode<synchronous>, transform_indices = @transform_2, window_bounds = array<i64: 1, 64>}, {pipeline_mode = #tpu.pipeline_mode<synchronous>, transform_indices = @transform_3, window_bounds = array<i64: 64, 32>}, {pipeline_mode = #tpu.pipeline_mode<synchronous>, transform_indices = @transform_4, window_bounds = array<i64: 1, 32>}, {pipeline_mode = #tpu.pipeline_mode<synchronous>, transform_indices = @transform_5, window_bounds = array<i64: 1, 32>}, {pipeline_mode = #tpu.pipeline_mode<synchronous>, transform_indices = @transform_6, window_bounds = array<i64: 1, 32>}, {transform_indices = @transform_7, window_bounds = array<i64: 16, 32>}]} {
    %c0 = arith.constant 0 : index
    %c0_0 = arith.constant 0 : index
    %0 = vector.load %arg1[%c0, %c0_0] : memref<16x32xf32, #tpu.memory_space<vmem>>, vector<16x32xf32>
    %c0_1 = arith.constant 0 : index
    %c0_2 = arith.constant 0 : index
    %1 = vector.load %arg2[%c0_1, %c0_2] : memref<32x64xf32, #tpu.memory_space<vmem>>, vector<32x64xf32>
    %cst = arith.constant dense<0.000000e+00> : vector<16x64xf32>
    %2 = tpu.matmul %0, %1, %cst {dimension_numbers = #tpu.dot_dimension_numbers<[1], [0], [0], [1], [0, 0, 1, 1], [], []>} : vector<16x32xf32>, vector<32x64xf32>, vector<16x64xf32> -> vector<16x64xf32>
    %c0_3 = arith.constant 0 : index
    %c0_4 = arith.constant 0 : index
    %3 = vector.load %arg3[%c0_3, %c0_4] : memref<1x64xf32, #tpu.memory_space<vmem>>, vector<1x64xf32>
    %4 = vector.broadcast %3 : vector<1x64xf32> to vector<16x64xf32>
    %5 = arith.addf %2, %4 : vector<16x64xf32>
    %cst_5 = arith.constant 0.000000e+00 : f32
    %6 = vector.broadcast %cst_5 : f32 to vector<16x64xf32>
    %7 = arith.maximumf %5, %6 : vector<16x64xf32>
    %c0_6 = arith.constant 0 : index
    %c0_7 = arith.constant 0 : index
    %8 = vector.load %arg4[%c0_6, %c0_7] : memref<64x32xf32, #tpu.memory_space<vmem>>, vector<64x32xf32>
    %cst_8 = arith.constant dense<0.000000e+00> : vector<16x32xf32>
    %9 = tpu.matmul %7, %8, %cst_8 {dimension_numbers = #tpu.dot_dimension_numbers<[1], [0], [0], [1], [0, 0, 1, 1], [], []>} : vector<16x64xf32>, vector<64x32xf32>, vector<16x32xf32> -> vector<16x32xf32>
    %c0_9 = arith.constant 0 : index
    %c0_10 = arith.constant 0 : index
    %10 = vector.load %arg5[%c0_9, %c0_10] : memref<1x32xf32, #tpu.memory_space<vmem>>, vector<1x32xf32>
    %11 = vector.broadcast %10 : vector<1x32xf32> to vector<16x32xf32>
    %12 = arith.addf %9, %11 : vector<16x32xf32>
    %13 = arith.addf %12, %0 : vector<16x32xf32>
    %cst_11 = arith.constant dense<0.000000e+00> : vector<16xf32>
    %14 = vector.multi_reduction <add>, %13, %cst_11 [1] : vector<16x32xf32> to vector<16xf32>
    %15 = vector.shape_cast %14 : vector<16xf32> to vector<16x1xf32>
    %cst_12 = arith.constant 3.200000e+01 : f32
    %16 = vector.broadcast %cst_12 : f32 to vector<16x1xf32>
    %17 = arith.divf %15, %16 : vector<16x1xf32>
    %18 = vector.broadcast %17 : vector<16x1xf32> to vector<16x32xf32>
    %19 = arith.subf %13, %18 : vector<16x32xf32>
    %20 = arith.mulf %19, %19 : vector<16x32xf32>
    %cst_13 = arith.constant dense<0.000000e+00> : vector<16xf32>
    %21 = vector.multi_reduction <add>, %20, %cst_13 [1] : vector<16x32xf32> to vector<16xf32>
    %22 = vector.shape_cast %21 : vector<16xf32> to vector<16x1xf32>
    %cst_14 = arith.constant 3.200000e+01 : f32
    %23 = vector.broadcast %cst_14 : f32 to vector<16x1xf32>
    %24 = arith.divf %22, %23 : vector<16x1xf32>
    %cst_15 = arith.constant 9.99999974E-6 : f32
    %25 = vector.broadcast %cst_15 : f32 to vector<16x1xf32>
    %26 = arith.addf %24, %25 : vector<16x1xf32>
    %27 = math.rsqrt %26 : vector<16x1xf32>
    %28 = vector.broadcast %27 : vector<16x1xf32> to vector<16x32xf32>
    %29 = arith.mulf %19, %28 : vector<16x32xf32>
    %c0_16 = arith.constant 0 : index
    %c0_17 = arith.constant 0 : index
    %30 = vector.load %arg6[%c0_16, %c0_17] : memref<1x32xf32, #tpu.memory_space<vmem>>, vector<1x32xf32>
    %31 = vector.broadcast %30 : vector<1x32xf32> to vector<16x32xf32>
    %32 = arith.mulf %29, %31 : vector<16x32xf32>
    %c0_18 = arith.constant 0 : index
    %c0_19 = arith.constant 0 : index
    %33 = vector.load %arg7[%c0_18, %c0_19] : memref<1x32xf32, #tpu.memory_space<vmem>>, vector<1x32xf32>
    %34 = vector.broadcast %33 : vector<1x32xf32> to vector<16x32xf32>
    %35 = arith.addf %32, %34 : vector<16x32xf32>
    %c0_20 = arith.constant 0 : index
    %c0_21 = arith.constant 0 : index
    %36 = vector.load %arg8[%c0_20, %c0_21] : memref<16x32xf32, #tpu.memory_space<vmem>>, vector<16x32xf32>
    tpu.vector_store %arg8[%c0_20, %c0_21], %35 {strides = array<i32>} : memref<16x32xf32, #tpu.memory_space<vmem>>, vector<16x32xf32>,
    return
  }
  func.func @transform_0(%arg0: i32) -> (i32, i32) {
    %c0_i32 = arith.constant 0 : i32
    %c0_i32_0 = arith.constant 0 : i32
    return %arg0, %c0_i32 : i32, i32
  }
  func.func @transform_1(%arg0: i32) -> (i32, i32) {
    %c0_i32 = arith.constant 0 : i32
    %c0_i32_0 = arith.constant 0 : i32
    %c0_i32_1 = arith.constant 0 : i32
    return %c0_i32, %c0_i32_0 : i32, i32
  }
  func.func @transform_2(%arg0: i32) -> (i32, i32) {
    %c0_i32 = arith.constant 0 : i32
    %c0_i32_0 = arith.constant 0 : i32
    %c0_i32_1 = arith.constant 0 : i32
    return %c0_i32, %c0_i32_0 : i32, i32
  }
  func.func @transform_3(%arg0: i32) -> (i32, i32) {
    %c0_i32 = arith.constant 0 : i32
    %c0_i32_0 = arith.constant 0 : i32
    %c0_i32_1 = arith.constant 0 : i32
    return %c0_i32, %c0_i32_0 : i32, i32
  }
  func.func @transform_4(%arg0: i32) -> (i32, i32) {
    %c0_i32 = arith.constant 0 : i32
    %c0_i32_0 = arith.constant 0 : i32
    %c0_i32_1 = arith.constant 0 : i32
    return %c0_i32, %c0_i32_0 : i32, i32
  }
  func.func @transform_5(%arg0: i32) -> (i32, i32) {
    %c0_i32 = arith.constant 0 : i32
    %c0_i32_0 = arith.constant 0 : i32
    %c0_i32_1 = arith.constant 0 : i32
    return %c0_i32, %c0_i32_0 : i32, i32
  }
  func.func @transform_6(%arg0: i32) -> (i32, i32) {
    %c0_i32 = arith.constant 0 : i32
    %c0_i32_0 = arith.constant 0 : i32
    %c0_i32_1 = arith.constant 0 : i32
    return %c0_i32, %c0_i32_0 : i32, i32
  }
  func.func @transform_7(%arg0: i32) -> (i32, i32) {
    %c0_i32 = arith.constant 0 : i32
    %c0_i32_0 = arith.constant 0 : i32
    return %arg0, %c0_i32 : i32, i32
  }
}

module attributes {stable_mosaic.version = 11 : i64} {
  func.func @_matmul_kernel(%arg0: i32, %arg1: memref<16x32xf32, #tpu.memory_space<vmem>>, %arg2: memref<32x96xf32, #tpu.memory_space<vmem>>, %arg3: memref<16x96xf32, #tpu.memory_space<vmem>>) attributes {dimension_semantics = [#tpu.dimension_semantics<parallel>], iteration_bounds = array<i64: 1>, scalar_prefetch = 0 : i64, scratch_operands = 0 : i64, tpu.core_type = #tpu.core_type<tc>, window_params = [{transform_indices = @transform_0, window_bounds = array<i64: 16, 32>}, {pipeline_mode = #tpu.pipeline_mode<synchronous>, transform_indices = @transform_1, window_bounds = array<i64: 32, 96>}, {transform_indices = @transform_2, window_bounds = array<i64: 16, 96>}]} {
    %c0 = arith.constant 0 : index
    %c0_0 = arith.constant 0 : index
    %0 = vector.load %arg1[%c0, %c0_0] : memref<16x32xf32, #tpu.memory_space<vmem>>, vector<16x32xf32>
    %c0_1 = arith.constant 0 : index
    %c0_2 = arith.constant 0 : index
    %1 = vector.load %arg2[%c0_1, %c0_2] : memref<32x96xf32, #tpu.memory_space<vmem>>, vector<32x96xf32>
    %cst = arith.constant dense<0.000000e+00> : vector<16x96xf32>
    %2 = tpu.matmul %0, %1, %cst {dimension_numbers = #tpu.dot_dimension_numbers<[1], [0], [0], [1], [0, 0, 1, 1], [], []>} : vector<16x32xf32>, vector<32x96xf32>, vector<16x96xf32> -> vector<16x96xf32>
    %c0_3 = arith.constant 0 : index
    %c0_4 = arith.constant 0 : index
    %3 = vector.load %arg3[%c0_3, %c0_4] : memref<16x96xf32, #tpu.memory_space<vmem>>, vector<16x96xf32>
    tpu.vector_store %arg3[%c0_3, %c0_4], %2 {strides = array<i32>} : memref<16x96xf32, #tpu.memory_space<vmem>>, vector<16x96xf32>,
    return
  }
  func.func @transform_0(%arg0: i32) -> (i32, i32) {
    %c0_i32 = arith.constant 0 : i32
    %c0_i32_0 = arith.constant 0 : i32
    return %arg0, %c0_i32 : i32, i32
  }
  func.func @transform_1(%arg0: i32) -> (i32, i32) {
    %c0_i32 = arith.constant 0 : i32
    %c0_i32_0 = arith.constant 0 : i32
    %c0_i32_1 = arith.constant 0 : i32
    return %c0_i32, %c0_i32_0 : i32, i32
  }
  func.func @transform_2(%arg0: i32) -> (i32, i32) {
    %c0_i32 = arith.constant 0 : i32
    %c0_i32_0 = arith.constant 0 : i32
    return %arg0, %c0_i32 : i32, i32
  }
}

module attributes {stable_mosaic.version = 11 : i64} {
  func.func @_matmul_kernel(%arg0: i32, %arg1: memref<16x32xf32, #tpu.memory_space<vmem>>, %arg2: memref<32x32xf32, #tpu.memory_space<vmem>>, %arg3: memref<16x32xf32, #tpu.memory_space<vmem>>) attributes {dimension_semantics = [#tpu.dimension_semantics<parallel>], iteration_bounds = array<i64: 1>, scalar_prefetch = 0 : i64, scratch_operands = 0 : i64, tpu.core_type = #tpu.core_type<tc>, window_params = [{transform_indices = @transform_0, window_bounds = array<i64: 16, 32>}, {pipeline_mode = #tpu.pipeline_mode<synchronous>, transform_indices = @transform_1, window_bounds = array<i64: 32, 32>}, {transform_indices = @transform_2, window_bounds = array<i64: 16, 32>}]} {
    %c0 = arith.constant 0 : index
    %c0_0 = arith.constant 0 : index
    %0 = vector.load %arg1[%c0, %c0_0] : memref<16x32xf32, #tpu.memory_space<vmem>>, vector<16x32xf32>
    %c0_1 = arith.constant 0 : index
    %c0_2 = arith.constant 0 : index
    %1 = vector.load %arg2[%c0_1, %c0_2] : memref<32x32xf32, #tpu.memory_space<vmem>>, vector<32x32xf32>
    %cst = arith.constant dense<0.000000e+00> : vector<16x32xf32>
    %2 = tpu.matmul %0, %1, %cst {dimension_numbers = #tpu.dot_dimension_numbers<[1], [0], [0], [1], [0, 0, 1, 1], [], []>} : vector<16x32xf32>, vector<32x32xf32>, vector<16x32xf32> -> vector<16x32xf32>
    %c0_3 = arith.constant 0 : index
    %c0_4 = arith.constant 0 : index
    %3 = vector.load %arg3[%c0_3, %c0_4] : memref<16x32xf32, #tpu.memory_space<vmem>>, vector<16x32xf32>
    tpu.vector_store %arg3[%c0_3, %c0_4], %2 {strides = array<i32>} : memref<16x32xf32, #tpu.memory_space<vmem>>, vector<16x32xf32>,
    return
  }
  func.func @transform_0(%arg0: i32) -> (i32, i32) {
    %c0_i32 = arith.constant 0 : i32
    %c0_i32_0 = arith.constant 0 : i32
    return %arg0, %c0_i32 : i32, i32
  }
  func.func @transform_1(%arg0: i32) -> (i32, i32) {
    %c0_i32 = arith.constant 0 : i32
    %c0_i32_0 = arith.constant 0 : i32
    %c0_i32_1 = arith.constant 0 : i32
    return %c0_i32, %c0_i32_0 : i32, i32
  }
  func.func @transform_2(%arg0: i32) -> (i32, i32) {
    %c0_i32 = arith.constant 0 : i32
    %c0_i32_0 = arith.constant 0 : i32
    return %arg0, %c0_i32 : i32, i32
  }
}

module attributes {stable_mosaic.version = 11 : i64} {
  func.func @_ffn_add_ln_kernel(%arg0: i32, %arg1: memref<16x32xf32, #tpu.memory_space<vmem>>, %arg2: memref<32x64xf32, #tpu.memory_space<vmem>>, %arg3: memref<1x64xf32, #tpu.memory_space<vmem>>, %arg4: memref<64x32xf32, #tpu.memory_space<vmem>>, %arg5: memref<1x32xf32, #tpu.memory_space<vmem>>, %arg6: memref<1x32xf32, #tpu.memory_space<vmem>>, %arg7: memref<1x32xf32, #tpu.memory_space<vmem>>, %arg8: memref<16x32xf32, #tpu.memory_space<vmem>>) attributes {dimension_semantics = [#tpu.dimension_semantics<parallel>], iteration_bounds = array<i64: 1>, scalar_prefetch = 0 : i64, scratch_operands = 0 : i64, tpu.core_type = #tpu.core_type<tc>, window_params = [{transform_indices = @transform_0, window_bounds = array<i64: 16, 32>}, {pipeline_mode = #tpu.pipeline_mode<synchronous>, transform_indices = @transform_1, window_bounds = array<i64: 32, 64>}, {pipeline_mode = #tpu.pipeline_mode<synchronous>, transform_indices = @transform_2, window_bounds = array<i64: 1, 64>}, {pipeline_mode = #tpu.pipeline_mode<synchronous>, transform_indices = @transform_3, window_bounds = array<i64: 64, 32>}, {pipeline_mode = #tpu.pipeline_mode<synchronous>, transform_indices = @transform_4, window_bounds = array<i64: 1, 32>}, {pipeline_mode = #tpu.pipeline_mode<synchronous>, transform_indices = @transform_5, window_bounds = array<i64: 1, 32>}, {pipeline_mode = #tpu.pipeline_mode<synchronous>, transform_indices = @transform_6, window_bounds = array<i64: 1, 32>}, {transform_indices = @transform_7, window_bounds = array<i64: 16, 32>}]} {
    %c0 = arith.constant 0 : index
    %c0_0 = arith.constant 0 : index
    %0 = vector.load %arg1[%c0, %c0_0] : memref<16x32xf32, #tpu.memory_space<vmem>>, vector<16x32xf32>
    %c0_1 = arith.constant 0 : index
    %c0_2 = arith.constant 0 : index
    %1 = vector.load %arg2[%c0_1, %c0_2] : memref<32x64xf32, #tpu.memory_space<vmem>>, vector<32x64xf32>
    %cst = arith.constant dense<0.000000e+00> : vector<16x64xf32>
    %2 = tpu.matmul %0, %1, %cst {dimension_numbers = #tpu.dot_dimension_numbers<[1], [0], [0], [1], [0, 0, 1, 1], [], []>} : vector<16x32xf32>, vector<32x64xf32>, vector<16x64xf32> -> vector<16x64xf32>
    %c0_3 = arith.constant 0 : index
    %c0_4 = arith.constant 0 : index
    %3 = vector.load %arg3[%c0_3, %c0_4] : memref<1x64xf32, #tpu.memory_space<vmem>>, vector<1x64xf32>
    %4 = vector.broadcast %3 : vector<1x64xf32> to vector<16x64xf32>
    %5 = arith.addf %2, %4 : vector<16x64xf32>
    %cst_5 = arith.constant 0.000000e+00 : f32
    %6 = vector.broadcast %cst_5 : f32 to vector<16x64xf32>
    %7 = arith.maximumf %5, %6 : vector<16x64xf32>
    %c0_6 = arith.constant 0 : index
    %c0_7 = arith.constant 0 : index
    %8 = vector.load %arg4[%c0_6, %c0_7] : memref<64x32xf32, #tpu.memory_space<vmem>>, vector<64x32xf32>
    %cst_8 = arith.constant dense<0.000000e+00> : vector<16x32xf32>
    %9 = tpu.matmul %7, %8, %cst_8 {dimension_numbers = #tpu.dot_dimension_numbers<[1], [0], [0], [1], [0, 0, 1, 1], [], []>} : vector<16x64xf32>, vector<64x32xf32>, vector<16x32xf32> -> vector<16x32xf32>
    %c0_9 = arith.constant 0 : index
    %c0_10 = arith.constant 0 : index
    %10 = vector.load %arg5[%c0_9, %c0_10] : memref<1x32xf32, #tpu.memory_space<vmem>>, vector<1x32xf32>
    %11 = vector.broadcast %10 : vector<1x32xf32> to vector<16x32xf32>
    %12 = arith.addf %9, %11 : vector<16x32xf32>
    %13 = arith.addf %12, %0 : vector<16x32xf32>
    %cst_11 = arith.constant dense<0.000000e+00> : vector<16xf32>
    %14 = vector.multi_reduction <add>, %13, %cst_11 [1] : vector<16x32xf32> to vector<16xf32>
    %15 = vector.shape_cast %14 : vector<16xf32> to vector<16x1xf32>
    %cst_12 = arith.constant 3.200000e+01 : f32
    %16 = vector.broadcast %cst_12 : f32 to vector<16x1xf32>
    %17 = arith.divf %15, %16 : vector<16x1xf32>
    %18 = vector.broadcast %17 : vector<16x1xf32> to vector<16x32xf32>
    %19 = arith.subf %13, %18 : vector<16x32xf32>
    %20 = arith.mulf %19, %19 : vector<16x32xf32>
    %cst_13 = arith.constant dense<0.000000e+00> : vector<16xf32>
    %21 = vector.multi_reduction <add>, %20, %cst_13 [1] : vector<16x32xf32> to vector<16xf32>
    %22 = vector.shape_cast %21 : vector<16xf32> to vector<16x1xf32>
    %cst_14 = arith.constant 3.200000e+01 : f32
    %23 = vector.broadcast %cst_14 : f32 to vector<16x1xf32>
    %24 = arith.divf %22, %23 : vector<16x1xf32>
    %cst_15 = arith.constant 9.99999974E-6 : f32
    %25 = vector.broadcast %cst_15 : f32 to vector<16x1xf32>
    %26 = arith.addf %24, %25 : vector<16x1xf32>
    %27 = math.rsqrt %26 : vector<16x1xf32>
    %28 = vector.broadcast %27 : vector<16x1xf32> to vector<16x32xf32>
    %29 = arith.mulf %19, %28 : vector<16x32xf32>
    %c0_16 = arith.constant 0 : index
    %c0_17 = arith.constant 0 : index
    %30 = vector.load %arg6[%c0_16, %c0_17] : memref<1x32xf32, #tpu.memory_space<vmem>>, vector<1x32xf32>
    %31 = vector.broadcast %30 : vector<1x32xf32> to vector<16x32xf32>
    %32 = arith.mulf %29, %31 : vector<16x32xf32>
    %c0_18 = arith.constant 0 : index
    %c0_19 = arith.constant 0 : index
    %33 = vector.load %arg7[%c0_18, %c0_19] : memref<1x32xf32, #tpu.memory_space<vmem>>, vector<1x32xf32>
    %34 = vector.broadcast %33 : vector<1x32xf32> to vector<16x32xf32>
    %35 = arith.addf %32, %34 : vector<16x32xf32>
    %c0_20 = arith.constant 0 : index
    %c0_21 = arith.constant 0 : index
    %36 = vector.load %arg8[%c0_20, %c0_21] : memref<16x32xf32, #tpu.memory_space<vmem>>, vector<16x32xf32>
    tpu.vector_store %arg8[%c0_20, %c0_21], %35 {strides = array<i32>} : memref<16x32xf32, #tpu.memory_space<vmem>>, vector<16x32xf32>,
    return
  }
  func.func @transform_0(%arg0: i32) -> (i32, i32) {
    %c0_i32 = arith.constant 0 : i32
    %c0_i32_0 = arith.constant 0 : i32
    return %arg0, %c0_i32 : i32, i32
  }
  func.func @transform_1(%arg0: i32) -> (i32, i32) {
    %c0_i32 = arith.constant 0 : i32
    %c0_i32_0 = arith.constant 0 : i32
    %c0_i32_1 = arith.constant 0 : i32
    return %c0_i32, %c0_i32_0 : i32, i32
  }
  func.func @transform_2(%arg0: i32) -> (i32, i32) {
    %c0_i32 = arith.constant 0 : i32
    %c0_i32_0 = arith.constant 0 : i32
    %c0_i32_1 = arith.constant 0 : i32
    return %c0_i32, %c0_i32_0 : i32, i32
  }
  func.func @transform_3(%arg0: i32) -> (i32, i32) {
    %c0_i32 = arith.constant 0 : i32
    %c0_i32_0 = arith.constant 0 : i32
    %c0_i32_1 = arith.constant 0 : i32
    return %c0_i32, %c0_i32_0 : i32, i32
  }
  func.func @transform_4(%arg0: i32) -> (i32, i32) {
    %c0_i32 = arith.constant 0 : i32
    %c0_i32_0 = arith.constant 0 : i32
    %c0_i32_1 = arith.constant 0 : i32
    return %c0_i32, %c0_i32_0 : i32, i32
  }
  func.func @transform_5(%arg0: i32) -> (i32, i32) {
    %c0_i32 = arith.constant 0 : i32
    %c0_i32_0 = arith.constant 0 : i32
    %c0_i32_1 = arith.constant 0 : i32
    return %c0_i32, %c0_i32_0 : i32, i32
  }
  func.func @transform_6(%arg0: i32) -> (i32, i32) {
    %c0_i32 = arith.constant 0 : i32
    %c0_i32_0 = arith.constant 0 : i32
    %c0_i32_1 = arith.constant 0 : i32
    return %c0_i32, %c0_i32_0 : i32, i32
  }
  func.func @transform_7(%arg0: i32) -> (i32, i32) {
    %c0_i32 = arith.constant 0 : i32
    %c0_i32_0 = arith.constant 0 : i32
    return %arg0, %c0_i32 : i32, i32
  }
}

</mosaic_0001>

<llo_original>
// kernel: _lambda_.20
$region0: #{_lambda_.20}
  #allocation0 [shape = 'u32[]', space=smem, size = 0x4, offset = 0x4, fixed_abs, tag = 'smem constant byte address 0x4 - core index']
  #allocation1 [shape = 'u32[72,128]{1,0:T(1,128)}', space=vmem, size = 0x9000, scoped, tag = 'internal scratch']
  %s0 = inlined_call_operand.hbm [shape: f32[16,32], index: 0, kind: input, shape index: {}]
  %s1 = inlined_call_operand.hbm [shape: f32[32,32], index: 1, kind: input, shape index: {}]
  %s2 = inlined_call_operand.vmem [shape: f32[16,32], index: 2, kind: output, shape index: {}]
  %s3 = sld [smem:[#allocation0]]
  $region26: #{_lambda_.20} parent=0
    _
  %s5 = ssub.s32 1, %s3
  %s6 = scalar_select 0, %s5, %s3
  $region1: #{_lambda_.20} parent=0
    #allocation2 [shape = 'u8[8192]{0}', space=vmem, size = 0x2000, scoped, tag = 'input window, operand 0, single buffered']
    #allocation3 [shape = 's32[1]{0}', space=sflag, size = 0x4, scoped, tag = 'scoped memory for _lambda_.20']
    #allocation4 [shape = 'u8[16384]{0}', space=vmem, size = 0x4000, scoped, tag = 'input window, operand 1, single buffered']
    #allocation5 [shape = 's32[1]{0}', space=sflag, size = 0x4, scoped, tag = 'scoped memory for _lambda_.20']
    %7 = vsyncpa [#allocation3], 0
    %8 = vsyncpa [#allocation5], 0
    // Predicated region
    $region2: #{_lambda_.20} parent=1 // pred_check
      _
    $region3: #{_lambda_.20} parent=1 // pred_check_branch
      %10 = sbr.rel (0) target = $region5
    $region4: #{_lambda_.20} parent=1 // pred_region
      %12 = vsyncadd [#allocation3], 0
      %s13 = sshll.u32 %s0, 4
      %s14 = int_to_ptr.hbm [resolvable:$true] %s13
      %s15 = sshll.u32 [#allocation2], 4
      %s16 = int_to_ptr.vmem [resolvable:$true] %s15
      %21 = dma.hbm_to_vmem [thread:$0]  %s14, 256, %s16, [#allocation3], 128, 128, 8
    $region5: #{_lambda_.20} parent=1 // pred_fallthru
      _
    // Predicated region
    $region6: #{_lambda_.20} parent=1 // pred_check
      _
    $region7: #{_lambda_.20} parent=1 // pred_check_branch
      %23 = sbr.rel (0) target = $region9
    $region8: #{_lambda_.20} parent=1 // pred_region
      %25 = vsyncadd [#allocation5], 0
      %s26 = sshll.u32 %s1, 4
      %s27 = int_to_ptr.hbm [resolvable:$true] %s26
      %s28 = sshll.u32 [#allocation4], 4
      %s29 = int_to_ptr.vmem [resolvable:$true] %s28
      %34 = dma.hbm_to_vmem [thread:$0]  %s27, 512, %s29, [#allocation5], 128, 128, 8
    $region9: #{_lambda_.20} parent=1 // pred_fallthru
      _
    // Predicated region
    $region10: #{_lambda_.20} parent=1 // pred_check
      _
    $region11: #{_lambda_.20} parent=1 // pred_check_branch
      %36 = sbr.rel (0) target = $region13
    $region12: #{_lambda_.20} parent=1 // pred_region
      %38 = dma.done [#allocation3], 256
    $region13: #{_lambda_.20} parent=1 // pred_fallthru
      _
    // Predicated region
    $region14: #{_lambda_.20} parent=1 // pred_check
      _
    $region15: #{_lambda_.20} parent=1 // pred_check_branch
      %40 = sbr.rel (0) target = $region17
    $region16: #{_lambda_.20} parent=1 // pred_region
      %42 = dma.done [#allocation5], 512
    $region17: #{_lambda_.20} parent=1 // pred_fallthru
      _
    %v43 = vld [vmem:[#allocation2] sm:$0xff]
    %v44 = vld [vmem:[#allocation2 + $0x8] sm:$0xff]
    %v45 = vld [vmem:[#allocation4] sm:$0xff]
    %v46 = vld [vmem:[#allocation4 + $0x8] sm:$0xff]
    %v47 = vld [vmem:[#allocation4 + $0x10] sm:$0xff]
    %v48 = vld [vmem:[#allocation4 + $0x18] sm:$0xff]
    %vm49 = vcmask 261120
    %v51 = vsel %vm49, %v43, 0
    %v54 = vsel %vm49, %v44, 0
    %56 = vmatpush.msra.mxu0 0.0
    %57 = vmatpush.msra.mxu0 0.0
    %58 = vmatpush.msra.mxu0 0.0
    %59 = vmatpush.msra.mxu0 0.0
    %60 = vmatpush.msra.mxu0 0.0
    %61 = vmatpush.msra.mxu0 0.0
    %62 = vmatpush.msra.mxu0 0.0
    %63 = vmatpush.msra.mxu0 0.0
    %64 = vmatpush.msra.mxu0 0.0
    %65 = vmatpush.msra.mxu0 0.0
    %66 = vmatpush.msra.mxu0 0.0
    %67 = vmatpush.msra.mxu0 0.0
    %68 = vmatpush.msra.mxu0 %v48
    %69 = vmatpush.msra.mxu0 %v47
    %70 = vmatpush.msra.mxu0 %v46
    %71 = vmatpush.msra.mxu0 %v45
    %72 = vmatmul.f32.gmra.mxu0 %v51
    %v73 = vpop.f32.mrf.mxu0
    %v74 = vadd.f32 0.0, %v73
    %75 = vmatmul.f32.gmra.mxu0 %v54
    %v76 = vpop.f32.mrf.mxu0
    %v77 = vadd.f32 0.0, %v76
    %78 = vdwg.mxu0
    %79 = vst.msk [vmem:[%s2] sm:$0xff] %vm49, %v74
    %80 = vst.msk [vmem:[%s2 + $0x8] sm:$0xff] %vm49, %v77
    // Predicated region
    $region18: #{_lambda_.20} parent=1 // pred_check
      _
    $region19: #{_lambda_.20} parent=1 // pred_check_branch
      %82 = sbr.rel (0) target = $region21
    $region20: #{_lambda_.20} parent=1 // pred_region
      _
    $region21: #{_lambda_.20} parent=1 // pred_fallthru
      _
    // Predicated region
    $region22: #{_lambda_.20} parent=1 // pred_check
      _
    $region23: #{_lambda_.20} parent=1 // pred_check_branch
      %84 = sbr.rel (0) target = $region25
    $region24: #{_lambda_.20} parent=1 // pred_region
      _
    $region25: #{_lambda_.20} parent=1 // pred_fallthru
      _
    %85 = vsyncpa [#allocation3], 1
    %86 = vsyncpa [#allocation5], 1

// kernel: _lambda_.16
$region0: #{_lambda_.16}
  #allocation0 [shape = 'u32[]', space=smem, size = 0x4, offset = 0x4, fixed_abs, tag = 'smem constant byte address 0x4 - core index']
  #allocation1 [shape = 'u32[72,128]{1,0:T(1,128)}', space=vmem, size = 0x9000, scoped, tag = 'internal scratch']
  %s0 = inlined_call_operand.hbm [shape: f32[16,32], index: 0, kind: input, shape index: {}]
  %s1 = inlined_call_operand.hbm [shape: f32[32,96], index: 1, kind: input, shape index: {}]
  %s2 = inlined_call_operand.vmem [shape: f32[16,96], index: 2, kind: output, shape index: {}]
  %s3 = sld [smem:[#allocation0]]
  $region26: #{_lambda_.16} parent=0
    _
  %s5 = ssub.s32 1, %s3
  %s6 = scalar_select 0, %s5, %s3
  $region1: #{_lambda_.16} parent=0
    #allocation2 [shape = 'u8[8192]{0}', space=vmem, size = 0x2000, scoped, tag = 'input window, operand 0, single buffered']
    #allocation3 [shape = 's32[1]{0}', space=sflag, size = 0x4, scoped, tag = 'scoped memory for _lambda_.16']
    #allocation4 [shape = 'u8[16384]{0}', space=vmem, size = 0x4000, scoped, tag = 'input window, operand 1, single buffered']
    #allocation5 [shape = 's32[1]{0}', space=sflag, size = 0x4, scoped, tag = 'scoped memory for _lambda_.16']
    %7 = vsyncpa [#allocation3], 0
    %8 = vsyncpa [#allocation5], 0
    // Predicated region
    $region2: #{_lambda_.16} parent=1 // pred_check
      _
    $region3: #{_lambda_.16} parent=1 // pred_check_branch
      %10 = sbr.rel (0) target = $region5
    $region4: #{_lambda_.16} parent=1 // pred_region
      %12 = vsyncadd [#allocation3], 0
      %s13 = sshll.u32 %s0, 4
      %s14 = int_to_ptr.hbm [resolvable:$true] %s13
      %s15 = sshll.u32 [#allocation2], 4
      %s16 = int_to_ptr.vmem [resolvable:$true] %s15
      %21 = dma.hbm_to_vmem [thread:$0]  %s14, 256, %s16, [#allocation3], 128, 128, 8
    $region5: #{_lambda_.16} parent=1 // pred_fallthru
      _
    // Predicated region
    $region6: #{_lambda_.16} parent=1 // pred_check
      _
    $region7: #{_lambda_.16} parent=1 // pred_check_branch
      %23 = sbr.rel (0) target = $region9
    $region8: #{_lambda_.16} parent=1 // pred_region
      %25 = vsyncadd [#allocation5], 0
      %s26 = sshll.u32 %s1, 4
      %s27 = int_to_ptr.hbm [resolvable:$true] %s26
      %s28 = sshll.u32 [#allocation4], 4
      %s29 = int_to_ptr.vmem [resolvable:$true] %s28
      %34 = dma.hbm_to_vmem [thread:$0]  %s27, 512, %s29, [#allocation5], 128, 128, 8
    $region9: #{_lambda_.16} parent=1 // pred_fallthru
      _
    // Predicated region
    $region10: #{_lambda_.16} parent=1 // pred_check
      _
    $region11: #{_lambda_.16} parent=1 // pred_check_branch
      %36 = sbr.rel (0) target = $region13
    $region12: #{_lambda_.16} parent=1 // pred_region
      %38 = dma.done [#allocation3], 256
    $region13: #{_lambda_.16} parent=1 // pred_fallthru
      _
    // Predicated region
    $region14: #{_lambda_.16} parent=1 // pred_check
      _
    $region15: #{_lambda_.16} parent=1 // pred_check_branch
      %40 = sbr.rel (0) target = $region17
    $region16: #{_lambda_.16} parent=1 // pred_region
      %42 = dma.done [#allocation5], 512
    $region17: #{_lambda_.16} parent=1 // pred_fallthru
      _
    %v43 = vld [vmem:[#allocation2] sm:$0xff]
    %v44 = vld [vmem:[#allocation2 + $0x8] sm:$0xff]
    %v45 = vld [vmem:[#allocation4] sm:$0xff]
    %v46 = vld [vmem:[#allocation4 + $0x8] sm:$0xff]
    %v47 = vld [vmem:[#allocation4 + $0x10] sm:$0xff]
    %v48 = vld [vmem:[#allocation4 + $0x18] sm:$0xff]
    %vm49 = vcmask 261120
    %v51 = vsel %vm49, %v43, 0
    %v54 = vsel %vm49, %v44, 0
    %56 = vmatpush.msra.mxu0 0.0
    %57 = vmatpush.msra.mxu0 0.0
    %58 = vmatpush.msra.mxu0 0.0
    %59 = vmatpush.msra.mxu0 0.0
    %60 = vmatpush.msra.mxu0 0.0
    %61 = vmatpush.msra.mxu0 0.0
    %62 = vmatpush.msra.mxu0 0.0
    %63 = vmatpush.msra.mxu0 0.0
    %64 = vmatpush.msra.mxu0 0.0
    %65 = vmatpush.msra.mxu0 0.0
    %66 = vmatpush.msra.mxu0 0.0
    %67 = vmatpush.msra.mxu0 0.0
    %68 = vmatpush.msra.mxu0 %v48
    %69 = vmatpush.msra.mxu0 %v47
    %70 = vmatpush.msra.mxu0 %v46
    %71 = vmatpush.msra.mxu0 %v45
    %72 = vmatmul.f32.gmra.mxu0 %v51
    %v73 = vpop.f32.mrf.mxu0
    %v74 = vadd.f32 0.0, %v73
    %75 = vmatmul.f32.gmra.mxu0 %v54
    %v76 = vpop.f32.mrf.mxu0
    %v77 = vadd.f32 0.0, %v76
    %78 = vdwg.mxu0
    %vm79 = vcmask 785408
    %80 = vst.msk [vmem:[%s2] sm:$0xff] %vm79, %v74
    %81 = vst.msk [vmem:[%s2 + $0x8] sm:$0xff] %vm79, %v77
    // Predicated region
    $region18: #{_lambda_.16} parent=1 // pred_check
      _
    $region19: #{_lambda_.16} parent=1 // pred_check_branch
      %83 = sbr.rel (0) target = $region21
    $region20: #{_lambda_.16} parent=1 // pred_region
      _
    $region21: #{_lambda_.16} parent=1 // pred_fallthru
      _
    // Predicated region
    $region22: #{_lambda_.16} parent=1 // pred_check
      _
    $region23: #{_lambda_.16} parent=1 // pred_check_branch
      %85 = sbr.rel (0) target = $region25
    $region24: #{_lambda_.16} parent=1 // pred_region
      _
    $region25: #{_lambda_.16} parent=1 // pred_fallthru
      _
    %86 = vsyncpa [#allocation3], 1
    %87 = vsyncpa [#allocation5], 1

// kernel: _lambda_.18
$region0: #{_lambda_.18}
  #allocation0 [shape = 'u32[]', space=smem, size = 0x4, offset = 0x4, fixed_abs, tag = 'smem constant byte address 0x4 - core index']
  #allocation1 [shape = 'u32[72,128]{1,0:T(1,128)}', space=vmem, size = 0x9000, scoped, tag = 'internal scratch']
  %s0 = inlined_call_operand.vmem [shape: f32[16,32], index: 0, kind: input, shape index: {}]
  %s1 = inlined_call_operand.hbm [shape: f32[32,32], index: 1, kind: input, shape index: {}]
  %s2 = inlined_call_operand.hbm [shape: f32[16,32], index: 2, kind: input, shape index: {}]
  %s3 = inlined_call_operand.vmem [shape: f32[1,32], index: 3, kind: input, shape index: {}]
  %s4 = inlined_call_operand.vmem [shape: f32[1,32], index: 4, kind: input, shape index: {}]
  %s5 = inlined_call_operand.vmem [shape: f32[16,32], index: 5, kind: output, shape index: {}]
  %s6 = sld [smem:[#allocation0]]
  $region38: #{_lambda_.18} parent=0
    _
  %s8 = ssub.s32 1, %s6
  %s9 = scalar_select 0, %s8, %s6
  $region1: #{_lambda_.18} parent=0
    #allocation2 [shape = 'u8[16384]{0}', space=vmem, size = 0x4000, scoped, tag = 'input window, operand 1, single buffered']
    #allocation3 [shape = 's32[1]{0}', space=sflag, size = 0x4, scoped, tag = 'scoped memory for _lambda_.18']
    #allocation4 [shape = 'u8[8192]{0}', space=vmem, size = 0x2000, scoped, tag = 'input window, operand 2, single buffered']
    #allocation5 [shape = 's32[1]{0}', space=sflag, size = 0x4, scoped, tag = 'scoped memory for _lambda_.18']
    %10 = vsyncpa [#allocation3], 0
    %11 = vsyncpa [#allocation5], 0
    // Predicated region
    $region2: #{_lambda_.18} parent=1 // pred_check
      _
    $region3: #{_lambda_.18} parent=1 // pred_check_branch
      %13 = sbr.rel (0) target = $region5
    $region4: #{_lambda_.18} parent=1 // pred_region
      _
    $region5: #{_lambda_.18} parent=1 // pred_fallthru
      _
    // Predicated region
    $region6: #{_lambda_.18} parent=1 // pred_check
      _
    $region7: #{_lambda_.18} parent=1 // pred_check_branch
      %15 = sbr.rel (0) target = $region9
    $region8: #{_lambda_.18} parent=1 // pred_region
      %17 = vsyncadd [#allocation3], 0
      %s18 = sshll.u32 %s1, 4
      %s19 = int_to_ptr.hbm [resolvable:$true] %s18
      %s20 = sshll.u32 [#allocation2], 4
      %s21 = int_to_ptr.vmem [resolvable:$true] %s20
      %26 = dma.hbm_to_vmem [thread:$0]  %s19, 512, %s21, [#allocation3], 128, 128, 8
    $region9: #{_lambda_.18} parent=1 // pred_fallthru
      _
    // Predicated region
    $region10: #{_lambda_.18} parent=1 // pred_check
      _
    $region11: #{_lambda_.18} parent=1 // pred_check_branch
      %28 = sbr.rel (0) target = $region13
    $region12: #{_lambda_.18} parent=1 // pred_region
      %30 = vsyncadd [#allocation5], 0
      %s31 = sshll.u32 %s2, 4
      %s32 = int_to_ptr.hbm [resolvable:$true] %s31
      %s33 = sshll.u32 [#allocation4], 4
      %s34 = int_to_ptr.vmem [resolvable:$true] %s33
      %39 = dma.hbm_to_vmem [thread:$0]  %s32, 256, %s34, [#allocation5], 128, 128, 8
    $region13: #{_lambda_.18} parent=1 // pred_fallthru
      _
    // Predicated region
    $region14: #{_lambda_.18} parent=1 // pred_check
      _
    $region15: #{_lambda_.18} parent=1 // pred_check_branch
      %41 = sbr.rel (0) target = $region17
    $region16: #{_lambda_.18} parent=1 // pred_region
      _
    $region17: #{_lambda_.18} parent=1 // pred_fallthru
      _
    // Predicated region
    $region18: #{_lambda_.18} parent=1 // pred_check
      _
    $region19: #{_lambda_.18} parent=1 // pred_check_branch
      %43 = sbr.rel (0) target = $region21
    $region20: #{_lambda_.18} parent=1 // pred_region
      _
    $region21: #{_lambda_.18} parent=1 // pred_fallthru
      _
    // Predicated region
    $region22: #{_lambda_.18} parent=1 // pred_check
      _
    $region23: #{_lambda_.18} parent=1 // pred_check_branch
      %45 = sbr.rel (0) target = $region25
    $region24: #{_lambda_.18} parent=1 // pred_region
      %47 = dma.done [#allocation3], 512
    $region25: #{_lambda_.18} parent=1 // pred_fallthru
      _
    // Predicated region
    $region26: #{_lambda_.18} parent=1 // pred_check
      _
    $region27: #{_lambda_.18} parent=1 // pred_check_branch
      %49 = sbr.rel (0) target = $region29
    $region28: #{_lambda_.18} parent=1 // pred_region
      %51 = dma.done [#allocation5], 256
    $region29: #{_lambda_.18} parent=1 // pred_fallthru
      _
    %v52 = vld [vmem:[%s0] sm:$0xff]
    %v53 = vld [vmem:[%s0 + $0x8] sm:$0xff]
    %v54 = vld [vmem:[#allocation2] sm:$0xff]
    %v55 = vld [vmem:[#allocation2 + $0x8] sm:$0xff]
    %v56 = vld [vmem:[#allocation2 + $0x10] sm:$0xff]
    %v57 = vld [vmem:[#allocation2 + $0x18] sm:$0xff]
    %v58 = vld [vmem:[#allocation4] sm:$0xff]
    %v59 = vld [vmem:[#allocation4 + $0x8] sm:$0xff]
    %vm60 = vcmask 261120
    %v62 = vsel %vm60, %v52, 0
    %v65 = vsel %vm60, %v53, 0
    %67 = vmatpush.msra.mxu0 0.0
    %68 = vmatpush.msra.mxu0 0.0
    %69 = vmatpush.msra.mxu0 0.0
    %70 = vmatpush.msra.mxu0 0.0
    %71 = vmatpush.msra.mxu0 0.0
    %72 = vmatpush.msra.mxu0 0.0
    %73 = vmatpush.msra.mxu0 0.0
    %74 = vmatpush.msra.mxu0 0.0
    %75 = vmatpush.msra.mxu0 0.0
    %76 = vmatpush.msra.mxu0 0.0
    %77 = vmatpush.msra.mxu0 0.0
    %78 = vmatpush.msra.mxu0 0.0
    %79 = vmatpush.msra.mxu0 %v57
    %80 = vmatpush.msra.mxu0 %v56
    %81 = vmatpush.msra.mxu0 %v55
    %82 = vmatpush.msra.mxu0 %v54
    %83 = vmatmul.f32.gmra.mxu0 %v62
    %v84 = vpop.f32.mrf.mxu0
    %v85 = vadd.f32 %v58, %v84
    %86 = vmatmul.f32.gmra.mxu0 %v65
    %v87 = vpop.f32.mrf.mxu0
    %v88 = vadd.f32 %v59, %v87
    %89 = vdwg.mxu0
    %v90 = vsel %vm60, %v85, 0.0
    %91 = vadd.xlane.f32.xlu0 %v90
    %v92 = vpop.xlane.xlu0 %91
    %v93 = vsel %vm60, %v88, 0.0
    %94 = vadd.xlane.f32.xlu0 %v93
    %v95 = vpop.xlane.xlu0 %94
    %v96 = vrcp.pop 32.0
    %v97 = vmul.f32 32.0, %v96
    %v98 = vsub.f32 1.0, %v97
    %v99 = vmul.f32 %v96, %v98
    %v100 = vadd.f32 %v96, %v99
    %vm101 = vweird.f32 %v96
    %v102 = vsel %vm101, %v96, %v100
    %v103 = vmul.f32 %v92, %v102
    %v104 = vmul.f32 %v95, %v102
    %v105 = vsub.f32 %v85, %v103
    %v106 = vsub.f32 %v88, %v104
    %v107 = vmul.f32 %v105, %v105
    %v108 = vmul.f32 %v106, %v106
    %v109 = vsel %vm60, %v107, 0.0
    %110 = vadd.xlane.f32.xlu0 %v109
    %v111 = vpop.xlane.xlu0 %110
    %v112 = vsel %vm60, %v108, 0.0
    %113 = vadd.xlane.f32.xlu0 %v112
    %v114 = vpop.xlane.xlu0 %113
    %v115 = vmul.f32 %v111, %v102
    %v116 = vmul.f32 %v114, %v102
    %v117 = vadd.f32 %v115, 1e-05
    %v118 = vadd.f32 %v116, 1e-05
    %v119 = vrsqrt.pop %v117
    %v120 = vmul.f32 %v119, %v117
    %v121 = vmul.f32 %v120, %v119
    %v122 = vmul.f32 0.5, %v121
    %v123 = vsub.f32 1.5, %v122
    %v124 = vmul.f32 %v119, %v123
    %vm125 = vweird.f32 %v117
    %vm126 = vweird.f32 %v119
    %vm127 = vmor %vm125, %vm126
    %v128 = vsel %vm127, %v119, %v124
    %v129 = vrsqrt.pop %v118
    %v130 = vmul.f32 %v129, %v118
    %v131 = vmul.f32 %v130, %v129
    %v132 = vmul.f32 0.5, %v131
    %v133 = vsub.f32 1.5, %v132
    %v134 = vmul.f32 %v129, %v133
    %vm135 = vweird.f32 %v118
    %vm136 = vweird.f32 %v129
    %vm137 = vmor %vm135, %vm136
    %v138 = vsel %vm137, %v129, %v134
    %v139 = vmul.f32 %v105, %v128
    %v140 = vmul.f32 %v106, %v138
    %v141 = vld [vmem:[%s3] sm:$0x1]
    %v143 = vperm.slane %v141, 0
    %v145 = vmul.f32 %v139, %v143
    %v146 = vmul.f32 %v140, %v143
    %v147 = vld [vmem:[%s4] sm:$0x1]
    %v149 = vperm.slane %v147, 0
    %v151 = vadd.f32 %v145, %v149
    %v152 = vadd.f32 %v146, %v149
    %153 = vst.msk [vmem:[%s5] sm:$0xff] %vm60, %v151
    %154 = vst.msk [vmem:[%s5 + $0x8] sm:$0xff] %vm60, %v152
    // Predicated region
    $region30: #{_lambda_.18} parent=1 // pred_check
      _
    $region31: #{_lambda_.18} parent=1 // pred_check_branch
      %156 = sbr.rel (0) target = $region33
    $region32: #{_lambda_.18} parent=1 // pred_region
      _
    $region33: #{_lambda_.18} parent=1 // pred_fallthru
      _
    // Predicated region
    $region34: #{_lambda_.18} parent=1 // pred_check
      _
    $region35: #{_lambda_.18} parent=1 // pred_check_branch
      %158 = sbr.rel (0) target = $region37
    $region36: #{_lambda_.18} parent=1 // pred_region
      _
    $region37: #{_lambda_.18} parent=1 // pred_fallthru
      _
    %159 = vsyncpa [#allocation3], 1
    %160 = vsyncpa [#allocation5], 1

// kernel: _lambda_.17
$region0: #{_lambda_.17}
  #allocation0 [shape = 'u32[]', space=smem, size = 0x4, offset = 0x4, fixed_abs, tag = 'smem constant byte address 0x4 - core index']
  #allocation1 [shape = 'u32[72,128]{1,0:T(1,128)}', space=vmem, size = 0x9000, scoped, tag = 'internal scratch']
  %s0 = inlined_call_operand.vmem [shape: f32[2,8,96], index: 0, kind: input, shape index: {}]
  %s1 = inlined_call_operand.vmem [shape: f32[2,8,32], index: 1, kind: output, shape index: {}]
  %s2 = sld [smem:[#allocation0]]
  $region37: #{_lambda_.17} parent=0
    _
  %s4 = ssub.s32 1, %s2
  %s5 = scalar_select 0, %s4, %s2
  loop: start=0, step=1, limit=4
  $region2: #{_lambda_.17} parent=0 // loop_pre_header
    _
  $region3: #{_lambda_.17} parent=0 // loop_header
    %s7 = sphi 0, %s11
    %p8 = scmp.ge.s32.totalorder %s7, 4
    %s17 = sphi 0, %s19
    %s20 = sphi 0, %s17
    %s21 = sphi 0, %s20
    %s37 = sphi 0, %s21
    %s43 = sphi 0, %s45
    %s46 = sphi 0, %s43
    %s47 = sphi 0, %s46
    %s63 = sphi 0, %s47
  $region4: #{_lambda_.17} parent=0 // loop_header_branch
    %10 = sbr.rel (%p8) target = $region8
  $region5: #{_lambda_.17} parent=0 // loop_body
    %s12 = ssub.s32 %s7, 1
    %s13 = ssub.s32 %s7, 2
    %s14 = sadd.s32 %s7, 1
    %s15 = ssub.s32 %s7, %s14
    %p16 = scmp.eq.s32.totalorder %s15, 0
    %s18 = sadd.s32 %s17, 1
    %s19 = scalar_select %p16, %s17, %s18
    %p22 = pneg %p16
    %p23 = scmp.eq.s32.totalorder %s7, 1
    %p24 = por %p22, %p23
    %p25 = scmp.ne.s32.totalorder %s17, %s20
    %p26 = scmp.eq.s32.totalorder %s7, 0
    %p27 = por %p25, %p26
    %p28 = scmp.ne.s32.totalorder %s17, %s20
    %p29 = scmp.eq.s32.totalorder %s12, 1
    %p30 = por %p28, %p29
    %p31 = scmp.ne.s32.totalorder %s20, %s21
    %p32 = scmp.eq.s32.totalorder %s12, 0
    %p33 = por %p31, %p32
    %p34 = scmp.ne.s32.totalorder %s20, %s21
    %p35 = scmp.eq.s32.totalorder %s13, 1
    %p36 = por %p34, %p35
    %p38 = scmp.ne.s32.totalorder %s21, %s37
    %p39 = scmp.eq.s32.totalorder %s13, 0
    %p40 = por %p38, %p39
    %s41 = ssub.s32 %s7, %s14
    %p42 = scmp.eq.s32.totalorder %s41, 0
    %s44 = sadd.s32 %s43, 1
    %s45 = scalar_select %p42, %s43, %s44
    %p48 = pneg %p42
    %p49 = scmp.eq.s32.totalorder %s7, 1
    %p50 = por %p48, %p49
    %p51 = scmp.ne.s32.totalorder %s43, %s46
    %p52 = scmp.eq.s32.totalorder %s7, 0
    %p53 = por %p51, %p52
    %p54 = scmp.ne.s32.totalorder %s43, %s46
    %p55 = scmp.eq.s32.totalorder %s12, 1
    %p56 = por %p54, %p55
    %p57 = scmp.ne.s32.totalorder %s46, %s47
    %p58 = scmp.eq.s32.totalorder %s12, 0
    %p59 = por %p57, %p58
    %p60 = scmp.ne.s32.totalorder %s46, %s47
    %p61 = scmp.eq.s32.totalorder %s13, 1
    %p62 = por %p60, %p61
    %p64 = scmp.ne.s32.totalorder %s47, %s63
    %p65 = scmp.eq.s32.totalorder %s13, 0
    %p66 = por %p64, %p65
    %p67 = scmp.le.s32.totalorder 1, %s7
    %p68 = scmp.lt.s32.totalorder %s7, 3
    %p69 = pnand %p67, %p68
    %p70 = pneg %p69
    // Predicated region
    $region9: #{_lambda_.17} parent=5 // pred_check
      _
    $region10: #{_lambda_.17} parent=5 // pred_check_branch
      %72 = sbr.rel (%p69) target = $region12
    $region11: #{_lambda_.17} parent=5 // pred_region
      %s73 = ssub.s32 %s7, 1
    $region12: #{_lambda_.17} parent=5 // pred_fallthru
      _
    %p74 = scmp.lt.s32.totalorder %s7, 2
    // Predicated region
    $region13: #{_lambda_.17} parent=5 // pred_check
      %p75 = pneg %p74
    $region14: #{_lambda_.17} parent=5 // pred_check_branch
      %77 = sbr.rel (%p75) target = $region16
    $region15: #{_lambda_.17} parent=5 // pred_region
      // Predicated region
      $region17: #{_lambda_.17} parent=15 // pred_check
        %p78 = pneg %p27
      $region18: #{_lambda_.17} parent=15 // pred_check_branch
        %80 = sbr.rel (%p78) target = $region20
      $region19: #{_lambda_.17} parent=15 // pred_region
        %p81 = scmp.lt.s32.totalorder %s7, 1
        %s82 = scalar_select %p81, %s7, 1
        %s83 = smul.addr %s82, 8
        %s84 = scalar_lea.vmem %s0, %s83
      $region20: #{_lambda_.17} parent=15 // pred_fallthru
        _
    $region16: #{_lambda_.17} parent=5 // pred_fallthru
      _
    %p85 = scmp.le.s32.totalorder 1, %s7
    %p86 = scmp.lt.s32.totalorder %s7, 3
    %p87 = pnand %p85, %p86
    %p88 = pneg %p87
    // Predicated region
    $region21: #{_lambda_.17} parent=5 // pred_check
      _
    $region22: #{_lambda_.17} parent=5 // pred_check_branch
      %90 = sbr.rel (%p87) target = $region24
    $region23: #{_lambda_.17} parent=5 // pred_region
      %s91 = ssub.s32 %s7, 1
      %p92 = scmp.lt.s32.totalorder %s12, 1
      %s93 = scalar_select %p92, %s12, 1
      %s94 = smul.addr %s93, 8
      %s95 = scalar_lea.vmem %s0, %s94
      %p96 = pneg %p33
      %p97 = pneg %p30
      %p98 = pneg %p59
      %p99 = pneg %p56
      %p100 = scmp.lt.s32.totalorder %s12, 1
      %s101 = scalar_select %p100, %s12, 1
      %s102 = smul.addr %s101, 8
      %s103 = scalar_lea.vmem %s1, %s102
      %p104 = scmp.lt.s32.totalorder %s12, 1
      %s105 = scalar_select %p104, %s12, 1
      %s106 = smul.addr %s105, 8
      %s107 = scalar_lea.vmem %s0, %s106
      %p108 = scmp.lt.s32.totalorder %s12, 1
      %s109 = scalar_select %p108, %s12, 1
      %s110 = smul.addr %s109, 8
      %s111 = scalar_lea.vmem %s1, %s110
      %v112 = vld [vmem:[%s107] sm:$0xff]
      %v113 = vlaneseq
      %v114 = vshrl.u32 %v113, 7
      %v115 = vlaneseq
      %v116 = vand.u32 %v115, 127
      %vm117 = vcmp.le.s32.totalorder %v116, %v114
      %119 = vrot.lane.b32.xlu0 %v112, 96
      %v120 = vpop.permute.xlu0 %119
      %vm121 = vcmask 64512
      %v122 = vsel %vm121, %v112, 0
      %v124 = vsel %vm121, %v120, 0
      %126 = vmatpush.xpose.msra.mxu0 0.0
      %127 = vmatpush.xpose.msra.mxu0 0.0
      %128 = vmatpush.xpose.msra.mxu0 0.0
      %129 = vmatpush.xpose.msra.mxu0 0.0
      %130 = vmatpush.xpose.msra.mxu0 0.0
      %131 = vmatpush.xpose.msra.mxu0 0.0
      %132 = vmatpush.xpose.msra.mxu0 0.0
      %133 = vmatpush.xpose.msra.mxu0 0.0
      %134 = vmatpush.xpose.msra.mxu0 0.0
      %135 = vmatpush.xpose.msra.mxu0 0.0
      %136 = vmatpush.xpose.msra.mxu0 0.0
      %137 = vmatpush.xpose.msra.mxu0 0.0
      %138 = vmatpush.xpose.msra.mxu0 0.0
      %139 = vmatpush.xpose.msra.mxu0 0.0
      %140 = vmatpush.xpose.msra.mxu0 0.0
      %141 = vmatpush.xpose.msra.mxu0 %v124
      %142 = vmatmul.f32.gmra.mxu0 %v122
      %v143 = vpop.f32.mrf.mxu0
      %v144 = vadd.f32 0.0, %v143
      %145 = vdwg.mxu0
      %v146 = vmul.f32 %v144, 0.35355338
      %v147 = vsel %vm117, %v146, -1e+09
      %v148 = vsel %vm121, %v147, -inf
      %149 = vmax.xlane.f32.xlu0 %v148
      %v150 = vpop.xlane.xlu0 %149
      %v151 = vsub.f32 %v147, %v150
      %v152 = vmul.f32 %v151, 1.442695
      %v153 = vpow.pop %v152
      %v154 = vsel %vm121, %v153, 0.0
      %155 = vadd.xlane.f32.xlu0 %v154
      %v156 = vpop.xlane.xlu0 %155
      %v157 = vrcp.pop %v156
      %v158 = vmul.f32 %v153, %v157
      %159 = vrot.lane.b32.xlu0 %v112, 64
      %v160 = vpop.permute.xlu0 %159
      %v163 = vsel %vm121, %v158, 0
      %165 = vmatpush.msra.mxu0 0.0
      %166 = vmatpush.msra.mxu0 0.0
      %167 = vmatpush.msra.mxu0 0.0
      %168 = vmatpush.msra.mxu0 0.0
      %169 = vmatpush.msra.mxu0 0.0
      %170 = vmatpush.msra.mxu0 0.0
      %171 = vmatpush.msra.mxu0 0.0
      %172 = vmatpush.msra.mxu0 0.0
      %173 = vmatpush.msra.mxu0 0.0
      %174 = vmatpush.msra.mxu0 0.0
      %175 = vmatpush.msra.mxu0 0.0
      %176 = vmatpush.msra.mxu0 0.0
      %177 = vmatpush.msra.mxu0 0.0
      %178 = vmatpush.msra.mxu0 0.0
      %179 = vmatpush.msra.mxu0 0.0
      %180 = vmatpush.msra.mxu0 %v160
      %181 = vmatmul.f32.gmra.mxu0 %v163
      %v182 = vpop.f32.mrf.mxu0
      %v183 = vadd.f32 0.0, %v182
      %184 = vdwg.mxu0
      %185 = vrot.lane.b32.xlu0 %v112, 120
      %v186 = vpop.permute.xlu0 %185
      %187 = vrot.lane.b32.xlu0 %v112, 88
      %v188 = vpop.permute.xlu0 %187
      %v189 = vsel %vm121, %v186, 0
      %v191 = vsel %vm121, %v188, 0
      %193 = vmatpush.xpose.msra.mxu0 0.0
      %194 = vmatpush.xpose.msra.mxu0 0.0
      %195 = vmatpush.xpose.msra.mxu0 0.0
      %196 = vmatpush.xpose.msra.mxu0 0.0
      %197 = vmatpush.xpose.msra.mxu0 0.0
      %198 = vmatpush.xpose.msra.mxu0 0.0
      %199 = vmatpush.xpose.msra.mxu0 0.0
      %200 = vmatpush.xpose.msra.mxu0 0.0
      %201 = vmatpush.xpose.msra.mxu0 0.0
      %202 = vmatpush.xpose.msra.mxu0 0.0
      %203 = vmatpush.xpose.msra.mxu0 0.0
      %204 = vmatpush.xpose.msra.mxu0 0.0
      %205 = vmatpush.xpose.msra.mxu0 0.0
      %206 = vmatpush.xpose.msra.mxu0 0.0
      %207 = vmatpush.xpose.msra.mxu0 0.0
      %208 = vmatpush.xpose.msra.mxu0 %v191
      %209 = vmatmul.f32.gmra.mxu0 %v189
      %v210 = vpop.f32.mrf.mxu0
      %v211 = vadd.f32 0.0, %v210
      %212 = vdwg.mxu0
      %v213 = vmul.f32 %v211, 0.35355338
      %v214 = vsel %vm117, %v213, -1e+09
      %v215 = vsel %vm121, %v214, -inf
      %216 = vmax.xlane.f32.xlu0 %v215
      %v217 = vpop.xlane.xlu0 %216
      %v218 = vsub.f32 %v214, %v217
      %v219 = vmul.f32 %v218, 1.442695
      %v220 = vpow.pop %v219
      %v221 = vsel %vm121, %v220, 0.0
      %222 = vadd.xlane.f32.xlu0 %v221
      %v223 = vpop.xlane.xlu0 %222
      %v224 = vrcp.pop %v223
      %v225 = vmul.f32 %v220, %v224
      %226 = vrot.lane.b32.xlu0 %v112, 56
      %v227 = vpop.permute.xlu0 %226
      %v230 = vsel %vm121, %v225, 0
      %232 = vmatpush.msra.mxu0 0.0
      %233 = vmatpush.msra.mxu0 0.0
      %234 = vmatpush.msra.mxu0 0.0
      %235 = vmatpush.msra.mxu0 0.0
      %236 = vmatpush.msra.mxu0 0.0
      %237 = vmatpush.msra.mxu0 0.0
      %238 = vmatpush.msra.mxu0 0.0
      %239 = vmatpush.msra.mxu0 0.0
      %240 = vmatpush.msra.mxu0 0.0
      %241 = vmatpush.msra.mxu0 0.0
      %242 = vmatpush.msra.mxu0 0.0
      %243 = vmatpush.msra.mxu0 0.0
      %244 = vmatpush.msra.mxu0 0.0
      %245 = vmatpush.msra.mxu0 0.0
      %246 = vmatpush.msra.mxu0 0.0
      %247 = vmatpush.msra.mxu0 %v227
      %248 = vmatmul.f32.gmra.mxu0 %v230
      %v249 = vpop.f32.mrf.mxu0
      %v250 = vadd.f32 0.0, %v249
      %251 = vdwg.mxu0
      %252 = vrot.lane.b32.xlu0 %v112, 112
      %v253 = vpop.permute.xlu0 %252
      %254 = vrot.lane.b32.xlu0 %v112, 80
      %v255 = vpop.permute.xlu0 %254
      %v256 = vsel %vm121, %v253, 0
      %v258 = vsel %vm121, %v255, 0
      %260 = vmatpush.xpose.msra.mxu0 0.0
      %261 = vmatpush.xpose.msra.mxu0 0.0
      %262 = vmatpush.xpose.msra.mxu0 0.0
      %263 = vmatpush.xpose.msra.mxu0 0.0
      %264 = vmatpush.xpose.msra.mxu0 0.0
      %265 = vmatpush.xpose.msra.mxu0 0.0
      %266 = vmatpush.xpose.msra.mxu0 0.0
      %267 = vmatpush.xpose.msra.mxu0 0.0
      %268 = vmatpush.xpose.msra.mxu0 0.0
      %269 = vmatpush.xpose.msra.mxu0 0.0
      %270 = vmatpush.xpose.msra.mxu0 0.0
      %271 = vmatpush.xpose.msra.mxu0 0.0
      %272 = vmatpush.xpose.msra.mxu0 0.0
      %273 = vmatpush.xpose.msra.mxu0 0.0
      %274 = vmatpush.xpose.msra.mxu0 0.0
      %275 = vmatpush.xpose.msra.mxu0 %v258
      %276 = vmatmul.f32.gmra.mxu0 %v256
      %v277 = vpop.f32.mrf.mxu0
      %v278 = vadd.f32 0.0, %v277
      %279 = vdwg.mxu0
      %v280 = vmul.f32 %v278, 0.35355338
      %v281 = vsel %vm117, %v280, -1e+09
      %v282 = vsel %vm121, %v281, -inf
      %283 = vmax.xlane.f32.xlu0 %v282
      %v284 = vpop.xlane.xlu0 %283
      %v285 = vsub.f32 %v281, %v284
      %v286 = vmul.f32 %v285, 1.442695
      %v287 = vpow.pop %v286
      %v288 = vsel %vm121, %v287, 0.0
      %289 = vadd.xlane.f32.xlu0 %v288
      %v290 = vpop.xlane.xlu0 %289
      %v291 = vrcp.pop %v290
      %v292 = vmul.f32 %v287, %v291
      %293 = vrot.lane.b32.xlu0 %v112, 48
      %v294 = vpop.permute.xlu0 %293
      %v297 = vsel %vm121, %v292, 0
      %299 = vmatpush.msra.mxu0 0.0
      %300 = vmatpush.msra.mxu0 0.0
      %301 = vmatpush.msra.mxu0 0.0
      %302 = vmatpush.msra.mxu0 0.0
      %303 = vmatpush.msra.mxu0 0.0
      %304 = vmatpush.msra.mxu0 0.0
      %305 = vmatpush.msra.mxu0 0.0
      %306 = vmatpush.msra.mxu0 0.0
      %307 = vmatpush.msra.mxu0 0.0
      %308 = vmatpush.msra.mxu0 0.0
      %309 = vmatpush.msra.mxu0 0.0
      %310 = vmatpush.msra.mxu0 0.0
      %311 = vmatpush.msra.mxu0 0.0
      %312 = vmatpush.msra.mxu0 0.0
      %313 = vmatpush.msra.mxu0 0.0
      %314 = vmatpush.msra.mxu0 %v294
      %315 = vmatmul.f32.gmra.mxu0 %v297
      %v316 = vpop.f32.mrf.mxu0
      %v317 = vadd.f32 0.0, %v316
      %318 = vdwg.mxu0
      %319 = vrot.lane.b32.xlu0 %v112, 104
      %v320 = vpop.permute.xlu0 %319
      %321 = vrot.lane.b32.xlu0 %v112, 72
      %v322 = vpop.permute.xlu0 %321
      %v323 = vsel %vm121, %v320, 0
      %v325 = vsel %vm121, %v322, 0
      %327 = vmatpush.xpose.msra.mxu0 0.0
      %328 = vmatpush.xpose.msra.mxu0 0.0
      %329 = vmatpush.xpose.msra.mxu0 0.0
      %330 = vmatpush.xpose.msra.mxu0 0.0
      %331 = vmatpush.xpose.msra.mxu0 0.0
      %332 = vmatpush.xpose.msra.mxu0 0.0
      %333 = vmatpush.xpose.msra.mxu0 0.0
      %334 = vmatpush.xpose.msra.mxu0 0.0
      %335 = vmatpush.xpose.msra.mxu0 0.0
      %336 = vmatpush.xpose.msra.mxu0 0.0
      %337 = vmatpush.xpose.msra.mxu0 0.0
      %338 = vmatpush.xpose.msra.mxu0 0.0
      %339 = vmatpush.xpose.msra.mxu0 0.0
      %340 = vmatpush.xpose.msra.mxu0 0.0
      %341 = vmatpush.xpose.msra.mxu0 0.0
      %342 = vmatpush.xpose.msra.mxu0 %v325
      %343 = vmatmul.f32.gmra.mxu0 %v323
      %v344 = vpop.f32.mrf.mxu0
      %v345 = vadd.f32 0.0, %v344
      %346 = vdwg.mxu0
      %v347 = vmul.f32 %v345, 0.35355338
      %v348 = vsel %vm117, %v347, -1e+09
      %v349 = vsel %vm121, %v348, -inf
      %350 = vmax.xlane.f32.xlu0 %v349
      %v351 = vpop.xlane.xlu0 %350
      %v352 = vsub.f32 %v348, %v351
      %v353 = vmul.f32 %v352, 1.442695
      %v354 = vpow.pop %v353
      %v355 = vsel %vm121, %v354, 0.0
      %356 = vadd.xlane.f32.xlu0 %v355
      %v357 = vpop.xlane.xlu0 %356
      %v358 = vrcp.pop %v357
      %v359 = vmul.f32 %v354, %v358
      %360 = vrot.lane.b32.xlu0 %v112, 40
      %v361 = vpop.permute.xlu0 %360
      %v364 = vsel %vm121, %v359, 0
      %366 = vmatpush.msra.mxu0 0.0
      %367 = vmatpush.msra.mxu0 0.0
      %368 = vmatpush.msra.mxu0 0.0
      %369 = vmatpush.msra.mxu0 0.0
      %370 = vmatpush.msra.mxu0 0.0
      %371 = vmatpush.msra.mxu0 0.0
      %372 = vmatpush.msra.mxu0 0.0
      %373 = vmatpush.msra.mxu0 0.0
      %374 = vmatpush.msra.mxu0 0.0
      %375 = vmatpush.msra.mxu0 0.0
      %376 = vmatpush.msra.mxu0 0.0
      %377 = vmatpush.msra.mxu0 0.0
      %378 = vmatpush.msra.mxu0 0.0
      %379 = vmatpush.msra.mxu0 0.0
      %380 = vmatpush.msra.mxu0 0.0
      %381 = vmatpush.msra.mxu0 %v361
      %382 = vmatmul.f32.gmra.mxu0 %v364
      %v383 = vpop.f32.mrf.mxu0
      %v384 = vadd.f32 0.0, %v383
      %385 = vdwg.mxu0
      %387 = vrot.lane.b32.xlu0 %v250, 8
      %v388 = vpop.permute.xlu0 %387
      %391 = vrot.lane.b32.xlu0 %v317, 16
      %v392 = vpop.permute.xlu0 %391
      %395 = vrot.lane.b32.xlu0 %v384, 24
      %v396 = vpop.permute.xlu0 %395
      %v398 = vsel %vm121, %v183, %v388
      %vm399 = vcmask 130048
      %v400 = vsel %vm399, %v398, %v392
      %vm401 = vcmask 195584
      %v402 = vsel %vm401, %v400, %v396
      %vm403 = vcmask 261120
      %404 = vst.msk [vmem:[%s111] sm:$0xff] %vm403, %v402
      %p405 = scmp.lt.s32.totalorder %s12, 1
      %s406 = scalar_select %p405, %s12, 1
      %s407 = smul.addr %s406, 8
      %s408 = scalar_lea.vmem %s1, %s407
      // Predicated region
      $region25: #{_lambda_.17} parent=23 // pred_check
        %p409 = pneg %p56
      $region26: #{_lambda_.17} parent=23 // pred_check_branch
        %411 = sbr.rel (%p409) target = $region28
      $region27: #{_lambda_.17} parent=23 // pred_region
        _
      $region28: #{_lambda_.17} parent=23 // pred_fallthru
        _
    $region24: #{_lambda_.17} parent=5 // pred_fallthru
      _
    %p412 = scmp.le.s32.totalorder 2, %s7
    // Predicated region
    $region29: #{_lambda_.17} parent=5 // pred_check
      %p413 = pneg %p412
    $region30: #{_lambda_.17} parent=5 // pred_check_branch
      %415 = sbr.rel (%p413) target = $region32
    $region31: #{_lambda_.17} parent=5 // pred_region
      %s416 = ssub.s32 %s7, 2
      // Predicated region
      $region33: #{_lambda_.17} parent=31 // pred_check
        %p417 = pneg %p62
      $region34: #{_lambda_.17} parent=31 // pred_check_branch
        %419 = sbr.rel (%p417) target = $region36
      $region35: #{_lambda_.17} parent=31 // pred_region
        %p420 = scmp.lt.s32.totalorder %s13, 1
        %s421 = scalar_select %p420, %s13, 1
        %s422 = smul.addr %s421, 8
        %s423 = scalar_lea.vmem %s1, %s422
      $region36: #{_lambda_.17} parent=31 // pred_fallthru
        _
    $region32: #{_lambda_.17} parent=5 // pred_fallthru
      _
  $region6: #{_lambda_.17} parent=0 // loop_footer
    %s11 = sadd.s32 1, %s7
  $region7: #{_lambda_.17} parent=0 // loop_footer_branch
    %6 = sbr.rel target = $region3
  $region8: #{_lambda_.17} parent=0 // loop_exit
    _

// kernel: _lambda_.19
$region0: #{_lambda_.19}
  #allocation0 [shape = 'u32[]', space=smem, size = 0x4, offset = 0x4, fixed_abs, tag = 'smem constant byte address 0x4 - core index']
  #allocation1 [shape = 'u32[72,128]{1,0:T(1,128)}', space=vmem, size = 0x9000, scoped, tag = 'internal scratch']
  %s0 = inlined_call_operand.hbm [shape: f32[16,32], index: 0, kind: input, shape index: {}]
  %s1 = inlined_call_operand.hbm [shape: f32[32,64], index: 1, kind: input, shape index: {}]
  %s2 = inlined_call_operand.vmem [shape: f32[16,64], index: 2, kind: output, shape index: {}]
  %s3 = sld [smem:[#allocation0]]
  $region26: #{_lambda_.19} parent=0
    _
  %s5 = ssub.s32 1, %s3
  %s6 = scalar_select 0, %s5, %s3
  $region1: #{_lambda_.19} parent=0
    #allocation2 [shape = 'u8[8192]{0}', space=vmem, size = 0x2000, scoped, tag = 'input window, operand 0, single buffered']
    #allocation3 [shape = 's32[1]{0}', space=sflag, size = 0x4, scoped, tag = 'scoped memory for _lambda_.19']
    #allocation4 [shape = 'u8[16384]{0}', space=vmem, size = 0x4000, scoped, tag = 'input window, operand 1, single buffered']
    #allocation5 [shape = 's32[1]{0}', space=sflag, size = 0x4, scoped, tag = 'scoped memory for _lambda_.19']
    %7 = vsyncpa [#allocation3], 0
    %8 = vsyncpa [#allocation5], 0
    // Predicated region
    $region2: #{_lambda_.19} parent=1 // pred_check
      _
    $region3: #{_lambda_.19} parent=1 // pred_check_branch
      %10 = sbr.rel (0) target = $region5
    $region4: #{_lambda_.19} parent=1 // pred_region
      %12 = vsyncadd [#allocation3], 0
      %s13 = sshll.u32 %s0, 4
      %s14 = int_to_ptr.hbm [resolvable:$true] %s13
      %s15 = sshll.u32 [#allocation2], 4
      %s16 = int_to_ptr.vmem [resolvable:$true] %s15
      %21 = dma.hbm_to_vmem [thread:$0]  %s14, 256, %s16, [#allocation3], 128, 128, 8
    $region5: #{_lambda_.19} parent=1 // pred_fallthru
      _
    // Predicated region
    $region6: #{_lambda_.19} parent=1 // pred_check
      _
    $region7: #{_lambda_.19} parent=1 // pred_check_branch
      %23 = sbr.rel (0) target = $region9
    $region8: #{_lambda_.19} parent=1 // pred_region
      %25 = vsyncadd [#allocation5], 0
      %s26 = sshll.u32 %s1, 4
      %s27 = int_to_ptr.hbm [resolvable:$true] %s26
      %s28 = sshll.u32 [#allocation4], 4
      %s29 = int_to_ptr.vmem [resolvable:$true] %s28
      %34 = dma.hbm_to_vmem [thread:$0]  %s27, 512, %s29, [#allocation5], 128, 128, 8
    $region9: #{_lambda_.19} parent=1 // pred_fallthru
      _
    // Predicated region
    $region10: #{_lambda_.19} parent=1 // pred_check
      _
    $region11: #{_lambda_.19} parent=1 // pred_check_branch
      %36 = sbr.rel (0) target = $region13
    $region12: #{_lambda_.19} parent=1 // pred_region
      %38 = dma.done [#allocation3], 256
    $region13: #{_lambda_.19} parent=1 // pred_fallthru
      _
    // Predicated region
    $region14: #{_lambda_.19} parent=1 // pred_check
      _
    $region15: #{_lambda_.19} parent=1 // pred_check_branch
      %40 = sbr.rel (0) target = $region17
    $region16: #{_lambda_.19} parent=1 // pred_region
      %42 = dma.done [#allocation5], 512
    $region17: #{_lambda_.19} parent=1 // pred_fallthru
      _
    %v43 = vld [vmem:[#allocation2] sm:$0xff]
    %v44 = vld [vmem:[#allocation2 + $0x8] sm:$0xff]
    %v45 = vld [vmem:[#allocation4] sm:$0xff]
    %v46 = vld [vmem:[#allocation4 + $0x8] sm:$0xff]
    %v47 = vld [vmem:[#allocation4 + $0x10] sm:$0xff]
    %v48 = vld [vmem:[#allocation4 + $0x18] sm:$0xff]
    %vm49 = vcmask 261120
    %v51 = vsel %vm49, %v43, 0
    %v54 = vsel %vm49, %v44, 0
    %56 = vmatpush.msra.mxu0 0.0
    %57 = vmatpush.msra.mxu0 0.0
    %58 = vmatpush.msra.mxu0 0.0
    %59 = vmatpush.msra.mxu0 0.0
    %60 = vmatpush.msra.mxu0 0.0
    %61 = vmatpush.msra.mxu0 0.0
    %62 = vmatpush.msra.mxu0 0.0
    %63 = vmatpush.msra.mxu0 0.0
    %64 = vmatpush.msra.mxu0 0.0
    %65 = vmatpush.msra.mxu0 0.0
    %66 = vmatpush.msra.mxu0 0.0
    %67 = vmatpush.msra.mxu0 0.0
    %68 = vmatpush.msra.mxu0 %v48
    %69 = vmatpush.msra.mxu0 %v47
    %70 = vmatpush.msra.mxu0 %v46
    %71 = vmatpush.msra.mxu0 %v45
    %72 = vmatmul.f32.gmra.mxu0 %v51
    %v73 = vpop.f32.mrf.mxu0
    %v74 = vadd.f32 0.0, %v73
    %75 = vmatmul.f32.gmra.mxu0 %v54
    %v76 = vpop.f32.mrf.mxu0
    %v77 = vadd.f32 0.0, %v76
    %78 = vdwg.mxu0
    %vm79 = vcmask 523264
    %80 = vst.msk [vmem:[%s2] sm:$0xff] %vm79, %v74
    %81 = vst.msk [vmem:[%s2 + $0x8] sm:$0xff] %vm79, %v77
    // Predicated region
    $region18: #{_lambda_.19} parent=1 // pred_check
      _
    $region19: #{_lambda_.19} parent=1 // pred_check_branch
      %83 = sbr.rel (0) target = $region21
    $region20: #{_lambda_.19} parent=1 // pred_region
      _
    $region21: #{_lambda_.19} parent=1 // pred_fallthru
      _
    // Predicated region
    $region22: #{_lambda_.19} parent=1 // pred_check
      _
    $region23: #{_lambda_.19} parent=1 // pred_check_branch
      %85 = sbr.rel (0) target = $region25
    $region24: #{_lambda_.19} parent=1 // pred_region
      _
    $region25: #{_lambda_.19} parent=1 // pred_fallthru
      _
    %86 = vsyncpa [#allocation3], 1
    %87 = vsyncpa [#allocation5], 1

// kernel: _lambda_.21
$region0: #{_lambda_.21}
  #allocation0 [shape = 'u32[]', space=smem, size = 0x4, offset = 0x4, fixed_abs, tag = 'smem constant byte address 0x4 - core index']
  #allocation1 [shape = 'u32[72,128]{1,0:T(1,128)}', space=vmem, size = 0x9000, scoped, tag = 'internal scratch']
  %s0 = inlined_call_operand.vmem [shape: f32[2,8,64], index: 0, kind: input, shape index: {}]
  %s1 = inlined_call_operand.vmem [shape: f32[2,8,32], index: 1, kind: input, shape index: {}]
  %s2 = inlined_call_operand.vmem [shape: f32[2,8,32], index: 2, kind: output, shape index: {}]
  %s3 = sld [smem:[#allocation0]]
  $region41: #{_lambda_.21} parent=0
    _
  %s5 = ssub.s32 1, %s3
  %s6 = scalar_select 0, %s5, %s3
  loop: start=0, step=1, limit=4
  $region2: #{_lambda_.21} parent=0 // loop_pre_header
    _
  $region3: #{_lambda_.21} parent=0 // loop_header
    %s8 = sphi 0, %s12
    %p9 = scmp.ge.s32.totalorder %s8, 4
    %s18 = sphi 0, %s20
    %s21 = sphi 0, %s18
    %s22 = sphi 0, %s21
    %s38 = sphi 0, %s22
    %s44 = sphi 0, %s46
    %s47 = sphi 0, %s44
    %s48 = sphi 0, %s47
    %s64 = sphi 0, %s48
    %s70 = sphi 0, %s72
    %s73 = sphi 0, %s70
    %s74 = sphi 0, %s73
    %s90 = sphi 0, %s74
  $region4: #{_lambda_.21} parent=0 // loop_header_branch
    %11 = sbr.rel (%p9) target = $region8
  $region5: #{_lambda_.21} parent=0 // loop_body
    %s13 = ssub.s32 %s8, 1
    %s14 = ssub.s32 %s8, 2
    %s15 = sadd.s32 %s8, 1
    %s16 = ssub.s32 %s8, %s15
    %p17 = scmp.eq.s32.totalorder %s16, 0
    %s19 = sadd.s32 %s18, 1
    %s20 = scalar_select %p17, %s18, %s19
    %p23 = pneg %p17
    %p24 = scmp.eq.s32.totalorder %s8, 1
    %p25 = por %p23, %p24
    %p26 = scmp.ne.s32.totalorder %s18, %s21
    %p27 = scmp.eq.s32.totalorder %s8, 0
    %p28 = por %p26, %p27
    %p29 = scmp.ne.s32.totalorder %s18, %s21
    %p30 = scmp.eq.s32.totalorder %s13, 1
    %p31 = por %p29, %p30
    %p32 = scmp.ne.s32.totalorder %s21, %s22
    %p33 = scmp.eq.s32.totalorder %s13, 0
    %p34 = por %p32, %p33
    %p35 = scmp.ne.s32.totalorder %s21, %s22
    %p36 = scmp.eq.s32.totalorder %s14, 1
    %p37 = por %p35, %p36
    %p39 = scmp.ne.s32.totalorder %s22, %s38
    %p40 = scmp.eq.s32.totalorder %s14, 0
    %p41 = por %p39, %p40
    %s42 = ssub.s32 %s8, %s15
    %p43 = scmp.eq.s32.totalorder %s42, 0
    %s45 = sadd.s32 %s44, 1
    %s46 = scalar_select %p43, %s44, %s45
    %p49 = pneg %p43
    %p50 = scmp.eq.s32.totalorder %s8, 1
    %p51 = por %p49, %p50
    %p52 = scmp.ne.s32.totalorder %s44, %s47
    %p53 = scmp.eq.s32.totalorder %s8, 0
    %p54 = por %p52, %p53
    %p55 = scmp.ne.s32.totalorder %s44, %s47
    %p56 = scmp.eq.s32.totalorder %s13, 1
    %p57 = por %p55, %p56
    %p58 = scmp.ne.s32.totalorder %s47, %s48
    %p59 = scmp.eq.s32.totalorder %s13, 0
    %p60 = por %p58, %p59
    %p61 = scmp.ne.s32.totalorder %s47, %s48
    %p62 = scmp.eq.s32.totalorder %s14, 1
    %p63 = por %p61, %p62
    %p65 = scmp.ne.s32.totalorder %s48, %s64
    %p66 = scmp.eq.s32.totalorder %s14, 0
    %p67 = por %p65, %p66
    %s68 = ssub.s32 %s8, %s15
    %p69 = scmp.eq.s32.totalorder %s68, 0
    %s71 = sadd.s32 %s70, 1
    %s72 = scalar_select %p69, %s70, %s71
    %p75 = pneg %p69
    %p76 = scmp.eq.s32.totalorder %s8, 1
    %p77 = por %p75, %p76
    %p78 = scmp.ne.s32.totalorder %s70, %s73
    %p79 = scmp.eq.s32.totalorder %s8, 0
    %p80 = por %p78, %p79
    %p81 = scmp.ne.s32.totalorder %s70, %s73
    %p82 = scmp.eq.s32.totalorder %s13, 1
    %p83 = por %p81, %p82
    %p84 = scmp.ne.s32.totalorder %s73, %s74
    %p85 = scmp.eq.s32.totalorder %s13, 0
    %p86 = por %p84, %p85
    %p87 = scmp.ne.s32.totalorder %s73, %s74
    %p88 = scmp.eq.s32.totalorder %s14, 1
    %p89 = por %p87, %p88
    %p91 = scmp.ne.s32.totalorder %s74, %s90
    %p92 = scmp.eq.s32.totalorder %s14, 0
    %p93 = por %p91, %p92
    %p94 = scmp.le.s32.totalorder 1, %s8
    %p95 = scmp.lt.s32.totalorder %s8, 3
    %p96 = pnand %p94, %p95
    %p97 = pneg %p96
    // Predicated region
    $region9: #{_lambda_.21} parent=5 // pred_check
      _
    $region10: #{_lambda_.21} parent=5 // pred_check_branch
      %99 = sbr.rel (%p96) target = $region12
    $region11: #{_lambda_.21} parent=5 // pred_region
      %s100 = ssub.s32 %s8, 1
    $region12: #{_lambda_.21} parent=5 // pred_fallthru
      _
    %p101 = scmp.lt.s32.totalorder %s8, 2
    // Predicated region
    $region13: #{_lambda_.21} parent=5 // pred_check
      %p102 = pneg %p101
    $region14: #{_lambda_.21} parent=5 // pred_check_branch
      %104 = sbr.rel (%p102) target = $region16
    $region15: #{_lambda_.21} parent=5 // pred_region
      // Predicated region
      $region17: #{_lambda_.21} parent=15 // pred_check
        %p105 = pneg %p28
      $region18: #{_lambda_.21} parent=15 // pred_check_branch
        %107 = sbr.rel (%p105) target = $region20
      $region19: #{_lambda_.21} parent=15 // pred_region
        %p108 = scmp.lt.s32.totalorder %s8, 1
        %s109 = scalar_select %p108, %s8, 1
        %s110 = smul.addr %s109, 8
        %s111 = scalar_lea.vmem %s0, %s110
      $region20: #{_lambda_.21} parent=15 // pred_fallthru
        _
      // Predicated region
      $region21: #{_lambda_.21} parent=15 // pred_check
        %p112 = pneg %p54
      $region22: #{_lambda_.21} parent=15 // pred_check_branch
        %114 = sbr.rel (%p112) target = $region24
      $region23: #{_lambda_.21} parent=15 // pred_region
        %p115 = scmp.lt.s32.totalorder %s8, 1
        %s116 = scalar_select %p115, %s8, 1
        %s117 = smul.addr %s116, 8
        %s118 = scalar_lea.vmem %s1, %s117
      $region24: #{_lambda_.21} parent=15 // pred_fallthru
        _
    $region16: #{_lambda_.21} parent=5 // pred_fallthru
      _
    %p119 = scmp.le.s32.totalorder 1, %s8
    %p120 = scmp.lt.s32.totalorder %s8, 3
    %p121 = pnand %p119, %p120
    %p122 = pneg %p121
    // Predicated region
    $region25: #{_lambda_.21} parent=5 // pred_check
      _
    $region26: #{_lambda_.21} parent=5 // pred_check_branch
      %124 = sbr.rel (%p121) target = $region28
    $region27: #{_lambda_.21} parent=5 // pred_region
      %s125 = ssub.s32 %s8, 1
      %p126 = scmp.lt.s32.totalorder %s13, 1
      %s127 = scalar_select %p126, %s13, 1
      %s128 = smul.addr %s127, 8
      %s129 = scalar_lea.vmem %s0, %s128
      %p130 = pneg %p34
      %p131 = pneg %p31
      %p132 = scmp.lt.s32.totalorder %s13, 1
      %s133 = scalar_select %p132, %s13, 1
      %s134 = smul.addr %s133, 8
      %s135 = scalar_lea.vmem %s1, %s134
      %p136 = pneg %p60
      %p137 = pneg %p57
      %p138 = pneg %p86
      %p139 = pneg %p83
      %p140 = scmp.lt.s32.totalorder %s13, 1
      %s141 = scalar_select %p140, %s13, 1
      %s142 = smul.addr %s141, 8
      %s143 = scalar_lea.vmem %s2, %s142
      %p144 = scmp.lt.s32.totalorder %s13, 1
      %s145 = scalar_select %p144, %s13, 1
      %s146 = smul.addr %s145, 8
      %s147 = scalar_lea.vmem %s0, %s146
      %p148 = scmp.lt.s32.totalorder %s13, 1
      %s149 = scalar_select %p148, %s13, 1
      %s150 = smul.addr %s149, 8
      %s151 = scalar_lea.vmem %s1, %s150
      %p152 = scmp.lt.s32.totalorder %s13, 1
      %s153 = scalar_select %p152, %s13, 1
      %s154 = smul.addr %s153, 8
      %s155 = scalar_lea.vmem %s2, %s154
      %v156 = vld [vmem:[%s147] sm:$0xff]
      %v157 = vld [vmem:[%s151] sm:$0xff]
      %159 = vrot.lane.b32.xlu0 %v156, 96
      %v160 = vpop.permute.xlu0 %159
      %vm161 = vcmask 64512
      %v162 = vsel %vm161, %v156, 0
      %v164 = vsel %vm161, %v160, 0
      %166 = vmatpush.xpose.msra.mxu0 0.0
      %167 = vmatpush.xpose.msra.mxu0 0.0
      %168 = vmatpush.xpose.msra.mxu0 0.0
      %169 = vmatpush.xpose.msra.mxu0 0.0
      %170 = vmatpush.xpose.msra.mxu0 0.0
      %171 = vmatpush.xpose.msra.mxu0 0.0
      %172 = vmatpush.xpose.msra.mxu0 0.0
      %173 = vmatpush.xpose.msra.mxu0 0.0
      %174 = vmatpush.xpose.msra.mxu0 0.0
      %175 = vmatpush.xpose.msra.mxu0 0.0
      %176 = vmatpush.xpose.msra.mxu0 0.0
      %177 = vmatpush.xpose.msra.mxu0 0.0
      %178 = vmatpush.xpose.msra.mxu0 0.0
      %179 = vmatpush.xpose.msra.mxu0 0.0
      %180 = vmatpush.xpose.msra.mxu0 0.0
      %181 = vmatpush.xpose.msra.mxu0 %v164
      %182 = vmatmul.f32.gmra.mxu0 %v162
      %v183 = vpop.f32.mrf.mxu0
      %v184 = vadd.f32 0.0, %v183
      %185 = vdwg.mxu0
      %v186 = vmul.f32 %v184, 0.35355338
      %v187 = vsel %vm161, %v186, -inf
      %188 = vmax.xlane.f32.xlu0 %v187
      %v189 = vpop.xlane.xlu0 %188
      %v190 = vsub.f32 %v186, %v189
      %v191 = vmul.f32 %v190, 1.442695
      %v192 = vpow.pop %v191
      %v193 = vsel %vm161, %v192, 0.0
      %194 = vadd.xlane.f32.xlu0 %v193
      %v195 = vpop.xlane.xlu0 %194
      %v196 = vrcp.pop %v195
      %v197 = vmul.f32 %v192, %v196
      %v199 = vsel %vm161, %v197, 0
      %201 = vmatpush.msra.mxu0 0.0
      %202 = vmatpush.msra.mxu0 0.0
      %203 = vmatpush.msra.mxu0 0.0
      %204 = vmatpush.msra.mxu0 0.0
      %205 = vmatpush.msra.mxu0 0.0
      %206 = vmatpush.msra.mxu0 0.0
      %207 = vmatpush.msra.mxu0 0.0
      %208 = vmatpush.msra.mxu0 0.0
      %209 = vmatpush.msra.mxu0 0.0
      %210 = vmatpush.msra.mxu0 0.0
      %211 = vmatpush.msra.mxu0 0.0
      %212 = vmatpush.msra.mxu0 0.0
      %213 = vmatpush.msra.mxu0 0.0
      %214 = vmatpush.msra.mxu0 0.0
      %215 = vmatpush.msra.mxu0 0.0
      %216 = vmatpush.msra.mxu0 %v157
      %217 = vmatmul.f32.gmra.mxu0 %v199
      %v218 = vpop.f32.mrf.mxu0
      %v219 = vadd.f32 0.0, %v218
      %220 = vdwg.mxu0
      %221 = vrot.lane.b32.xlu0 %v156, 120
      %v222 = vpop.permute.xlu0 %221
      %223 = vrot.lane.b32.xlu0 %v156, 88
      %v224 = vpop.permute.xlu0 %223
      %v225 = vsel %vm161, %v222, 0
      %v227 = vsel %vm161, %v224, 0
      %229 = vmatpush.xpose.msra.mxu0 0.0
      %230 = vmatpush.xpose.msra.mxu0 0.0
      %231 = vmatpush.xpose.msra.mxu0 0.0
      %232 = vmatpush.xpose.msra.mxu0 0.0
      %233 = vmatpush.xpose.msra.mxu0 0.0
      %234 = vmatpush.xpose.msra.mxu0 0.0
      %235 = vmatpush.xpose.msra.mxu0 0.0
      %236 = vmatpush.xpose.msra.mxu0 0.0
      %237 = vmatpush.xpose.msra.mxu0 0.0
      %238 = vmatpush.xpose.msra.mxu0 0.0
      %239 = vmatpush.xpose.msra.mxu0 0.0
      %240 = vmatpush.xpose.msra.mxu0 0.0
      %241 = vmatpush.xpose.msra.mxu0 0.0
      %242 = vmatpush.xpose.msra.mxu0 0.0
      %243 = vmatpush.xpose.msra.mxu0 0.0
      %244 = vmatpush.xpose.msra.mxu0 %v227
      %245 = vmatmul.f32.gmra.mxu0 %v225
      %v246 = vpop.f32.mrf.mxu0
      %v247 = vadd.f32 0.0, %v246
      %248 = vdwg.mxu0
      %v249 = vmul.f32 %v247, 0.35355338
      %v250 = vsel %vm161, %v249, -inf
      %251 = vmax.xlane.f32.xlu0 %v250
      %v252 = vpop.xlane.xlu0 %251
      %v253 = vsub.f32 %v249, %v252
      %v254 = vmul.f32 %v253, 1.442695
      %v255 = vpow.pop %v254
      %v256 = vsel %vm161, %v255, 0.0
      %257 = vadd.xlane.f32.xlu0 %v256
      %v258 = vpop.xlane.xlu0 %257
      %v259 = vrcp.pop %v258
      %v260 = vmul.f32 %v255, %v259
      %262 = vrot.lane.b32.xlu0 %v157, 120
      %v263 = vpop.permute.xlu0 %262
      %v266 = vsel %vm161, %v260, 0
      %268 = vmatpush.msra.mxu0 0.0
      %269 = vmatpush.msra.mxu0 0.0
      %270 = vmatpush.msra.mxu0 0.0
      %271 = vmatpush.msra.mxu0 0.0
      %272 = vmatpush.msra.mxu0 0.0
      %273 = vmatpush.msra.mxu0 0.0
      %274 = vmatpush.msra.mxu0 0.0
      %275 = vmatpush.msra.mxu0 0.0
      %276 = vmatpush.msra.mxu0 0.0
      %277 = vmatpush.msra.mxu0 0.0
      %278 = vmatpush.msra.mxu0 0.0
      %279 = vmatpush.msra.mxu0 0.0
      %280 = vmatpush.msra.mxu0 0.0
      %281 = vmatpush.msra.mxu0 0.0
      %282 = vmatpush.msra.mxu0 0.0
      %283 = vmatpush.msra.mxu0 %v263
      %284 = vmatmul.f32.gmra.mxu0 %v266
      %v285 = vpop.f32.mrf.mxu0
      %v286 = vadd.f32 0.0, %v285
      %287 = vdwg.mxu0
      %288 = vrot.lane.b32.xlu0 %v156, 112
      %v289 = vpop.permute.xlu0 %288
      %290 = vrot.lane.b32.xlu0 %v156, 80
      %v291 = vpop.permute.xlu0 %290
      %v292 = vsel %vm161, %v289, 0
      %v294 = vsel %vm161, %v291, 0
      %296 = vmatpush.xpose.msra.mxu0 0.0
      %297 = vmatpush.xpose.msra.mxu0 0.0
      %298 = vmatpush.xpose.msra.mxu0 0.0
      %299 = vmatpush.xpose.msra.mxu0 0.0
      %300 = vmatpush.xpose.msra.mxu0 0.0
      %301 = vmatpush.xpose.msra.mxu0 0.0
      %302 = vmatpush.xpose.msra.mxu0 0.0
      %303 = vmatpush.xpose.msra.mxu0 0.0
      %304 = vmatpush.xpose.msra.mxu0 0.0
      %305 = vmatpush.xpose.msra.mxu0 0.0
      %306 = vmatpush.xpose.msra.mxu0 0.0
      %307 = vmatpush.xpose.msra.mxu0 0.0
      %308 = vmatpush.xpose.msra.mxu0 0.0
      %309 = vmatpush.xpose.msra.mxu0 0.0
      %310 = vmatpush.xpose.msra.mxu0 0.0
      %311 = vmatpush.xpose.msra.mxu0 %v294
      %312 = vmatmul.f32.gmra.mxu0 %v292
      %v313 = vpop.f32.mrf.mxu0
      %v314 = vadd.f32 0.0, %v313
      %315 = vdwg.mxu0
      %v316 = vmul.f32 %v314, 0.35355338
      %v317 = vsel %vm161, %v316, -inf
      %318 = vmax.xlane.f32.xlu0 %v317
      %v319 = vpop.xlane.xlu0 %318
      %v320 = vsub.f32 %v316, %v319
      %v321 = vmul.f32 %v320, 1.442695
      %v322 = vpow.pop %v321
      %v323 = vsel %vm161, %v322, 0.0
      %324 = vadd.xlane.f32.xlu0 %v323
      %v325 = vpop.xlane.xlu0 %324
      %v326 = vrcp.pop %v325
      %v327 = vmul.f32 %v322, %v326
      %328 = vrot.lane.b32.xlu0 %v157, 112
      %v329 = vpop.permute.xlu0 %328
      %v332 = vsel %vm161, %v327, 0
      %334 = vmatpush.msra.mxu0 0.0
      %335 = vmatpush.msra.mxu0 0.0
      %336 = vmatpush.msra.mxu0 0.0
      %337 = vmatpush.msra.mxu0 0.0
      %338 = vmatpush.msra.mxu0 0.0
      %339 = vmatpush.msra.mxu0 0.0
      %340 = vmatpush.msra.mxu0 0.0
      %341 = vmatpush.msra.mxu0 0.0
      %342 = vmatpush.msra.mxu0 0.0
      %343 = vmatpush.msra.mxu0 0.0
      %344 = vmatpush.msra.mxu0 0.0
      %345 = vmatpush.msra.mxu0 0.0
      %346 = vmatpush.msra.mxu0 0.0
      %347 = vmatpush.msra.mxu0 0.0
      %348 = vmatpush.msra.mxu0 0.0
      %349 = vmatpush.msra.mxu0 %v329
      %350 = vmatmul.f32.gmra.mxu0 %v332
      %v351 = vpop.f32.mrf.mxu0
      %v352 = vadd.f32 0.0, %v351
      %353 = vdwg.mxu0
      %354 = vrot.lane.b32.xlu0 %v156, 104
      %v355 = vpop.permute.xlu0 %354
      %356 = vrot.lane.b32.xlu0 %v156, 72
      %v357 = vpop.permute.xlu0 %356
      %v358 = vsel %vm161, %v355, 0
      %v360 = vsel %vm161, %v357, 0
      %362 = vmatpush.xpose.msra.mxu0 0.0
      %363 = vmatpush.xpose.msra.mxu0 0.0
      %364 = vmatpush.xpose.msra.mxu0 0.0
      %365 = vmatpush.xpose.msra.mxu0 0.0
      %366 = vmatpush.xpose.msra.mxu0 0.0
      %367 = vmatpush.xpose.msra.mxu0 0.0
      %368 = vmatpush.xpose.msra.mxu0 0.0
      %369 = vmatpush.xpose.msra.mxu0 0.0
      %370 = vmatpush.xpose.msra.mxu0 0.0
      %371 = vmatpush.xpose.msra.mxu0 0.0
      %372 = vmatpush.xpose.msra.mxu0 0.0
      %373 = vmatpush.xpose.msra.mxu0 0.0
      %374 = vmatpush.xpose.msra.mxu0 0.0
      %375 = vmatpush.xpose.msra.mxu0 0.0
      %376 = vmatpush.xpose.msra.mxu0 0.0
      %377 = vmatpush.xpose.msra.mxu0 %v360
      %378 = vmatmul.f32.gmra.mxu0 %v358
      %v379 = vpop.f32.mrf.mxu0
      %v380 = vadd.f32 0.0, %v379
      %381 = vdwg.mxu0
      %v382 = vmul.f32 %v380, 0.35355338
      %v383 = vsel %vm161, %v382, -inf
      %384 = vmax.xlane.f32.xlu0 %v383
      %v385 = vpop.xlane.xlu0 %384
      %v386 = vsub.f32 %v382, %v385
      %v387 = vmul.f32 %v386, 1.442695
      %v388 = vpow.pop %v387
      %v389 = vsel %vm161, %v388, 0.0
      %390 = vadd.xlane.f32.xlu0 %v389
      %v391 = vpop.xlane.xlu0 %390
      %v392 = vrcp.pop %v391
      %v393 = vmul.f32 %v388, %v392
      %394 = vrot.lane.b32.xlu0 %v157, 104
      %v395 = vpop.permute.xlu0 %394
      %v398 = vsel %vm161, %v393, 0
      %400 = vmatpush.msra.mxu0 0.0
      %401 = vmatpush.msra.mxu0 0.0
      %402 = vmatpush.msra.mxu0 0.0
      %403 = vmatpush.msra.mxu0 0.0
      %404 = vmatpush.msra.mxu0 0.0
      %405 = vmatpush.msra.mxu0 0.0
      %406 = vmatpush.msra.mxu0 0.0
      %407 = vmatpush.msra.mxu0 0.0
      %408 = vmatpush.msra.mxu0 0.0
      %409 = vmatpush.msra.mxu0 0.0
      %410 = vmatpush.msra.mxu0 0.0
      %411 = vmatpush.msra.mxu0 0.0
      %412 = vmatpush.msra.mxu0 0.0
      %413 = vmatpush.msra.mxu0 0.0
      %414 = vmatpush.msra.mxu0 0.0
      %415 = vmatpush.msra.mxu0 %v395
      %416 = vmatmul.f32.gmra.mxu0 %v398
      %v417 = vpop.f32.mrf.mxu0
      %v418 = vadd.f32 0.0, %v417
      %419 = vdwg.mxu0
      %421 = vrot.lane.b32.xlu0 %v286, 8
      %v422 = vpop.permute.xlu0 %421
      %425 = vrot.lane.b32.xlu0 %v352, 16
      %v426 = vpop.permute.xlu0 %425
      %429 = vrot.lane.b32.xlu0 %v418, 24
      %v430 = vpop.permute.xlu0 %429
      %v432 = vsel %vm161, %v219, %v422
      %vm433 = vcmask 130048
      %v434 = vsel %vm433, %v432, %v426
      %vm435 = vcmask 195584
      %v436 = vsel %vm435, %v434, %v430
      %vm437 = vcmask 261120
      %438 = vst.msk [vmem:[%s155] sm:$0xff] %vm437, %v436
      %p439 = scmp.lt.s32.totalorder %s13, 1
      %s440 = scalar_select %p439, %s13, 1
      %s441 = smul.addr %s440, 8
      %s442 = scalar_lea.vmem %s2, %s441
      // Predicated region
      $region29: #{_lambda_.21} parent=27 // pred_check
        %p443 = pneg %p83
      $region30: #{_lambda_.21} parent=27 // pred_check_branch
        %445 = sbr.rel (%p443) target = $region32
      $region31: #{_lambda_.21} parent=27 // pred_region
        _
      $region32: #{_lambda_.21} parent=27 // pred_fallthru
        _
    $region28: #{_lambda_.21} parent=5 // pred_fallthru
      _
    %p446 = scmp.le.s32.totalorder 2, %s8
    // Predicated region
    $region33: #{_lambda_.21} parent=5 // pred_check
      %p447 = pneg %p446
    $region34: #{_lambda_.21} parent=5 // pred_check_branch
      %449 = sbr.rel (%p447) target = $region36
    $region35: #{_lambda_.21} parent=5 // pred_region
      %s450 = ssub.s32 %s8, 2
      // Predicated region
      $region37: #{_lambda_.21} parent=35 // pred_check
        %p451 = pneg %p89
      $region38: #{_lambda_.21} parent=35 // pred_check_branch
        %453 = sbr.rel (%p451) target = $region40
      $region39: #{_lambda_.21} parent=35 // pred_region
        %p454 = scmp.lt.s32.totalorder %s14, 1
        %s455 = scalar_select %p454, %s14, 1
        %s456 = smul.addr %s455, 8
        %s457 = scalar_lea.vmem %s2, %s456
      $region40: #{_lambda_.21} parent=35 // pred_fallthru
        _
    $region36: #{_lambda_.21} parent=5 // pred_fallthru
      _
  $region6: #{_lambda_.21} parent=0 // loop_footer
    %s12 = sadd.s32 1, %s8
  $region7: #{_lambda_.21} parent=0 // loop_footer_branch
    %7 = sbr.rel target = $region3
  $region8: #{_lambda_.21} parent=0 // loop_exit
    _

// kernel: _lambda_.22
$region0: #{_lambda_.22}
  #allocation0 [shape = 'u32[]', space=smem, size = 0x4, offset = 0x4, fixed_abs, tag = 'smem constant byte address 0x4 - core index']
  #allocation1 [shape = 'u32[72,128]{1,0:T(1,128)}', space=vmem, size = 0x9000, scoped, tag = 'internal scratch']
  %s0 = inlined_call_operand.vmem [shape: f32[16,32], index: 0, kind: input, shape index: {}]
  %s1 = inlined_call_operand.hbm [shape: f32[32,32], index: 1, kind: input, shape index: {}]
  %s2 = inlined_call_operand.vmem [shape: f32[16,32], index: 2, kind: input, shape index: {}]
  %s3 = inlined_call_operand.vmem [shape: f32[1,32], index: 3, kind: input, shape index: {}]
  %s4 = inlined_call_operand.vmem [shape: f32[1,32], index: 4, kind: input, shape index: {}]
  %s5 = inlined_call_operand.vmem [shape: f32[16,32], index: 5, kind: output, shape index: {}]
  %s6 = sld [smem:[#allocation0]]
  $region34: #{_lambda_.22} parent=0
    _
  %s8 = ssub.s32 1, %s6
  %s9 = scalar_select 0, %s8, %s6
  $region1: #{_lambda_.22} parent=0
    #allocation2 [shape = 'u8[16384]{0}', space=vmem, size = 0x4000, scoped, tag = 'input window, operand 1, single buffered']
    #allocation3 [shape = 's32[1]{0}', space=sflag, size = 0x4, scoped, tag = 'scoped memory for _lambda_.22']
    %10 = vsyncpa [#allocation3], 0
    // Predicated region
    $region2: #{_lambda_.22} parent=1 // pred_check
      _
    $region3: #{_lambda_.22} parent=1 // pred_check_branch
      %12 = sbr.rel (0) target = $region5
    $region4: #{_lambda_.22} parent=1 // pred_region
      _
    $region5: #{_lambda_.22} parent=1 // pred_fallthru
      _
    // Predicated region
    $region6: #{_lambda_.22} parent=1 // pred_check
      _
    $region7: #{_lambda_.22} parent=1 // pred_check_branch
      %14 = sbr.rel (0) target = $region9
    $region8: #{_lambda_.22} parent=1 // pred_region
      %16 = vsyncadd [#allocation3], 0
      %s17 = sshll.u32 %s1, 4
      %s18 = int_to_ptr.hbm [resolvable:$true] %s17
      %s19 = sshll.u32 [#allocation2], 4
      %s20 = int_to_ptr.vmem [resolvable:$true] %s19
      %25 = dma.hbm_to_vmem [thread:$0]  %s18, 512, %s20, [#allocation3], 128, 128, 8
    $region9: #{_lambda_.22} parent=1 // pred_fallthru
      _
    // Predicated region
    $region10: #{_lambda_.22} parent=1 // pred_check
      _
    $region11: #{_lambda_.22} parent=1 // pred_check_branch
      %27 = sbr.rel (0) target = $region13
    $region12: #{_lambda_.22} parent=1 // pred_region
      _
    $region13: #{_lambda_.22} parent=1 // pred_fallthru
      _
    // Predicated region
    $region14: #{_lambda_.22} parent=1 // pred_check
      _
    $region15: #{_lambda_.22} parent=1 // pred_check_branch
      %29 = sbr.rel (0) target = $region17
    $region16: #{_lambda_.22} parent=1 // pred_region
      _
    $region17: #{_lambda_.22} parent=1 // pred_fallthru
      _
    // Predicated region
    $region18: #{_lambda_.22} parent=1 // pred_check
      _
    $region19: #{_lambda_.22} parent=1 // pred_check_branch
      %31 = sbr.rel (0) target = $region21
    $region20: #{_lambda_.22} parent=1 // pred_region
      _
    $region21: #{_lambda_.22} parent=1 // pred_fallthru
      _
    // Predicated region
    $region22: #{_lambda_.22} parent=1 // pred_check
      _
    $region23: #{_lambda_.22} parent=1 // pred_check_branch
      %33 = sbr.rel (0) target = $region25
    $region24: #{_lambda_.22} parent=1 // pred_region
      %35 = dma.done [#allocation3], 512
    $region25: #{_lambda_.22} parent=1 // pred_fallthru
      _
    %v36 = vld [vmem:[%s0] sm:$0xff]
    %v37 = vld [vmem:[%s0 + $0x8] sm:$0xff]
    %v38 = vld [vmem:[#allocation2] sm:$0xff]
    %v39 = vld [vmem:[#allocation2 + $0x8] sm:$0xff]
    %v40 = vld [vmem:[#allocation2 + $0x10] sm:$0xff]
    %v41 = vld [vmem:[#allocation2 + $0x18] sm:$0xff]
    %v42 = vld [vmem:[%s2] sm:$0xff]
    %v43 = vld [vmem:[%s2 + $0x8] sm:$0xff]
    %vm44 = vcmask 261120
    %v46 = vsel %vm44, %v36, 0
    %v49 = vsel %vm44, %v37, 0
    %51 = vmatpush.msra.mxu0 0.0
    %52 = vmatpush.msra.mxu0 0.0
    %53 = vmatpush.msra.mxu0 0.0
    %54 = vmatpush.msra.mxu0 0.0
    %55 = vmatpush.msra.mxu0 0.0
    %56 = vmatpush.msra.mxu0 0.0
    %57 = vmatpush.msra.mxu0 0.0
    %58 = vmatpush.msra.mxu0 0.0
    %59 = vmatpush.msra.mxu0 0.0
    %60 = vmatpush.msra.mxu0 0.0
    %61 = vmatpush.msra.mxu0 0.0
    %62 = vmatpush.msra.mxu0 0.0
    %63 = vmatpush.msra.mxu0 %v41
    %64 = vmatpush.msra.mxu0 %v40
    %65 = vmatpush.msra.mxu0 %v39
    %66 = vmatpush.msra.mxu0 %v38
    %67 = vmatmul.f32.gmra.mxu0 %v46
    %v68 = vpop.f32.mrf.mxu0
    %v69 = vadd.f32 %v42, %v68
    %70 = vmatmul.f32.gmra.mxu0 %v49
    %v71 = vpop.f32.mrf.mxu0
    %v72 = vadd.f32 %v43, %v71
    %73 = vdwg.mxu0
    %v74 = vsel %vm44, %v69, 0.0
    %75 = vadd.xlane.f32.xlu0 %v74
    %v76 = vpop.xlane.xlu0 %75
    %v77 = vsel %vm44, %v72, 0.0
    %78 = vadd.xlane.f32.xlu0 %v77
    %v79 = vpop.xlane.xlu0 %78
    %v80 = vrcp.pop 32.0
    %v81 = vmul.f32 32.0, %v80
    %v82 = vsub.f32 1.0, %v81
    %v83 = vmul.f32 %v80, %v82
    %v84 = vadd.f32 %v80, %v83
    %vm85 = vweird.f32 %v80
    %v86 = vsel %vm85, %v80, %v84
    %v87 = vmul.f32 %v76, %v86
    %v88 = vmul.f32 %v79, %v86
    %v89 = vsub.f32 %v69, %v87
    %v90 = vsub.f32 %v72, %v88
    %v91 = vmul.f32 %v89, %v89
    %v92 = vmul.f32 %v90, %v90
    %v93 = vsel %vm44, %v91, 0.0
    %94 = vadd.xlane.f32.xlu0 %v93
    %v95 = vpop.xlane.xlu0 %94
    %v96 = vsel %vm44, %v92, 0.0
    %97 = vadd.xlane.f32.xlu0 %v96
    %v98 = vpop.xlane.xlu0 %97
    %v99 = vmul.f32 %v95, %v86
    %v100 = vmul.f32 %v98, %v86
    %v101 = vadd.f32 %v99, 1e-05
    %v102 = vadd.f32 %v100, 1e-05
    %v103 = vrsqrt.pop %v101
    %v104 = vmul.f32 %v103, %v101
    %v105 = vmul.f32 %v104, %v103
    %v106 = vmul.f32 0.5, %v105
    %v107 = vsub.f32 1.5, %v106
    %v108 = vmul.f32 %v103, %v107
    %vm109 = vweird.f32 %v101
    %vm110 = vweird.f32 %v103
    %vm111 = vmor %vm109, %vm110
    %v112 = vsel %vm111, %v103, %v108
    %v113 = vrsqrt.pop %v102
    %v114 = vmul.f32 %v113, %v102
    %v115 = vmul.f32 %v114, %v113
    %v116 = vmul.f32 0.5, %v115
    %v117 = vsub.f32 1.5, %v116
    %v118 = vmul.f32 %v113, %v117
    %vm119 = vweird.f32 %v102
    %vm120 = vweird.f32 %v113
    %vm121 = vmor %vm119, %vm120
    %v122 = vsel %vm121, %v113, %v118
    %v123 = vmul.f32 %v89, %v112
    %v124 = vmul.f32 %v90, %v122
    %v125 = vld [vmem:[%s3] sm:$0x1]
    %v127 = vperm.slane %v125, 0
    %v129 = vmul.f32 %v123, %v127
    %v130 = vmul.f32 %v124, %v127
    %v131 = vld [vmem:[%s4] sm:$0x1]
    %v133 = vperm.slane %v131, 0
    %v135 = vadd.f32 %v129, %v133
    %v136 = vadd.f32 %v130, %v133
    %137 = vst.msk [vmem:[%s5] sm:$0xff] %vm44, %v135
    %138 = vst.msk [vmem:[%s5 + $0x8] sm:$0xff] %vm44, %v136
    // Predicated region
    $region26: #{_lambda_.22} parent=1 // pred_check
      _
    $region27: #{_lambda_.22} parent=1 // pred_check_branch
      %140 = sbr.rel (0) target = $region29
    $region28: #{_lambda_.22} parent=1 // pred_region
      _
    $region29: #{_lambda_.22} parent=1 // pred_fallthru
      _
    // Predicated region
    $region30: #{_lambda_.22} parent=1 // pred_check
      _
    $region31: #{_lambda_.22} parent=1 // pred_check_branch
      %142 = sbr.rel (0) target = $region33
    $region32: #{_lambda_.22} parent=1 // pred_region
      _
    $region33: #{_lambda_.22} parent=1 // pred_fallthru
      _
    %143 = vsyncpa [#allocation3], 1

// kernel: _lambda_.23
$region0: #{_lambda_.23}
  #allocation0 [shape = 'u32[]', space=smem, size = 0x4, offset = 0x4, fixed_abs, tag = 'smem constant byte address 0x4 - core index']
  #allocation1 [shape = 'u32[72,128]{1,0:T(1,128)}', space=vmem, size = 0x9000, scoped, tag = 'internal scratch']
  %s0 = inlined_call_operand.vmem [shape: f32[16,32], index: 0, kind: input, shape index: {}]
  %s1 = inlined_call_operand.vmem [shape: f32[32,64], index: 1, kind: input, shape index: {}]
  %s2 = inlined_call_operand.vmem [shape: f32[1,64], index: 2, kind: input, shape index: {}]
  %s3 = inlined_call_operand.vmem [shape: f32[64,32], index: 3, kind: input, shape index: {}]
  %s4 = inlined_call_operand.vmem [shape: f32[1,32], index: 4, kind: input, shape index: {}]
  %s5 = inlined_call_operand.vmem [shape: f32[1,32], index: 5, kind: input, shape index: {}]
  %s6 = inlined_call_operand.vmem [shape: f32[1,32], index: 6, kind: input, shape index: {}]
  %s7 = inlined_call_operand.vmem [shape: f32[16,32], index: 7, kind: output, shape index: {}]
  %s8 = sld [smem:[#allocation0]]
  $region38: #{_lambda_.23} parent=0
    _
  %s10 = ssub.s32 1, %s8
  %s11 = scalar_select 0, %s10, %s8
  // Predicated region
  $region2: #{_lambda_.23} parent=0 // pred_check
    _
  $region3: #{_lambda_.23} parent=0 // pred_check_branch
    %13 = sbr.rel (0) target = $region5
  $region4: #{_lambda_.23} parent=0 // pred_region
    _
  $region5: #{_lambda_.23} parent=0 // pred_fallthru
    _
  // Predicated region
  $region6: #{_lambda_.23} parent=0 // pred_check
    _
  $region7: #{_lambda_.23} parent=0 // pred_check_branch
    %15 = sbr.rel (0) target = $region9
  $region8: #{_lambda_.23} parent=0 // pred_region
    _
  $region9: #{_lambda_.23} parent=0 // pred_fallthru
    _
  // Predicated region
  $region10: #{_lambda_.23} parent=0 // pred_check
    _
  $region11: #{_lambda_.23} parent=0 // pred_check_branch
    %17 = sbr.rel (0) target = $region13
  $region12: #{_lambda_.23} parent=0 // pred_region
    _
  $region13: #{_lambda_.23} parent=0 // pred_fallthru
    _
  // Predicated region
  $region14: #{_lambda_.23} parent=0 // pred_check
    _
  $region15: #{_lambda_.23} parent=0 // pred_check_branch
    %19 = sbr.rel (0) target = $region17
  $region16: #{_lambda_.23} parent=0 // pred_region
    _
  $region17: #{_lambda_.23} parent=0 // pred_fallthru
    _
  // Predicated region
  $region18: #{_lambda_.23} parent=0 // pred_check
    _
  $region19: #{_lambda_.23} parent=0 // pred_check_branch
    %21 = sbr.rel (0) target = $region21
  $region20: #{_lambda_.23} parent=0 // pred_region
    _
  $region21: #{_lambda_.23} parent=0 // pred_fallthru
    _
  // Predicated region
  $region22: #{_lambda_.23} parent=0 // pred_check
    _
  $region23: #{_lambda_.23} parent=0 // pred_check_branch
    %23 = sbr.rel (0) target = $region25
  $region24: #{_lambda_.23} parent=0 // pred_region
    _
  $region25: #{_lambda_.23} parent=0 // pred_fallthru
    _
  // Predicated region
  $region26: #{_lambda_.23} parent=0 // pred_check
    _
  $region27: #{_lambda_.23} parent=0 // pred_check_branch
    %25 = sbr.rel (0) target = $region29
  $region28: #{_lambda_.23} parent=0 // pred_region
    _
  $region29: #{_lambda_.23} parent=0 // pred_fallthru
    _
  %v26 = vld [vmem:[%s0] sm:$0xff]
  %v27 = vld [vmem:[%s0 + $0x8] sm:$0xff]
  %v28 = vld [vmem:[%s1] sm:$0xff]
  %v29 = vld [vmem:[%s1 + $0x8] sm:$0xff]
  %v30 = vld [vmem:[%s1 + $0x10] sm:$0xff]
  %v31 = vld [vmem:[%s1 + $0x18] sm:$0xff]
  %v32 = vld [vmem:[%s2] sm:$0x1]
  %v34 = vperm.slane %v32, 0
  %vm36 = vcmask 261120
  %v38 = vsel %vm36, %v26, 0
  %v41 = vsel %vm36, %v27, 0
  %43 = vmatpush.msra.mxu0 0.0
  %44 = vmatpush.msra.mxu0 0.0
  %45 = vmatpush.msra.mxu0 0.0
  %46 = vmatpush.msra.mxu0 0.0
  %47 = vmatpush.msra.mxu0 0.0
  %48 = vmatpush.msra.mxu0 0.0
  %49 = vmatpush.msra.mxu0 0.0
  %50 = vmatpush.msra.mxu0 0.0
  %51 = vmatpush.msra.mxu0 0.0
  %52 = vmatpush.msra.mxu0 0.0
  %53 = vmatpush.msra.mxu0 0.0
  %54 = vmatpush.msra.mxu0 0.0
  %55 = vmatpush.msra.mxu0 %v31
  %56 = vmatpush.msra.mxu0 %v30
  %57 = vmatpush.msra.mxu0 %v29
  %58 = vmatpush.msra.mxu0 %v28
  %59 = vmatmul.f32.gmra.mxu0 %v38
  %v60 = vpop.f32.mrf.mxu0
  %v61 = vadd.f32 %v34, %v60
  %62 = vmatmul.f32.gmra.mxu0 %v41
  %v63 = vpop.f32.mrf.mxu0
  %v64 = vadd.f32 %v34, %v63
  %65 = vdwg.mxu0
  %v66 = vmax.f32 %v61, 0.0
  %v67 = vmax.f32 %v64, 0.0
  %v68 = vld [vmem:[%s3] sm:$0xff]
  %v69 = vld [vmem:[%s3 + $0x8] sm:$0xff]
  %v70 = vld [vmem:[%s3 + $0x10] sm:$0xff]
  %v71 = vld [vmem:[%s3 + $0x18] sm:$0xff]
  %v72 = vld [vmem:[%s3 + $0x20] sm:$0xff]
  %v73 = vld [vmem:[%s3 + $0x28] sm:$0xff]
  %v74 = vld [vmem:[%s3 + $0x30] sm:$0xff]
  %v75 = vld [vmem:[%s3 + $0x38] sm:$0xff]
  %v76 = vld [vmem:[%s4] sm:$0x1]
  %v78 = vperm.slane %v76, 0
  %vm80 = vcmask 523264
  %v82 = vsel %vm80, %v66, 0
  %v85 = vsel %vm80, %v67, 0
  %87 = vmatpush.msra.mxu0 0.0
  %88 = vmatpush.msra.mxu0 0.0
  %89 = vmatpush.msra.mxu0 0.0
  %90 = vmatpush.msra.mxu0 0.0
  %91 = vmatpush.msra.mxu0 0.0
  %92 = vmatpush.msra.mxu0 0.0
  %93 = vmatpush.msra.mxu0 0.0
  %94 = vmatpush.msra.mxu0 0.0
  %95 = vmatpush.msra.mxu0 %v75
  %96 = vmatpush.msra.mxu0 %v74
  %97 = vmatpush.msra.mxu0 %v73
  %98 = vmatpush.msra.mxu0 %v72
  %99 = vmatpush.msra.mxu0 %v71
  %100 = vmatpush.msra.mxu0 %v70
  %101 = vmatpush.msra.mxu0 %v69
  %102 = vmatpush.msra.mxu0 %v68
  %103 = vmatmul.f32.gmra.mxu0 %v82
  %v104 = vpop.f32.mrf.mxu0
  %v105 = vadd.f32 %v78, %v104
  %106 = vmatmul.f32.gmra.mxu0 %v85
  %v107 = vpop.f32.mrf.mxu0
  %v108 = vadd.f32 %v78, %v107
  %109 = vdwg.mxu0
  %v110 = vadd.f32 %v105, %v26
  %v111 = vadd.f32 %v108, %v27
  %v112 = vsel %vm36, %v110, 0.0
  %113 = vadd.xlane.f32.xlu0 %v112
  %v114 = vpop.xlane.xlu0 %113
  %v115 = vsel %vm36, %v111, 0.0
  %116 = vadd.xlane.f32.xlu0 %v115
  %v117 = vpop.xlane.xlu0 %116
  %v118 = vrcp.pop 32.0
  %v119 = vmul.f32 32.0, %v118
  %v120 = vsub.f32 1.0, %v119
  %v121 = vmul.f32 %v118, %v120
  %v122 = vadd.f32 %v118, %v121
  %vm123 = vweird.f32 %v118
  %v124 = vsel %vm123, %v118, %v122
  %v125 = vmul.f32 %v114, %v124
  %v126 = vmul.f32 %v117, %v124
  %v127 = vsub.f32 %v110, %v125
  %v128 = vsub.f32 %v111, %v126
  %v129 = vmul.f32 %v127, %v127
  %v130 = vmul.f32 %v128, %v128
  %v131 = vsel %vm36, %v129, 0.0
  %132 = vadd.xlane.f32.xlu0 %v131
  %v133 = vpop.xlane.xlu0 %132
  %v134 = vsel %vm36, %v130, 0.0
  %135 = vadd.xlane.f32.xlu0 %v134
  %v136 = vpop.xlane.xlu0 %135
  %v137 = vmul.f32 %v133, %v124
  %v138 = vmul.f32 %v136, %v124
  %v139 = vadd.f32 %v137, 1e-05
  %v140 = vadd.f32 %v138, 1e-05
  %v141 = vrsqrt.pop %v139
  %v142 = vmul.f32 %v141, %v139
  %v143 = vmul.f32 %v142, %v141
  %v144 = vmul.f32 0.5, %v143
  %v145 = vsub.f32 1.5, %v144
  %v146 = vmul.f32 %v141, %v145
  %vm147 = vweird.f32 %v139
  %vm148 = vweird.f32 %v141
  %vm149 = vmor %vm147, %vm148
  %v150 = vsel %vm149, %v141, %v146
  %v151 = vrsqrt.pop %v140
  %v152 = vmul.f32 %v151, %v140
  %v153 = vmul.f32 %v152, %v151
  %v154 = vmul.f32 0.5, %v153
  %v155 = vsub.f32 1.5, %v154
  %v156 = vmul.f32 %v151, %v155
  %vm157 = vweird.f32 %v140
  %vm158 = vweird.f32 %v151
  %vm159 = vmor %vm157, %vm158
  %v160 = vsel %vm159, %v151, %v156
  %v161 = vmul.f32 %v127, %v150
  %v162 = vmul.f32 %v128, %v160
  %v163 = vld [vmem:[%s5] sm:$0x1]
  %v165 = vperm.slane %v163, 0
  %v167 = vmul.f32 %v161, %v165
  %v168 = vmul.f32 %v162, %v165
  %v169 = vld [vmem:[%s6] sm:$0x1]
  %v171 = vperm.slane %v169, 0
  %v173 = vadd.f32 %v167, %v171
  %v174 = vadd.f32 %v168, %v171
  %175 = vst.msk [vmem:[%s7] sm:$0xff] %vm36, %v173
  %176 = vst.msk [vmem:[%s7 + $0x8] sm:$0xff] %vm36, %v174
  // Predicated region
  $region30: #{_lambda_.23} parent=0 // pred_check
    _
  $region31: #{_lambda_.23} parent=0 // pred_check_branch
    %178 = sbr.rel (0) target = $region33
  $region32: #{_lambda_.23} parent=0 // pred_region
    _
  $region33: #{_lambda_.23} parent=0 // pred_fallthru
    _
  // Predicated region
  $region34: #{_lambda_.23} parent=0 // pred_check
    _
  $region35: #{_lambda_.23} parent=0 // pred_check_branch
    %180 = sbr.rel (0) target = $region37
  $region36: #{_lambda_.23} parent=0 // pred_region
    _
  $region37: #{_lambda_.23} parent=0 // pred_fallthru
    _

// kernel: _lambda_.24
$region0: #{_lambda_.24}
  #allocation0 [shape = 'u32[]', space=smem, size = 0x4, offset = 0x4, fixed_abs, tag = 'smem constant byte address 0x4 - core index']
  #allocation1 [shape = 'u32[72,128]{1,0:T(1,128)}', space=vmem, size = 0x9000, scoped, tag = 'internal scratch']
  %s0 = inlined_call_operand.vmem [shape: f32[16,32], index: 0, kind: input, shape index: {}]
  %s1 = inlined_call_operand.vmem [shape: f32[32,96], index: 1, kind: input, shape index: {}]
  %s2 = inlined_call_operand.vmem [shape: f32[16,96], index: 2, kind: output, shape index: {}]
  %s3 = sld [smem:[#allocation0]]
  $region18: #{_lambda_.24} parent=0
    _
  %s5 = ssub.s32 1, %s3
  %s6 = scalar_select 0, %s5, %s3
  // Predicated region
  $region2: #{_lambda_.24} parent=0 // pred_check
    _
  $region3: #{_lambda_.24} parent=0 // pred_check_branch
    %8 = sbr.rel (0) target = $region5
  $region4: #{_lambda_.24} parent=0 // pred_region
    _
  $region5: #{_lambda_.24} parent=0 // pred_fallthru
    _
  // Predicated region
  $region6: #{_lambda_.24} parent=0 // pred_check
    _
  $region7: #{_lambda_.24} parent=0 // pred_check_branch
    %10 = sbr.rel (0) target = $region9
  $region8: #{_lambda_.24} parent=0 // pred_region
    _
  $region9: #{_lambda_.24} parent=0 // pred_fallthru
    _
  %v11 = vld [vmem:[%s0] sm:$0xff]
  %v12 = vld [vmem:[%s0 + $0x8] sm:$0xff]
  %v13 = vld [vmem:[%s1] sm:$0xff]
  %v14 = vld [vmem:[%s1 + $0x8] sm:$0xff]
  %v15 = vld [vmem:[%s1 + $0x10] sm:$0xff]
  %v16 = vld [vmem:[%s1 + $0x18] sm:$0xff]
  %vm17 = vcmask 261120
  %v19 = vsel %vm17, %v11, 0
  %v22 = vsel %vm17, %v12, 0
  %24 = vmatpush.msra.mxu0 0.0
  %25 = vmatpush.msra.mxu0 0.0
  %26 = vmatpush.msra.mxu0 0.0
  %27 = vmatpush.msra.mxu0 0.0
  %28 = vmatpush.msra.mxu0 0.0
  %29 = vmatpush.msra.mxu0 0.0
  %30 = vmatpush.msra.mxu0 0.0
  %31 = vmatpush.msra.mxu0 0.0
  %32 = vmatpush.msra.mxu0 0.0
  %33 = vmatpush.msra.mxu0 0.0
  %34 = vmatpush.msra.mxu0 0.0
  %35 = vmatpush.msra.mxu0 0.0
  %36 = vmatpush.msra.mxu0 %v16
  %37 = vmatpush.msra.mxu0 %v15
  %38 = vmatpush.msra.mxu0 %v14
  %39 = vmatpush.msra.mxu0 %v13
  %40 = vmatmul.f32.gmra.mxu0 %v19
  %v41 = vpop.f32.mrf.mxu0
  %v42 = vadd.f32 0.0, %v41
  %43 = vmatmul.f32.gmra.mxu0 %v22
  %v44 = vpop.f32.mrf.mxu0
  %v45 = vadd.f32 0.0, %v44
  %46 = vdwg.mxu0
  %vm47 = vcmask 785408
  %48 = vst.msk [vmem:[%s2] sm:$0xff] %vm47, %v42
  %49 = vst.msk [vmem:[%s2 + $0x8] sm:$0xff] %vm47, %v45
  // Predicated region
  $region10: #{_lambda_.24} parent=0 // pred_check
    _
  $region11: #{_lambda_.24} parent=0 // pred_check_branch
    %51 = sbr.rel (0) target = $region13
  $region12: #{_lambda_.24} parent=0 // pred_region
    _
  $region13: #{_lambda_.24} parent=0 // pred_fallthru
    _
  // Predicated region
  $region14: #{_lambda_.24} parent=0 // pred_check
    _
  $region15: #{_lambda_.24} parent=0 // pred_check_branch
    %53 = sbr.rel (0) target = $region17
  $region16: #{_lambda_.24} parent=0 // pred_region
    _
  $region17: #{_lambda_.24} parent=0 // pred_fallthru
    _

// kernel: _lambda_.28
$region0: #{_lambda_.28}
  #allocation0 [shape = 'u32[]', space=smem, size = 0x4, offset = 0x4, fixed_abs, tag = 'smem constant byte address 0x4 - core index']
  #allocation1 [shape = 'u32[72,128]{1,0:T(1,128)}', space=vmem, size = 0x9000, scoped, tag = 'internal scratch']
  %s0 = inlined_call_operand.vmem [shape: f32[16,32], index: 0, kind: input, shape index: {}]
  %s1 = inlined_call_operand.hbm [shape: f32[32,32], index: 1, kind: input, shape index: {}]
  %s2 = inlined_call_operand.vmem [shape: f32[16,32], index: 2, kind: output, shape index: {}]
  %s3 = sld [smem:[#allocation0]]
  $region22: #{_lambda_.28} parent=0
    _
  %s5 = ssub.s32 1, %s3
  %s6 = scalar_select 0, %s5, %s3
  $region1: #{_lambda_.28} parent=0
    #allocation2 [shape = 'u8[16384]{0}', space=vmem, size = 0x4000, scoped, tag = 'input window, operand 1, single buffered']
    #allocation3 [shape = 's32[1]{0}', space=sflag, size = 0x4, scoped, tag = 'scoped memory for _lambda_.28']
    %7 = vsyncpa [#allocation3], 0
    // Predicated region
    $region2: #{_lambda_.28} parent=1 // pred_check
      _
    $region3: #{_lambda_.28} parent=1 // pred_check_branch
      %9 = sbr.rel (0) target = $region5
    $region4: #{_lambda_.28} parent=1 // pred_region
      _
    $region5: #{_lambda_.28} parent=1 // pred_fallthru
      _
    // Predicated region
    $region6: #{_lambda_.28} parent=1 // pred_check
      _
    $region7: #{_lambda_.28} parent=1 // pred_check_branch
      %11 = sbr.rel (0) target = $region9
    $region8: #{_lambda_.28} parent=1 // pred_region
      %13 = vsyncadd [#allocation3], 0
      %s14 = sshll.u32 %s1, 4
      %s15 = int_to_ptr.hbm [resolvable:$true] %s14
      %s16 = sshll.u32 [#allocation2], 4
      %s17 = int_to_ptr.vmem [resolvable:$true] %s16
      %22 = dma.hbm_to_vmem [thread:$0]  %s15, 512, %s17, [#allocation3], 128, 128, 8
    $region9: #{_lambda_.28} parent=1 // pred_fallthru
      _
    // Predicated region
    $region10: #{_lambda_.28} parent=1 // pred_check
      _
    $region11: #{_lambda_.28} parent=1 // pred_check_branch
      %24 = sbr.rel (0) target = $region13
    $region12: #{_lambda_.28} parent=1 // pred_region
      %26 = dma.done [#allocation3], 512
    $region13: #{_lambda_.28} parent=1 // pred_fallthru
      _
    %v27 = vld [vmem:[%s0] sm:$0xff]
    %v28 = vld [vmem:[%s0 + $0x8] sm:$0xff]
    %v29 = vld [vmem:[#allocation2] sm:$0xff]
    %v30 = vld [vmem:[#allocation2 + $0x8] sm:$0xff]
    %v31 = vld [vmem:[#allocation2 + $0x10] sm:$0xff]
    %v32 = vld [vmem:[#allocation2 + $0x18] sm:$0xff]
    %vm33 = vcmask 261120
    %v35 = vsel %vm33, %v27, 0
    %v38 = vsel %vm33, %v28, 0
    %40 = vmatpush.msra.mxu0 0.0
    %41 = vmatpush.msra.mxu0 0.0
    %42 = vmatpush.msra.mxu0 0.0
    %43 = vmatpush.msra.mxu0 0.0
    %44 = vmatpush.msra.mxu0 0.0
    %45 = vmatpush.msra.mxu0 0.0
    %46 = vmatpush.msra.mxu0 0.0
    %47 = vmatpush.msra.mxu0 0.0
    %48 = vmatpush.msra.mxu0 0.0
    %49 = vmatpush.msra.mxu0 0.0
    %50 = vmatpush.msra.mxu0 0.0
    %51 = vmatpush.msra.mxu0 0.0
    %52 = vmatpush.msra.mxu0 %v32
    %53 = vmatpush.msra.mxu0 %v31
    %54 = vmatpush.msra.mxu0 %v30
    %55 = vmatpush.msra.mxu0 %v29
    %56 = vmatmul.f32.gmra.mxu0 %v35
    %v57 = vpop.f32.mrf.mxu0
    %v58 = vadd.f32 0.0, %v57
    %59 = vmatmul.f32.gmra.mxu0 %v38
    %v60 = vpop.f32.mrf.mxu0
    %v61 = vadd.f32 0.0, %v60
    %62 = vdwg.mxu0
    %63 = vst.msk [vmem:[%s2] sm:$0xff] %vm33, %v58
    %64 = vst.msk [vmem:[%s2 + $0x8] sm:$0xff] %vm33, %v61
    // Predicated region
    $region14: #{_lambda_.28} parent=1 // pred_check
      _
    $region15: #{_lambda_.28} parent=1 // pred_check_branch
      %66 = sbr.rel (0) target = $region17
    $region16: #{_lambda_.28} parent=1 // pred_region
      _
    $region17: #{_lambda_.28} parent=1 // pred_fallthru
      _
    // Predicated region
    $region18: #{_lambda_.28} parent=1 // pred_check
      _
    $region19: #{_lambda_.28} parent=1 // pred_check_branch
      %68 = sbr.rel (0) target = $region21
    $region20: #{_lambda_.28} parent=1 // pred_region
      _
    $region21: #{_lambda_.28} parent=1 // pred_fallthru
      _
    %69 = vsyncpa [#allocation3], 1

// kernel: _lambda_.31
$region0: #{_lambda_.31}
  #allocation0 [shape = 'u32[]', space=smem, size = 0x4, offset = 0x4, fixed_abs, tag = 'smem constant byte address 0x4 - core index']
  #allocation1 [shape = 'u32[72,128]{1,0:T(1,128)}', space=vmem, size = 0x9000, scoped, tag = 'internal scratch']
  %s0 = inlined_call_operand.vmem [shape: f32[16,32], index: 0, kind: input, shape index: {}]
  %s1 = inlined_call_operand.vmem [shape: f32[32,64], index: 1, kind: input, shape index: {}]
  %s2 = inlined_call_operand.vmem [shape: f32[1,64], index: 2, kind: input, shape index: {}]
  %s3 = inlined_call_operand.vmem [shape: f32[64,32], index: 3, kind: input, shape index: {}]
  %s4 = inlined_call_operand.vmem [shape: f32[1,32], index: 4, kind: input, shape index: {}]
  %s5 = inlined_call_operand.vmem [shape: f32[1,32], index: 5, kind: input, shape index: {}]
  %s6 = inlined_call_operand.vmem [shape: f32[1,32], index: 6, kind: input, shape index: {}]
  %s7 = inlined_call_operand.hbm [shape: f32[16,32], index: 7, kind: output, shape index: {}]
  %s8 = sld [smem:[#allocation0]]
  $region38: #{_lambda_.31} parent=0
    _
  %s10 = ssub.s32 1, %s8
  %s11 = scalar_select 0, %s10, %s8
  $region1: #{_lambda_.31} parent=0
    #allocation2 [shape = 'u8[8192]{0}', space=vmem, size = 0x2000, scoped, tag = 'output window, operand 0, single buffered']
    #allocation3 [shape = 's32[1]{0}', space=sflag, size = 0x4, scoped, tag = 'scoped memory for _lambda_.31']
    %12 = vsyncpa [#allocation3], 0
    // Predicated region
    $region2: #{_lambda_.31} parent=1 // pred_check
      _
    $region3: #{_lambda_.31} parent=1 // pred_check_branch
      %14 = sbr.rel (0) target = $region5
    $region4: #{_lambda_.31} parent=1 // pred_region
      _
    $region5: #{_lambda_.31} parent=1 // pred_fallthru
      _
    // Predicated region
    $region6: #{_lambda_.31} parent=1 // pred_check
      _
    $region7: #{_lambda_.31} parent=1 // pred_check_branch
      %16 = sbr.rel (0) target = $region9
    $region8: #{_lambda_.31} parent=1 // pred_region
      _
    $region9: #{_lambda_.31} parent=1 // pred_fallthru
      _
    // Predicated region
    $region10: #{_lambda_.31} parent=1 // pred_check
      _
    $region11: #{_lambda_.31} parent=1 // pred_check_branch
      %18 = sbr.rel (0) target = $region13
    $region12: #{_lambda_.31} parent=1 // pred_region
      _
    $region13: #{_lambda_.31} parent=1 // pred_fallthru
      _
    // Predicated region
    $region14: #{_lambda_.31} parent=1 // pred_check
      _
    $region15: #{_lambda_.31} parent=1 // pred_check_branch
      %20 = sbr.rel (0) target = $region17
    $region16: #{_lambda_.31} parent=1 // pred_region
      _
    $region17: #{_lambda_.31} parent=1 // pred_fallthru
      _
    // Predicated region
    $region18: #{_lambda_.31} parent=1 // pred_check
      _
    $region19: #{_lambda_.31} parent=1 // pred_check_branch
      %22 = sbr.rel (0) target = $region21
    $region20: #{_lambda_.31} parent=1 // pred_region
      _
    $region21: #{_lambda_.31} parent=1 // pred_fallthru
      _
    // Predicated region
    $region22: #{_lambda_.31} parent=1 // pred_check
      _
    $region23: #{_lambda_.31} parent=1 // pred_check_branch
      %24 = sbr.rel (0) target = $region25
    $region24: #{_lambda_.31} parent=1 // pred_region
      _
    $region25: #{_lambda_.31} parent=1 // pred_fallthru
      _
    // Predicated region
    $region26: #{_lambda_.31} parent=1 // pred_check
      _
    $region27: #{_lambda_.31} parent=1 // pred_check_branch
      %26 = sbr.rel (0) target = $region29
    $region28: #{_lambda_.31} parent=1 // pred_region
      _
    $region29: #{_lambda_.31} parent=1 // pred_fallthru
      _
    %v27 = vld [vmem:[%s0] sm:$0xff]
    %v28 = vld [vmem:[%s0 + $0x8] sm:$0xff]
    %v29 = vld [vmem:[%s1] sm:$0xff]
    %v30 = vld [vmem:[%s1 + $0x8] sm:$0xff]
    %v31 = vld [vmem:[%s1 + $0x10] sm:$0xff]
    %v32 = vld [vmem:[%s1 + $0x18] sm:$0xff]
    %v33 = vld [vmem:[%s2] sm:$0x1]
    %v35 = vperm.slane %v33, 0
    %vm37 = vcmask 261120
    %v39 = vsel %vm37, %v27, 0
    %v42 = vsel %vm37, %v28, 0
    %44 = vmatpush.msra.mxu0 0.0
    %45 = vmatpush.msra.mxu0 0.0
    %46 = vmatpush.msra.mxu0 0.0
    %47 = vmatpush.msra.mxu0 0.0
    %48 = vmatpush.msra.mxu0 0.0
    %49 = vmatpush.msra.mxu0 0.0
    %50 = vmatpush.msra.mxu0 0.0
    %51 = vmatpush.msra.mxu0 0.0
    %52 = vmatpush.msra.mxu0 0.0
    %53 = vmatpush.msra.mxu0 0.0
    %54 = vmatpush.msra.mxu0 0.0
    %55 = vmatpush.msra.mxu0 0.0
    %56 = vmatpush.msra.mxu0 %v32
    %57 = vmatpush.msra.mxu0 %v31
    %58 = vmatpush.msra.mxu0 %v30
    %59 = vmatpush.msra.mxu0 %v29
    %60 = vmatmul.f32.gmra.mxu0 %v39
    %v61 = vpop.f32.mrf.mxu0
    %v62 = vadd.f32 %v35, %v61
    %63 = vmatmul.f32.gmra.mxu0 %v42
    %v64 = vpop.f32.mrf.mxu0
    %v65 = vadd.f32 %v35, %v64
    %66 = vdwg.mxu0
    %v67 = vmax.f32 %v62, 0.0
    %v68 = vmax.f32 %v65, 0.0
    %v69 = vld [vmem:[%s3] sm:$0xff]
    %v70 = vld [vmem:[%s3 + $0x8] sm:$0xff]
    %v71 = vld [vmem:[%s3 + $0x10] sm:$0xff]
    %v72 = vld [vmem:[%s3 + $0x18] sm:$0xff]
    %v73 = vld [vmem:[%s3 + $0x20] sm:$0xff]
    %v74 = vld [vmem:[%s3 + $0x28] sm:$0xff]
    %v75 = vld [vmem:[%s3 + $0x30] sm:$0xff]
    %v76 = vld [vmem:[%s3 + $0x38] sm:$0xff]
    %v77 = vld [vmem:[%s4] sm:$0x1]
    %v79 = vperm.slane %v77, 0
    %vm81 = vcmask 523264
    %v83 = vsel %vm81, %v67, 0
    %v86 = vsel %vm81, %v68, 0
    %88 = vmatpush.msra.mxu0 0.0
    %89 = vmatpush.msra.mxu0 0.0
    %90 = vmatpush.msra.mxu0 0.0
    %91 = vmatpush.msra.mxu0 0.0
    %92 = vmatpush.msra.mxu0 0.0
    %93 = vmatpush.msra.mxu0 0.0
    %94 = vmatpush.msra.mxu0 0.0
    %95 = vmatpush.msra.mxu0 0.0
    %96 = vmatpush.msra.mxu0 %v76
    %97 = vmatpush.msra.mxu0 %v75
    %98 = vmatpush.msra.mxu0 %v74
    %99 = vmatpush.msra.mxu0 %v73
    %100 = vmatpush.msra.mxu0 %v72
    %101 = vmatpush.msra.mxu0 %v71
    %102 = vmatpush.msra.mxu0 %v70
    %103 = vmatpush.msra.mxu0 %v69
    %104 = vmatmul.f32.gmra.mxu0 %v83
    %v105 = vpop.f32.mrf.mxu0
    %v106 = vadd.f32 %v79, %v105
    %107 = vmatmul.f32.gmra.mxu0 %v86
    %v108 = vpop.f32.mrf.mxu0
    %v109 = vadd.f32 %v79, %v108
    %110 = vdwg.mxu0
    %v111 = vadd.f32 %v106, %v27
    %v112 = vadd.f32 %v109, %v28
    %v113 = vsel %vm37, %v111, 0.0
    %114 = vadd.xlane.f32.xlu0 %v113
    %v115 = vpop.xlane.xlu0 %114
    %v116 = vsel %vm37, %v112, 0.0
    %117 = vadd.xlane.f32.xlu0 %v116
    %v118 = vpop.xlane.xlu0 %117
    %v119 = vrcp.pop 32.0
    %v120 = vmul.f32 32.0, %v119
    %v121 = vsub.f32 1.0, %v120
    %v122 = vmul.f32 %v119, %v121
    %v123 = vadd.f32 %v119, %v122
    %vm124 = vweird.f32 %v119
    %v125 = vsel %vm124, %v119, %v123
    %v126 = vmul.f32 %v115, %v125
    %v127 = vmul.f32 %v118, %v125
    %v128 = vsub.f32 %v111, %v126
    %v129 = vsub.f32 %v112, %v127
    %v130 = vmul.f32 %v128, %v128
    %v131 = vmul.f32 %v129, %v129
    %v132 = vsel %vm37, %v130, 0.0
    %133 = vadd.xlane.f32.xlu0 %v132
    %v134 = vpop.xlane.xlu0 %133
    %v135 = vsel %vm37, %v131, 0.0
    %136 = vadd.xlane.f32.xlu0 %v135
    %v137 = vpop.xlane.xlu0 %136
    %v138 = vmul.f32 %v134, %v125
    %v139 = vmul.f32 %v137, %v125
    %v140 = vadd.f32 %v138, 1e-05
    %v141 = vadd.f32 %v139, 1e-05
    %v142 = vrsqrt.pop %v140
    %v143 = vmul.f32 %v142, %v140
    %v144 = vmul.f32 %v143, %v142
    %v145 = vmul.f32 0.5, %v144
    %v146 = vsub.f32 1.5, %v145
    %v147 = vmul.f32 %v142, %v146
    %vm148 = vweird.f32 %v140
    %vm149 = vweird.f32 %v142
    %vm150 = vmor %vm148, %vm149
    %v151 = vsel %vm150, %v142, %v147
    %v152 = vrsqrt.pop %v141
    %v153 = vmul.f32 %v152, %v141
    %v154 = vmul.f32 %v153, %v152
    %v155 = vmul.f32 0.5, %v154
    %v156 = vsub.f32 1.5, %v155
    %v157 = vmul.f32 %v152, %v156
    %vm158 = vweird.f32 %v141
    %vm159 = vweird.f32 %v152
    %vm160 = vmor %vm158, %vm159
    %v161 = vsel %vm160, %v152, %v157
    %v162 = vmul.f32 %v128, %v151
    %v163 = vmul.f32 %v129, %v161
    %v164 = vld [vmem:[%s5] sm:$0x1]
    %v166 = vperm.slane %v164, 0
    %v168 = vmul.f32 %v162, %v166
    %v169 = vmul.f32 %v163, %v166
    %v170 = vld [vmem:[%s6] sm:$0x1]
    %v172 = vperm.slane %v170, 0
    %v174 = vadd.f32 %v168, %v172
    %v175 = vadd.f32 %v169, %v172
    %176 = vst.msk [vmem:[#allocation2] sm:$0xff] %vm37, %v174
    %177 = vst.msk [vmem:[#allocation2 + $0x8] sm:$0xff] %vm37, %v175
    // Predicated region
    $region30: #{_lambda_.31} parent=1 // pred_check
      _
    $region31: #{_lambda_.31} parent=1 // pred_check_branch
      %179 = sbr.rel (0) target = $region33
    $region32: #{_lambda_.31} parent=1 // pred_region
      %181 = vsyncadd [#allocation3], 0
      %s182 = sshll.u32 [#allocation2], 4
      %s183 = int_to_ptr.vmem [resolvable:$true] %s182
      %s184 = sshll.u32 %s7, 4
      %s185 = int_to_ptr.hbm [resolvable:$true] %s184
      %190 = dma.vmem_to_hbm [thread:$0]  %s183, 256, %s185, [#allocation3], 128, 128, 8
    $region33: #{_lambda_.31} parent=1 // pred_fallthru
      _
    // Predicated region
    $region34: #{_lambda_.31} parent=1 // pred_check
      _
    $region35: #{_lambda_.31} parent=1 // pred_check_branch
      %192 = sbr.rel (0) target = $region37
    $region36: #{_lambda_.31} parent=1 // pred_region
      %194 = dma.done [#allocation3], 256
    $region37: #{_lambda_.31} parent=1 // pred_fallthru
      _
    %195 = vsyncpa [#allocation3], 1

</llo_original>
